<compile_context>
chip_gen: v7x
topology: tpu7x:2x2x1
jax: 0.10.0
libtpu: 0.0.40
codegen_flags: <defaults>
</compile_context>

<pallas_src>
import numpy as np
import jax
import jax.numpy as jnp
from jax.experimental import pallas as pl
from jax.experimental.pallas import tpu as pltpu

# ---- model hyper-parameters (small, consistent with the module) ----
B = 2            # batch_size
DAY = 8          # day  (H)
A_FIELD = 16     # a_field_size (W)
K1 = 3           # dpcnn_conv2_kernel_1 (3 so h2/w2 == day/a_field_size)
K2 = 3           # dpcnn_conv2_kernel_2
C1 = 4           # dpcnn_conv2_output_size_1
C2 = 8           # dpcnn_conv2_output_size_2
HIDDEN = 32      # liner_1_output_size

H, W = DAY, A_FIELD
HW = H * W                     # 128 == exactly one lane row
F = C2 * HW                    # fc1 input size (1024)
PACK = C1 * B                  # packed sublane rows for the conv stages (8)

_TAPS = [(kh - 1, kw - 1) for kh in range(K1) for kw in range(K1)]
N_TAPS = len(_TAPS)


def _boundary_masks():
    """mask[t, f] == 1 iff output position f=(h,w) has tap (dh,dw) in bounds."""
    hh, ww = np.meshgrid(np.arange(H), np.arange(W), indexing="ij")
    m = np.zeros((N_TAPS, HW), np.float32)
    for t, (dh, dw) in enumerate(_TAPS):
        ok = (hh + dh >= 0) & (hh + dh < H) & (ww + dw >= 0) & (ww + dw < W)
        m[t] = ok.reshape(-1).astype(np.float32)
    return m


# ---------------------------------------------------------------- kernel ----
def dpcnn_kernel(x_ref,        # VMEM (C1*B, HW)         input replicated over ci, row=ci*B+b
                 w1m_ref,      # VMEM (9, C1*B, HW)      conv1 weights * boundary mask, packed
                 b1p_ref,      # VMEM (C1*B, HW)         conv1 bias, packed
                 masks_ref,    # VMEM (9, C1*B, HW)      conv2 boundary masks
                 w2p_ref,      # VMEM (9, C2, C1*B, 1)   conv2 weights, compact sublane vectors
                 b2p_ref,      # VMEM (C2, B, HW)        conv2 bias
                 fc1w_hbm,     # ANY  (F, HIDDEN)        fc1 weight (DMA'd manually)
                 fc1b_ref,     # VMEM (1, HIDDEN)
                 logicw_ref,   # VMEM (1, HIDDEN)
                 o_ref,        # VMEM (B, 1)
                 fc1w_vmem,    # scratch VMEM (F, HIDDEN)
                 fc1_sem):     # scratch DMA semaphore (1,)
    # Kick off the fc1-weight DMA up front so it overlaps the conv stages.
    fc1_cp = pltpu.make_async_copy(fc1w_hbm, fc1w_vmem, fc1_sem.at[0])
    fc1_cp.start()

    x = x_ref[...]                                        # (C1*B, HW)

    # ---- conv2_1 + bias + ReLU : one packed (8,128) FMA per tap -------------
    # (boundary masks are pre-folded into w1m, so each tap is roll->mul->add)
    acc1 = jnp.zeros((PACK, HW), jnp.float32)
    for t, (dh, dw) in enumerate(_TAPS):
        s = (-(dh * W + dw)) % HW
        xs = pltpu.roll(x, shift=s, axis=1) if s else x
        acc1 = acc1 + w1m_ref[t] * xs
    y1 = jnp.maximum(acc1 + b1p_ref[...], 0.0)            # (C1*B, HW), row = ci*B + b

    # ---- conv2_2 : one roll+mask per tap shared by all C2 output channels ---
    # per-co accumulators stay packed over (ci, b) sublanes.
    accs = [jnp.zeros((PACK, HW), jnp.float32) for _ in range(C2)]
    for t, (dh, dw) in enumerate(_TAPS):
        s = (-(dh * W + dw)) % HW
        ys = pltpu.roll(y1, shift=s, axis=1) if s else y1
        if (dh, dw) != (0, 0):
            ys = ys * masks_ref[t]                        # finite inputs: matches ref exactly
        for co in range(C2):
            accs[co] = accs[co] + w2p_ref[t, co] * ys     # (8,1)*(8,128) lane-bcast FMA

    # ---- reduce over input channels, bias + ReLU, and build the flatten -----
    # Each channel chunk is one lane-tile; concatenating along lanes reproduces
    # the PyTorch (c, h, w) flatten order with no relayout through memory.
    chunks = []
    for co in range(C2):
        r = accs[co]
        y2 = r[0:B]
        for ci in range(1, C1):
            y2 = y2 + r[ci * B:(ci + 1) * B]              # sum over ci -> (B, HW)
        chunks.append(jnp.maximum(y2 + b2p_ref[co], 0.0))
    y2_flat = jnp.concatenate(chunks, axis=1)             # (B, F) lane-dense

    # ---- fc1 as ONE (B,F)@(F,HIDDEN) MXU dot (weights arrived via async DMA) -
    fc1_cp.wait()
    h = jax.lax.dot_general(y2_flat, fc1w_vmem[...],
                            dimension_numbers=(((1,), (0,)), ((), ())),
                            preferred_element_type=jnp.float32,
                            precision=jax.lax.Precision.HIGHEST)   # (B, HIDDEN)
    h = jnp.maximum(h + fc1b_ref[...], 0.0)

    # logic_layer (no bias, N=1): VPU multiply + lane reduce, then sigmoid.
    logit = jnp.sum(h * logicw_ref[...], axis=-1, keepdims=True)   # (B, 1)
    o_ref[...] = 1.0 / (1.0 + jnp.exp(-logit))


# --------------------------------------------------------------- wrappers ----
def _fused_call(x_rep, p):
    vmem = pl.BlockSpec(memory_space=pltpu.MemorySpace.VMEM)
    return pl.pallas_call(
        dpcnn_kernel,
        out_shape=jax.ShapeDtypeStruct((B, 1), jnp.float32),
        in_specs=[vmem, vmem, vmem, vmem, vmem, vmem,
                  pl.BlockSpec(memory_space=pl.ANY),      # fc1 weight: manual overlapped DMA
                  vmem, vmem],
        out_specs=vmem,
        scratch_shapes=[pltpu.VMEM((F, HIDDEN), jnp.float32),
                        pltpu.SemaphoreType.DMA((1,))],
    )(x_rep, p["w1m"], p["b1p"], p["masks"], p["w2p"], p["b2p"],
      p["fc1_wT"], p["fc1_b"], p["logic_w"])


def prepare_params(params):
    """One-time parameter prep: packed-sublane, lane-broadcast VMEM layouts."""
    masks_np = _boundary_masks()                                        # (9, HW)

    w1 = np.asarray(params["conv1_w"], np.float32).reshape(C1, N_TAPS)  # t = kh*K1+kw
    b1 = np.asarray(params["conv1_b"], np.float32)
    w2 = np.asarray(params["conv2_w"], np.float32).reshape(C2, C1, N_TAPS)
    b2 = np.asarray(params["conv2_b"], np.float32)

    # conv1 weights with boundary mask folded in; packed rows = ci*B + b.
    w1_rows = np.repeat(w1.T, B, axis=1)                                # (9, C1*B)
    w1m = w1_rows[:, :, None] * masks_np[:, None, :]                    # (9, C1*B, HW)
    b1p = np.broadcast_to(np.repeat(b1, B)[:, None], (PACK, HW)).copy() # (C1*B, HW)

    # conv2 weights as compact per-(tap, co) sublane vectors (lane-bcast in kernel).
    w2p = np.repeat(np.transpose(w2, (2, 0, 1)), B, axis=2)[..., None]  # (9, C2, C1*B, 1)
    b2p = np.broadcast_to(b2[:, None, None], (C2, B, HW)).copy()        # (C2, B, HW)

    masks = np.broadcast_to(masks_np[:, None, :], (N_TAPS, PACK, HW)).copy()

    return {
        "w1m": jnp.asarray(w1m),
        "b1p": jnp.asarray(b1p),
        "masks": jnp.asarray(masks),
        "w2p": jnp.asarray(w2p),
        "b2p": jnp.asarray(b2p),
        # (HIDDEN, F) -> (F, HIDDEN): natural (M,K)x(K,N) MXU operand for the fused dot.
        "fc1_wT": jnp.asarray(np.asarray(params["fc1_w"], np.float32).T),
        "fc1_b": jnp.asarray(np.asarray(params["fc1_b"], np.float32).reshape(1, HIDDEN)),
        "logic_w": jnp.asarray(np.asarray(params["logic_w"], np.float32).reshape(1, HIDDEN)),
    }


@jax.jit
def dpcnn_forward(av, prepped):
    # Layout plumbing only: flatten (H,W) into the 128-wide lane axis and
    # replicate the single input channel across the C1 packed sublane groups.
    x = av.reshape(B, HW)
    x_rep = jnp.tile(x, (C1, 1))                          # (C1*B, HW), row = ci*B + b
    return _fused_call(x_rep, prepped)


# -------------------------------------------------------- pure-JAX reference ----
def reference_forward(av, params):
    x = av[:, None, :, :]
    y = jax.lax.conv_general_dilated(
        x, params["conv1_w"], (1, 1), "SAME",
        dimension_numbers=("NCHW", "OIHW", "NCHW"),
        precision=jax.lax.Precision.HIGHEST)
    y = jnp.maximum(y + params["conv1_b"][None, :, None, None], 0.0)
    y = jax.lax.conv_general_dilated(
        y, params["conv2_w"], (1, 1), "SAME",
        dimension_numbers=("NCHW", "OIHW", "NCHW"),
        precision=jax.lax.Precision.HIGHEST)
    y = jnp.maximum(y + params["conv2_b"][None, :, None, None], 0.0)
    f = y.reshape(B, -1)
    h = jnp.maximum(
        jnp.dot(f, params["fc1_w"].T, precision=jax.lax.Precision.HIGHEST)
        + params["fc1_b"], 0.0)
    logit = jnp.dot(h, params["logic_w"].T, precision=jax.lax.Precision.HIGHEST)
    return jax.nn.sigmoid(logit)


# -------------------------------------------------------------------- main ----
if __name__ == "__main__":
    key = jax.random.PRNGKey(0)
    ks = jax.random.split(key, 8)

    params = {
        "conv1_w": jax.random.normal(ks[0], (C1, 1, K1, K1), jnp.float32) * 0.2,
        "conv1_b": jax.random.normal(ks[1], (C1,), jnp.float32) * 0.1,
        "conv2_w": jax.random.normal(ks[2], (C2, C1, K2, K2), jnp.float32) * 0.1,
        "conv2_b": jax.random.normal(ks[3], (C2,), jnp.float32) * 0.1,
        "fc1_w":   jax.random.normal(ks[4], (HIDDEN, F), jnp.float32) * 0.02,
        "fc1_b":   jax.random.normal(ks[5], (HIDDEN,), jnp.float32) * 0.1,
        "logic_w": jax.random.normal(ks[6], (1, HIDDEN), jnp.float32) * 0.2,
    }

    # forward only uses `av`; ui/uv/ai are unused by the compute path, y only feeds the loss.
    av = jax.random.normal(ks[7], (B, DAY, A_FIELD), jnp.float32)

    prepped = prepare_params(params)          # one-time prep, outside the hot path
    out = dpcnn_forward(av, prepped)
    out = jax.block_until_ready(out)

    ref = reference_forward(av, params)
    assert out.shape == (B, 1)
    assert jnp.allclose(out, ref, rtol=1e-3, atol=1e-3), (out, ref)

    print("KERNEL_OK")
</pallas_src>

<mosaic_0001>
module attributes {stable_mosaic.version = 11 : i64} {
  func.func @dpcnn_kernel(%arg0: memref<8x128xf32, #tpu.memory_space<vmem>>, %arg1: memref<9x8x128xf32, #tpu.memory_space<vmem>>, %arg2: memref<8x128xf32, #tpu.memory_space<vmem>>, %arg3: memref<9x8x128xf32, #tpu.memory_space<vmem>>, %arg4: memref<9x8x8x1xf32, #tpu.memory_space<vmem>>, %arg5: memref<8x2x128xf32, #tpu.memory_space<vmem>>, %arg6: memref<1024x32xf32, #tpu.memory_space<any>>, %arg7: memref<1x32xf32, #tpu.memory_space<vmem>>, %arg8: memref<1x32xf32, #tpu.memory_space<vmem>>, %arg9: memref<2x1xf32, #tpu.memory_space<vmem>>, %arg10: memref<1024x32xf32, #tpu.memory_space<vmem>>, %arg11: memref<1x!tpu.dma_semaphore, #tpu.memory_space<semaphore_mem>>) attributes {dimension_semantics = [], scalar_prefetch = 0 : i64, scratch_operands = 2 : i64, tpu.core_type = #tpu.core_type<tc>} {
    %c0_i32 = arith.constant 0 : i32
    %0 = tpu.memref_slice %arg11[%c0_i32] : memref<1x!tpu.dma_semaphore, #tpu.memory_space<semaphore_mem>> -> memref<1x!tpu.dma_semaphore, #tpu.memory_space<semaphore_mem>>
    %1 = tpu.memref_squeeze %0 : memref<1x!tpu.dma_semaphore, #tpu.memory_space<semaphore_mem>> -> memref<!tpu.dma_semaphore, #tpu.memory_space<semaphore_mem>>
    tpu.enqueue_dma source(%arg6 : memref<1024x32xf32, #tpu.memory_space<any>>) target(%arg10 : memref<1024x32xf32, #tpu.memory_space<vmem>>) target_semaphore(%1 : memref<!tpu.dma_semaphore, #tpu.memory_space<semaphore_mem>>)
    %c0 = arith.constant 0 : index
    %c0_0 = arith.constant 0 : index
    %2 = vector.load %arg0[%c0, %c0_0] : memref<8x128xf32, #tpu.memory_space<vmem>>, vector<8x128xf32>
    %cst = arith.constant 0.000000e+00 : f32
    %3 = vector.broadcast %cst : f32 to vector<8x128xf32>
    %c17_i32 = arith.constant 17 : i32
    %4 = tpu.dynamic_rotate %2 by %c17_i32 dim 1 : vector<8x128xf32>, i32 -> vector<8x128xf32>
    %c0_1 = arith.constant 0 : index
    %c0_2 = arith.constant 0 : index
    %c0_3 = arith.constant 0 : index
    %5 = vector.load %arg1[%c0_1, %c0_2, %c0_3] : memref<9x8x128xf32, #tpu.memory_space<vmem>>, vector<1x8x128xf32>
    %6 = vector.shape_cast %5 : vector<1x8x128xf32> to vector<8x128xf32>
    %7 = arith.mulf %6, %4 : vector<8x128xf32>
    %8 = arith.addf %3, %7 : vector<8x128xf32>
    %c16_i32 = arith.constant 16 : i32
    %9 = tpu.dynamic_rotate %2 by %c16_i32 dim 1 : vector<8x128xf32>, i32 -> vector<8x128xf32>
    %c1 = arith.constant 1 : index
    %c0_4 = arith.constant 0 : index
    %c0_5 = arith.constant 0 : index
    %10 = vector.load %arg1[%c1, %c0_4, %c0_5] : memref<9x8x128xf32, #tpu.memory_space<vmem>>, vector<1x8x128xf32>
    %11 = vector.shape_cast %10 : vector<1x8x128xf32> to vector<8x128xf32>
    %12 = arith.mulf %11, %9 : vector<8x128xf32>
    %13 = arith.addf %8, %12 : vector<8x128xf32>
    %c15_i32 = arith.constant 15 : i32
    %14 = tpu.dynamic_rotate %2 by %c15_i32 dim 1 : vector<8x128xf32>, i32 -> vector<8x128xf32>
    %c2 = arith.constant 2 : index
    %c0_6 = arith.constant 0 : index
    %c0_7 = arith.constant 0 : index
    %15 = vector.load %arg1[%c2, %c0_6, %c0_7] : memref<9x8x128xf32, #tpu.memory_space<vmem>>, vector<1x8x128xf32>
    %16 = vector.shape_cast %15 : vector<1x8x128xf32> to vector<8x128xf32>
    %17 = arith.mulf %16, %14 : vector<8x128xf32>
    %18 = arith.addf %13, %17 : vector<8x128xf32>
    %c1_i32 = arith.constant 1 : i32
    %19 = tpu.dynamic_rotate %2 by %c1_i32 dim 1 : vector<8x128xf32>, i32 -> vector<8x128xf32>
    %c3 = arith.constant 3 : index
    %c0_8 = arith.constant 0 : index
    %c0_9 = arith.constant 0 : index
    %20 = vector.load %arg1[%c3, %c0_8, %c0_9] : memref<9x8x128xf32, #tpu.memory_space<vmem>>, vector<1x8x128xf32>
    %21 = vector.shape_cast %20 : vector<1x8x128xf32> to vector<8x128xf32>
    %22 = arith.mulf %21, %19 : vector<8x128xf32>
    %23 = arith.addf %18, %22 : vector<8x128xf32>
    %c4 = arith.constant 4 : index
    %c0_10 = arith.constant 0 : index
    %c0_11 = arith.constant 0 : index
    %24 = vector.load %arg1[%c4, %c0_10, %c0_11] : memref<9x8x128xf32, #tpu.memory_space<vmem>>, vector<1x8x128xf32>
    %25 = vector.shape_cast %24 : vector<1x8x128xf32> to vector<8x128xf32>
    %26 = arith.mulf %25, %2 : vector<8x128xf32>
    %27 = arith.addf %23, %26 : vector<8x128xf32>
    %c127_i32 = arith.constant 127 : i32
    %28 = tpu.dynamic_rotate %2 by %c127_i32 dim 1 : vector<8x128xf32>, i32 -> vector<8x128xf32>
    %c5 = arith.constant 5 : index
    %c0_12 = arith.constant 0 : index
    %c0_13 = arith.constant 0 : index
    %29 = vector.load %arg1[%c5, %c0_12, %c0_13] : memref<9x8x128xf32, #tpu.memory_space<vmem>>, vector<1x8x128xf32>
    %30 = vector.shape_cast %29 : vector<1x8x128xf32> to vector<8x128xf32>
    %31 = arith.mulf %30, %28 : vector<8x128xf32>
    %32 = arith.addf %27, %31 : vector<8x128xf32>
    %c113_i32 = arith.constant 113 : i32
    %33 = tpu.dynamic_rotate %2 by %c113_i32 dim 1 : vector<8x128xf32>, i32 -> vector<8x128xf32>
    %c6 = arith.constant 6 : index
    %c0_14 = arith.constant 0 : index
    %c0_15 = arith.constant 0 : index
    %34 = vector.load %arg1[%c6, %c0_14, %c0_15] : memref<9x8x128xf32, #tpu.memory_space<vmem>>, vector<1x8x128xf32>
    %35 = vector.shape_cast %34 : vector<1x8x128xf32> to vector<8x128xf32>
    %36 = arith.mulf %35, %33 : vector<8x128xf32>
    %37 = arith.addf %32, %36 : vector<8x128xf32>
    %c112_i32 = arith.constant 112 : i32
    %38 = tpu.dynamic_rotate %2 by %c112_i32 dim 1 : vector<8x128xf32>, i32 -> vector<8x128xf32>
    %c7 = arith.constant 7 : index
    %c0_16 = arith.constant 0 : index
    %c0_17 = arith.constant 0 : index
    %39 = vector.load %arg1[%c7, %c0_16, %c0_17] : memref<9x8x128xf32, #tpu.memory_space<vmem>>, vector<1x8x128xf32>
    %40 = vector.shape_cast %39 : vector<1x8x128xf32> to vector<8x128xf32>
    %41 = arith.mulf %40, %38 : vector<8x128xf32>
    %42 = arith.addf %37, %41 : vector<8x128xf32>
    %c111_i32 = arith.constant 111 : i32
    %43 = tpu.dynamic_rotate %2 by %c111_i32 dim 1 : vector<8x128xf32>, i32 -> vector<8x128xf32>
    %c8 = arith.constant 8 : index
    %c0_18 = arith.constant 0 : index
    %c0_19 = arith.constant 0 : index
    %44 = vector.load %arg1[%c8, %c0_18, %c0_19] : memref<9x8x128xf32, #tpu.memory_space<vmem>>, vector<1x8x128xf32>
    %45 = vector.shape_cast %44 : vector<1x8x128xf32> to vector<8x128xf32>
    %46 = arith.mulf %45, %43 : vector<8x128xf32>
    %47 = arith.addf %42, %46 : vector<8x128xf32>
    %c0_20 = arith.constant 0 : index
    %c0_21 = arith.constant 0 : index
    %48 = vector.load %arg2[%c0_20, %c0_21] : memref<8x128xf32, #tpu.memory_space<vmem>>, vector<8x128xf32>
    %49 = arith.addf %47, %48 : vector<8x128xf32>
    %cst_22 = arith.constant 0.000000e+00 : f32
    %50 = vector.broadcast %cst_22 : f32 to vector<8x128xf32>
    %51 = arith.maximumf %49, %50 : vector<8x128xf32>
    %cst_23 = arith.constant 0.000000e+00 : f32
    %52 = vector.broadcast %cst_23 : f32 to vector<8x128xf32>
    %cst_24 = arith.constant 0.000000e+00 : f32
    %53 = vector.broadcast %cst_24 : f32 to vector<8x128xf32>
    %cst_25 = arith.constant 0.000000e+00 : f32
    %54 = vector.broadcast %cst_25 : f32 to vector<8x128xf32>
    %cst_26 = arith.constant 0.000000e+00 : f32
    %55 = vector.broadcast %cst_26 : f32 to vector<8x128xf32>
    %cst_27 = arith.constant 0.000000e+00 : f32
    %56 = vector.broadcast %cst_27 : f32 to vector<8x128xf32>
    %cst_28 = arith.constant 0.000000e+00 : f32
    %57 = vector.broadcast %cst_28 : f32 to vector<8x128xf32>
    %cst_29 = arith.constant 0.000000e+00 : f32
    %58 = vector.broadcast %cst_29 : f32 to vector<8x128xf32>
    %cst_30 = arith.constant 0.000000e+00 : f32
    %59 = vector.broadcast %cst_30 : f32 to vector<8x128xf32>
    %c17_i32_31 = arith.constant 17 : i32
    %60 = tpu.dynamic_rotate %51 by %c17_i32_31 dim 1 : vector<8x128xf32>, i32 -> vector<8x128xf32>
    %c0_32 = arith.constant 0 : index
    %c0_33 = arith.constant 0 : index
    %c0_34 = arith.constant 0 : index
    %61 = vector.load %arg3[%c0_32, %c0_33, %c0_34] : memref<9x8x128xf32, #tpu.memory_space<vmem>>, vector<1x8x128xf32>
    %62 = vector.shape_cast %61 : vector<1x8x128xf32> to vector<8x128xf32>
    %63 = arith.mulf %60, %62 : vector<8x128xf32>
    %c0_35 = arith.constant 0 : index
    %c0_36 = arith.constant 0 : index
    %c0_37 = arith.constant 0 : index
    %c0_38 = arith.constant 0 : index
    %64 = vector.load %arg4[%c0_35, %c0_36, %c0_37, %c0_38] : memref<9x8x8x1xf32, #tpu.memory_space<vmem>>, vector<1x1x8x1xf32>
    %65 = vector.shape_cast %64 : vector<1x1x8x1xf32> to vector<8x1xf32>
    %66 = vector.broadcast %65 : vector<8x1xf32> to vector<8x128xf32>
    %67 = arith.mulf %66, %63 : vector<8x128xf32>
    %68 = arith.addf %52, %67 : vector<8x128xf32>
    %c0_39 = arith.constant 0 : index
    %c1_40 = arith.constant 1 : index
    %c0_41 = arith.constant 0 : index
    %c0_42 = arith.constant 0 : index
    %69 = vector.load %arg4[%c0_39, %c1_40, %c0_41, %c0_42] : memref<9x8x8x1xf32, #tpu.memory_space<vmem>>, vector<1x1x8x1xf32>
    %70 = vector.shape_cast %69 : vector<1x1x8x1xf32> to vector<8x1xf32>
    %71 = vector.broadcast %70 : vector<8x1xf32> to vector<8x128xf32>
    %72 = arith.mulf %71, %63 : vector<8x128xf32>
    %73 = arith.addf %53, %72 : vector<8x128xf32>
    %c0_43 = arith.constant 0 : index
    %c2_44 = arith.constant 2 : index
    %c0_45 = arith.constant 0 : index
    %c0_46 = arith.constant 0 : index
    %74 = vector.load %arg4[%c0_43, %c2_44, %c0_45, %c0_46] : memref<9x8x8x1xf32, #tpu.memory_space<vmem>>, vector<1x1x8x1xf32>
    %75 = vector.shape_cast %74 : vector<1x1x8x1xf32> to vector<8x1xf32>
    %76 = vector.broadcast %75 : vector<8x1xf32> to vector<8x128xf32>
    %77 = arith.mulf %76, %63 : vector<8x128xf32>
    %78 = arith.addf %54, %77 : vector<8x128xf32>
    %c0_47 = arith.constant 0 : index
    %c3_48 = arith.constant 3 : index
    %c0_49 = arith.constant 0 : index
    %c0_50 = arith.constant 0 : index
    %79 = vector.load %arg4[%c0_47, %c3_48, %c0_49, %c0_50] : memref<9x8x8x1xf32, #tpu.memory_space<vmem>>, vector<1x1x8x1xf32>
    %80 = vector.shape_cast %79 : vector<1x1x8x1xf32> to vector<8x1xf32>
    %81 = vector.broadcast %80 : vector<8x1xf32> to vector<8x128xf32>
    %82 = arith.mulf %81, %63 : vector<8x128xf32>
    %83 = arith.addf %55, %82 : vector<8x128xf32>
    %c0_51 = arith.constant 0 : index
    %c4_52 = arith.constant 4 : index
    %c0_53 = arith.constant 0 : index
    %c0_54 = arith.constant 0 : index
    %84 = vector.load %arg4[%c0_51, %c4_52, %c0_53, %c0_54] : memref<9x8x8x1xf32, #tpu.memory_space<vmem>>, vector<1x1x8x1xf32>
    %85 = vector.shape_cast %84 : vector<1x1x8x1xf32> to vector<8x1xf32>
    %86 = vector.broadcast %85 : vector<8x1xf32> to vector<8x128xf32>
    %87 = arith.mulf %86, %63 : vector<8x128xf32>
    %88 = arith.addf %56, %87 : vector<8x128xf32>
    %c0_55 = arith.constant 0 : index
    %c5_56 = arith.constant 5 : index
    %c0_57 = arith.constant 0 : index
    %c0_58 = arith.constant 0 : index
    %89 = vector.load %arg4[%c0_55, %c5_56, %c0_57, %c0_58] : memref<9x8x8x1xf32, #tpu.memory_space<vmem>>, vector<1x1x8x1xf32>
    %90 = vector.shape_cast %89 : vector<1x1x8x1xf32> to vector<8x1xf32>
    %91 = vector.broadcast %90 : vector<8x1xf32> to vector<8x128xf32>
    %92 = arith.mulf %91, %63 : vector<8x128xf32>
    %93 = arith.addf %57, %92 : vector<8x128xf32>
    %c0_59 = arith.constant 0 : index
    %c6_60 = arith.constant 6 : index
    %c0_61 = arith.constant 0 : index
    %c0_62 = arith.constant 0 : index
    %94 = vector.load %arg4[%c0_59, %c6_60, %c0_61, %c0_62] : memref<9x8x8x1xf32, #tpu.memory_space<vmem>>, vector<1x1x8x1xf32>
    %95 = vector.shape_cast %94 : vector<1x1x8x1xf32> to vector<8x1xf32>
    %96 = vector.broadcast %95 : vector<8x1xf32> to vector<8x128xf32>
    %97 = arith.mulf %96, %63 : vector<8x128xf32>
    %98 = arith.addf %58, %97 : vector<8x128xf32>
    %c0_63 = arith.constant 0 : index
    %c7_64 = arith.constant 7 : index
    %c0_65 = arith.constant 0 : index
    %c0_66 = arith.constant 0 : index
    %99 = vector.load %arg4[%c0_63, %c7_64, %c0_65, %c0_66] : memref<9x8x8x1xf32, #tpu.memory_space<vmem>>, vector<1x1x8x1xf32>
    %100 = vector.shape_cast %99 : vector<1x1x8x1xf32> to vector<8x1xf32>
    %101 = vector.broadcast %100 : vector<8x1xf32> to vector<8x128xf32>
    %102 = arith.mulf %101, %63 : vector<8x128xf32>
    %103 = arith.addf %59, %102 : vector<8x128xf32>
    %c16_i32_67 = arith.constant 16 : i32
    %104 = tpu.dynamic_rotate %51 by %c16_i32_67 dim 1 : vector<8x128xf32>, i32 -> vector<8x128xf32>
    %c1_68 = arith.constant 1 : index
    %c0_69 = arith.constant 0 : index
    %c0_70 = arith.constant 0 : index
    %105 = vector.load %arg3[%c1_68, %c0_69, %c0_70] : memref<9x8x128xf32, #tpu.memory_space<vmem>>, vector<1x8x128xf32>
    %106 = vector.shape_cast %105 : vector<1x8x128xf32> to vector<8x128xf32>
    %107 = arith.mulf %104, %106 : vector<8x128xf32>
    %c1_71 = arith.constant 1 : index
    %c0_72 = arith.constant 0 : index
    %c0_73 = arith.constant 0 : index
    %c0_74 = arith.constant 0 : index
    %108 = vector.load %arg4[%c1_71, %c0_72, %c0_73, %c0_74] : memref<9x8x8x1xf32, #tpu.memory_space<vmem>>, vector<1x1x8x1xf32>
    %109 = vector.shape_cast %108 : vector<1x1x8x1xf32> to vector<8x1xf32>
    %110 = vector.broadcast %109 : vector<8x1xf32> to vector<8x128xf32>
    %111 = arith.mulf %110, %107 : vector<8x128xf32>
    %112 = arith.addf %68, %111 : vector<8x128xf32>
    %c1_75 = arith.constant 1 : index
    %c1_76 = arith.constant 1 : index
    %c0_77 = arith.constant 0 : index
    %c0_78 = arith.constant 0 : index
    %113 = vector.load %arg4[%c1_75, %c1_76, %c0_77, %c0_78] : memref<9x8x8x1xf32, #tpu.memory_space<vmem>>, vector<1x1x8x1xf32>
    %114 = vector.shape_cast %113 : vector<1x1x8x1xf32> to vector<8x1xf32>
    %115 = vector.broadcast %114 : vector<8x1xf32> to vector<8x128xf32>
    %116 = arith.mulf %115, %107 : vector<8x128xf32>
    %117 = arith.addf %73, %116 : vector<8x128xf32>
    %c1_79 = arith.constant 1 : index
    %c2_80 = arith.constant 2 : index
    %c0_81 = arith.constant 0 : index
    %c0_82 = arith.constant 0 : index
    %118 = vector.load %arg4[%c1_79, %c2_80, %c0_81, %c0_82] : memref<9x8x8x1xf32, #tpu.memory_space<vmem>>, vector<1x1x8x1xf32>
    %119 = vector.shape_cast %118 : vector<1x1x8x1xf32> to vector<8x1xf32>
    %120 = vector.broadcast %119 : vector<8x1xf32> to vector<8x128xf32>
    %121 = arith.mulf %120, %107 : vector<8x128xf32>
    %122 = arith.addf %78, %121 : vector<8x128xf32>
    %c1_83 = arith.constant 1 : index
    %c3_84 = arith.constant 3 : index
    %c0_85 = arith.constant 0 : index
    %c0_86 = arith.constant 0 : index
    %123 = vector.load %arg4[%c1_83, %c3_84, %c0_85, %c0_86] : memref<9x8x8x1xf32, #tpu.memory_space<vmem>>, vector<1x1x8x1xf32>
    %124 = vector.shape_cast %123 : vector<1x1x8x1xf32> to vector<8x1xf32>
    %125 = vector.broadcast %124 : vector<8x1xf32> to vector<8x128xf32>
    %126 = arith.mulf %125, %107 : vector<8x128xf32>
    %127 = arith.addf %83, %126 : vector<8x128xf32>
    %c1_87 = arith.constant 1 : index
    %c4_88 = arith.constant 4 : index
    %c0_89 = arith.constant 0 : index
    %c0_90 = arith.constant 0 : index
    %128 = vector.load %arg4[%c1_87, %c4_88, %c0_89, %c0_90] : memref<9x8x8x1xf32, #tpu.memory_space<vmem>>, vector<1x1x8x1xf32>
    %129 = vector.shape_cast %128 : vector<1x1x8x1xf32> to vector<8x1xf32>
    %130 = vector.broadcast %129 : vector<8x1xf32> to vector<8x128xf32>
    %131 = arith.mulf %130, %107 : vector<8x128xf32>
    %132 = arith.addf %88, %131 : vector<8x128xf32>
    %c1_91 = arith.constant 1 : index
    %c5_92 = arith.constant 5 : index
    %c0_93 = arith.constant 0 : index
    %c0_94 = arith.constant 0 : index
    %133 = vector.load %arg4[%c1_91, %c5_92, %c0_93, %c0_94] : memref<9x8x8x1xf32, #tpu.memory_space<vmem>>, vector<1x1x8x1xf32>
    %134 = vector.shape_cast %133 : vector<1x1x8x1xf32> to vector<8x1xf32>
    %135 = vector.broadcast %134 : vector<8x1xf32> to vector<8x128xf32>
    %136 = arith.mulf %135, %107 : vector<8x128xf32>
    %137 = arith.addf %93, %136 : vector<8x128xf32>
    %c1_95 = arith.constant 1 : index
    %c6_96 = arith.constant 6 : index
    %c0_97 = arith.constant 0 : index
    %c0_98 = arith.constant 0 : index
    %138 = vector.load %arg4[%c1_95, %c6_96, %c0_97, %c0_98] : memref<9x8x8x1xf32, #tpu.memory_space<vmem>>, vector<1x1x8x1xf32>
    %139 = vector.shape_cast %138 : vector<1x1x8x1xf32> to vector<8x1xf32>
    %140 = vector.broadcast %139 : vector<8x1xf32> to vector<8x128xf32>
    %141 = arith.mulf %140, %107 : vector<8x128xf32>
    %142 = arith.addf %98, %141 : vector<8x128xf32>
    %c1_99 = arith.constant 1 : index
    %c7_100 = arith.constant 7 : index
    %c0_101 = arith.constant 0 : index
    %c0_102 = arith.constant 0 : index
    %143 = vector.load %arg4[%c1_99, %c7_100, %c0_101, %c0_102] : memref<9x8x8x1xf32, #tpu.memory_space<vmem>>, vector<1x1x8x1xf32>
    %144 = vector.shape_cast %143 : vector<1x1x8x1xf32> to vector<8x1xf32>
    %145 = vector.broadcast %144 : vector<8x1xf32> to vector<8x128xf32>
    %146 = arith.mulf %145, %107 : vector<8x128xf32>
    %147 = arith.addf %103, %146 : vector<8x128xf32>
    %c15_i32_103 = arith.constant 15 : i32
    %148 = tpu.dynamic_rotate %51 by %c15_i32_103 dim 1 : vector<8x128xf32>, i32 -> vector<8x128xf32>
    %c2_104 = arith.constant 2 : index
    %c0_105 = arith.constant 0 : index
    %c0_106 = arith.constant 0 : index
    %149 = vector.load %arg3[%c2_104, %c0_105, %c0_106] : memref<9x8x128xf32, #tpu.memory_space<vmem>>, vector<1x8x128xf32>
    %150 = vector.shape_cast %149 : vector<1x8x128xf32> to vector<8x128xf32>
    %151 = arith.mulf %148, %150 : vector<8x128xf32>
    %c2_107 = arith.constant 2 : index
    %c0_108 = arith.constant 0 : index
    %c0_109 = arith.constant 0 : index
    %c0_110 = arith.constant 0 : index
    %152 = vector.load %arg4[%c2_107, %c0_108, %c0_109, %c0_110] : memref<9x8x8x1xf32, #tpu.memory_space<vmem>>, vector<1x1x8x1xf32>
    %153 = vector.shape_cast %152 : vector<1x1x8x1xf32> to vector<8x1xf32>
    %154 = vector.broadcast %153 : vector<8x1xf32> to vector<8x128xf32>
    %155 = arith.mulf %154, %151 : vector<8x128xf32>
    %156 = arith.addf %112, %155 : vector<8x128xf32>
    %c2_111 = arith.constant 2 : index
    %c1_112 = arith.constant 1 : index
    %c0_113 = arith.constant 0 : index
    %c0_114 = arith.constant 0 : index
    %157 = vector.load %arg4[%c2_111, %c1_112, %c0_113, %c0_114] : memref<9x8x8x1xf32, #tpu.memory_space<vmem>>, vector<1x1x8x1xf32>
    %158 = vector.shape_cast %157 : vector<1x1x8x1xf32> to vector<8x1xf32>
    %159 = vector.broadcast %158 : vector<8x1xf32> to vector<8x128xf32>
    %160 = arith.mulf %159, %151 : vector<8x128xf32>
    %161 = arith.addf %117, %160 : vector<8x128xf32>
    %c2_115 = arith.constant 2 : index
    %c2_116 = arith.constant 2 : index
    %c0_117 = arith.constant 0 : index
    %c0_118 = arith.constant 0 : index
    %162 = vector.load %arg4[%c2_115, %c2_116, %c0_117, %c0_118] : memref<9x8x8x1xf32, #tpu.memory_space<vmem>>, vector<1x1x8x1xf32>
    %163 = vector.shape_cast %162 : vector<1x1x8x1xf32> to vector<8x1xf32>
    %164 = vector.broadcast %163 : vector<8x1xf32> to vector<8x128xf32>
    %165 = arith.mulf %164, %151 : vector<8x128xf32>
    %166 = arith.addf %122, %165 : vector<8x128xf32>
    %c2_119 = arith.constant 2 : index
    %c3_120 = arith.constant 3 : index
    %c0_121 = arith.constant 0 : index
    %c0_122 = arith.constant 0 : index
    %167 = vector.load %arg4[%c2_119, %c3_120, %c0_121, %c0_122] : memref<9x8x8x1xf32, #tpu.memory_space<vmem>>, vector<1x1x8x1xf32>
    %168 = vector.shape_cast %167 : vector<1x1x8x1xf32> to vector<8x1xf32>
    %169 = vector.broadcast %168 : vector<8x1xf32> to vector<8x128xf32>
    %170 = arith.mulf %169, %151 : vector<8x128xf32>
    %171 = arith.addf %127, %170 : vector<8x128xf32>
    %c2_123 = arith.constant 2 : index
    %c4_124 = arith.constant 4 : index
    %c0_125 = arith.constant 0 : index
    %c0_126 = arith.constant 0 : index
    %172 = vector.load %arg4[%c2_123, %c4_124, %c0_125, %c0_126] : memref<9x8x8x1xf32, #tpu.memory_space<vmem>>, vector<1x1x8x1xf32>
    %173 = vector.shape_cast %172 : vector<1x1x8x1xf32> to vector<8x1xf32>
    %174 = vector.broadcast %173 : vector<8x1xf32> to vector<8x128xf32>
    %175 = arith.mulf %174, %151 : vector<8x128xf32>
    %176 = arith.addf %132, %175 : vector<8x128xf32>
    %c2_127 = arith.constant 2 : index
    %c5_128 = arith.constant 5 : index
    %c0_129 = arith.constant 0 : index
    %c0_130 = arith.constant 0 : index
    %177 = vector.load %arg4[%c2_127, %c5_128, %c0_129, %c0_130] : memref<9x8x8x1xf32, #tpu.memory_space<vmem>>, vector<1x1x8x1xf32>
    %178 = vector.shape_cast %177 : vector<1x1x8x1xf32> to vector<8x1xf32>
    %179 = vector.broadcast %178 : vector<8x1xf32> to vector<8x128xf32>
    %180 = arith.mulf %179, %151 : vector<8x128xf32>
    %181 = arith.addf %137, %180 : vector<8x128xf32>
    %c2_131 = arith.constant 2 : index
    %c6_132 = arith.constant 6 : index
    %c0_133 = arith.constant 0 : index
    %c0_134 = arith.constant 0 : index
    %182 = vector.load %arg4[%c2_131, %c6_132, %c0_133, %c0_134] : memref<9x8x8x1xf32, #tpu.memory_space<vmem>>, vector<1x1x8x1xf32>
    %183 = vector.shape_cast %182 : vector<1x1x8x1xf32> to vector<8x1xf32>
    %184 = vector.broadcast %183 : vector<8x1xf32> to vector<8x128xf32>
    %185 = arith.mulf %184, %151 : vector<8x128xf32>
    %186 = arith.addf %142, %185 : vector<8x128xf32>
    %c2_135 = arith.constant 2 : index
    %c7_136 = arith.constant 7 : index
    %c0_137 = arith.constant 0 : index
    %c0_138 = arith.constant 0 : index
    %187 = vector.load %arg4[%c2_135, %c7_136, %c0_137, %c0_138] : memref<9x8x8x1xf32, #tpu.memory_space<vmem>>, vector<1x1x8x1xf32>
    %188 = vector.shape_cast %187 : vector<1x1x8x1xf32> to vector<8x1xf32>
    %189 = vector.broadcast %188 : vector<8x1xf32> to vector<8x128xf32>
    %190 = arith.mulf %189, %151 : vector<8x128xf32>
    %191 = arith.addf %147, %190 : vector<8x128xf32>
    %c1_i32_139 = arith.constant 1 : i32
    %192 = tpu.dynamic_rotate %51 by %c1_i32_139 dim 1 : vector<8x128xf32>, i32 -> vector<8x128xf32>
    %c3_140 = arith.constant 3 : index
    %c0_141 = arith.constant 0 : index
    %c0_142 = arith.constant 0 : index
    %193 = vector.load %arg3[%c3_140, %c0_141, %c0_142] : memref<9x8x128xf32, #tpu.memory_space<vmem>>, vector<1x8x128xf32>
    %194 = vector.shape_cast %193 : vector<1x8x128xf32> to vector<8x128xf32>
    %195 = arith.mulf %192, %194 : vector<8x128xf32>
    %c3_143 = arith.constant 3 : index
    %c0_144 = arith.constant 0 : index
    %c0_145 = arith.constant 0 : index
    %c0_146 = arith.constant 0 : index
    %196 = vector.load %arg4[%c3_143, %c0_144, %c0_145, %c0_146] : memref<9x8x8x1xf32, #tpu.memory_space<vmem>>, vector<1x1x8x1xf32>
    %197 = vector.shape_cast %196 : vector<1x1x8x1xf32> to vector<8x1xf32>
    %198 = vector.broadcast %197 : vector<8x1xf32> to vector<8x128xf32>
    %199 = arith.mulf %198, %195 : vector<8x128xf32>
    %200 = arith.addf %156, %199 : vector<8x128xf32>
    %c3_147 = arith.constant 3 : index
    %c1_148 = arith.constant 1 : index
    %c0_149 = arith.constant 0 : index
    %c0_150 = arith.constant 0 : index
    %201 = vector.load %arg4[%c3_147, %c1_148, %c0_149, %c0_150] : memref<9x8x8x1xf32, #tpu.memory_space<vmem>>, vector<1x1x8x1xf32>
    %202 = vector.shape_cast %201 : vector<1x1x8x1xf32> to vector<8x1xf32>
    %203 = vector.broadcast %202 : vector<8x1xf32> to vector<8x128xf32>
    %204 = arith.mulf %203, %195 : vector<8x128xf32>
    %205 = arith.addf %161, %204 : vector<8x128xf32>
    %c3_151 = arith.constant 3 : index
    %c2_152 = arith.constant 2 : index
    %c0_153 = arith.constant 0 : index
    %c0_154 = arith.constant 0 : index
    %206 = vector.load %arg4[%c3_151, %c2_152, %c0_153, %c0_154] : memref<9x8x8x1xf32, #tpu.memory_space<vmem>>, vector<1x1x8x1xf32>
    %207 = vector.shape_cast %206 : vector<1x1x8x1xf32> to vector<8x1xf32>
    %208 = vector.broadcast %207 : vector<8x1xf32> to vector<8x128xf32>
    %209 = arith.mulf %208, %195 : vector<8x128xf32>
    %210 = arith.addf %166, %209 : vector<8x128xf32>
    %c3_155 = arith.constant 3 : index
    %c3_156 = arith.constant 3 : index
    %c0_157 = arith.constant 0 : index
    %c0_158 = arith.constant 0 : index
    %211 = vector.load %arg4[%c3_155, %c3_156, %c0_157, %c0_158] : memref<9x8x8x1xf32, #tpu.memory_space<vmem>>, vector<1x1x8x1xf32>
    %212 = vector.shape_cast %211 : vector<1x1x8x1xf32> to vector<8x1xf32>
    %213 = vector.broadcast %212 : vector<8x1xf32> to vector<8x128xf32>
    %214 = arith.mulf %213, %195 : vector<8x128xf32>
    %215 = arith.addf %171, %214 : vector<8x128xf32>
    %c3_159 = arith.constant 3 : index
    %c4_160 = arith.constant 4 : index
    %c0_161 = arith.constant 0 : index
    %c0_162 = arith.constant 0 : index
    %216 = vector.load %arg4[%c3_159, %c4_160, %c0_161, %c0_162] : memref<9x8x8x1xf32, #tpu.memory_space<vmem>>, vector<1x1x8x1xf32>
    %217 = vector.shape_cast %216 : vector<1x1x8x1xf32> to vector<8x1xf32>
    %218 = vector.broadcast %217 : vector<8x1xf32> to vector<8x128xf32>
    %219 = arith.mulf %218, %195 : vector<8x128xf32>
    %220 = arith.addf %176, %219 : vector<8x128xf32>
    %c3_163 = arith.constant 3 : index
    %c5_164 = arith.constant 5 : index
    %c0_165 = arith.constant 0 : index
    %c0_166 = arith.constant 0 : index
    %221 = vector.load %arg4[%c3_163, %c5_164, %c0_165, %c0_166] : memref<9x8x8x1xf32, #tpu.memory_space<vmem>>, vector<1x1x8x1xf32>
    %222 = vector.shape_cast %221 : vector<1x1x8x1xf32> to vector<8x1xf32>
    %223 = vector.broadcast %222 : vector<8x1xf32> to vector<8x128xf32>
    %224 = arith.mulf %223, %195 : vector<8x128xf32>
    %225 = arith.addf %181, %224 : vector<8x128xf32>
    %c3_167 = arith.constant 3 : index
    %c6_168 = arith.constant 6 : index
    %c0_169 = arith.constant 0 : index
    %c0_170 = arith.constant 0 : index
    %226 = vector.load %arg4[%c3_167, %c6_168, %c0_169, %c0_170] : memref<9x8x8x1xf32, #tpu.memory_space<vmem>>, vector<1x1x8x1xf32>
    %227 = vector.shape_cast %226 : vector<1x1x8x1xf32> to vector<8x1xf32>
    %228 = vector.broadcast %227 : vector<8x1xf32> to vector<8x128xf32>
    %229 = arith.mulf %228, %195 : vector<8x128xf32>
    %230 = arith.addf %186, %229 : vector<8x128xf32>
    %c3_171 = arith.constant 3 : index
    %c7_172 = arith.constant 7 : index
    %c0_173 = arith.constant 0 : index
    %c0_174 = arith.constant 0 : index
    %231 = vector.load %arg4[%c3_171, %c7_172, %c0_173, %c0_174] : memref<9x8x8x1xf32, #tpu.memory_space<vmem>>, vector<1x1x8x1xf32>
    %232 = vector.shape_cast %231 : vector<1x1x8x1xf32> to vector<8x1xf32>
    %233 = vector.broadcast %232 : vector<8x1xf32> to vector<8x128xf32>
    %234 = arith.mulf %233, %195 : vector<8x128xf32>
    %235 = arith.addf %191, %234 : vector<8x128xf32>
    %c4_175 = arith.constant 4 : index
    %c0_176 = arith.constant 0 : index
    %c0_177 = arith.constant 0 : index
    %c0_178 = arith.constant 0 : index
    %236 = vector.load %arg4[%c4_175, %c0_176, %c0_177, %c0_178] : memref<9x8x8x1xf32, #tpu.memory_space<vmem>>, vector<1x1x8x1xf32>
    %237 = vector.shape_cast %236 : vector<1x1x8x1xf32> to vector<8x1xf32>
    %238 = vector.broadcast %237 : vector<8x1xf32> to vector<8x128xf32>
    %239 = arith.mulf %238, %51 : vector<8x128xf32>
    %240 = arith.addf %200, %239 : vector<8x128xf32>
    %c4_179 = arith.constant 4 : index
    %c1_180 = arith.constant 1 : index
    %c0_181 = arith.constant 0 : index
    %c0_182 = arith.constant 0 : index
    %241 = vector.load %arg4[%c4_179, %c1_180, %c0_181, %c0_182] : memref<9x8x8x1xf32, #tpu.memory_space<vmem>>, vector<1x1x8x1xf32>
    %242 = vector.shape_cast %241 : vector<1x1x8x1xf32> to vector<8x1xf32>
    %243 = vector.broadcast %242 : vector<8x1xf32> to vector<8x128xf32>
    %244 = arith.mulf %243, %51 : vector<8x128xf32>
    %245 = arith.addf %205, %244 : vector<8x128xf32>
    %c4_183 = arith.constant 4 : index
    %c2_184 = arith.constant 2 : index
    %c0_185 = arith.constant 0 : index
    %c0_186 = arith.constant 0 : index
    %246 = vector.load %arg4[%c4_183, %c2_184, %c0_185, %c0_186] : memref<9x8x8x1xf32, #tpu.memory_space<vmem>>, vector<1x1x8x1xf32>
    %247 = vector.shape_cast %246 : vector<1x1x8x1xf32> to vector<8x1xf32>
    %248 = vector.broadcast %247 : vector<8x1xf32> to vector<8x128xf32>
    %249 = arith.mulf %248, %51 : vector<8x128xf32>
    %250 = arith.addf %210, %249 : vector<8x128xf32>
    %c4_187 = arith.constant 4 : index
    %c3_188 = arith.constant 3 : index
    %c0_189 = arith.constant 0 : index
    %c0_190 = arith.constant 0 : index
    %251 = vector.load %arg4[%c4_187, %c3_188, %c0_189, %c0_190] : memref<9x8x8x1xf32, #tpu.memory_space<vmem>>, vector<1x1x8x1xf32>
    %252 = vector.shape_cast %251 : vector<1x1x8x1xf32> to vector<8x1xf32>
    %253 = vector.broadcast %252 : vector<8x1xf32> to vector<8x128xf32>
    %254 = arith.mulf %253, %51 : vector<8x128xf32>
    %255 = arith.addf %215, %254 : vector<8x128xf32>
    %c4_191 = arith.constant 4 : index
    %c4_192 = arith.constant 4 : index
    %c0_193 = arith.constant 0 : index
    %c0_194 = arith.constant 0 : index
    %256 = vector.load %arg4[%c4_191, %c4_192, %c0_193, %c0_194] : memref<9x8x8x1xf32, #tpu.memory_space<vmem>>, vector<1x1x8x1xf32>
    %257 = vector.shape_cast %256 : vector<1x1x8x1xf32> to vector<8x1xf32>
    %258 = vector.broadcast %257 : vector<8x1xf32> to vector<8x128xf32>
    %259 = arith.mulf %258, %51 : vector<8x128xf32>
    %260 = arith.addf %220, %259 : vector<8x128xf32>
    %c4_195 = arith.constant 4 : index
    %c5_196 = arith.constant 5 : index
    %c0_197 = arith.constant 0 : index
    %c0_198 = arith.constant 0 : index
    %261 = vector.load %arg4[%c4_195, %c5_196, %c0_197, %c0_198] : memref<9x8x8x1xf32, #tpu.memory_space<vmem>>, vector<1x1x8x1xf32>
    %262 = vector.shape_cast %261 : vector<1x1x8x1xf32> to vector<8x1xf32>
    %263 = vector.broadcast %262 : vector<8x1xf32> to vector<8x128xf32>
    %264 = arith.mulf %263, %51 : vector<8x128xf32>
    %265 = arith.addf %225, %264 : vector<8x128xf32>
    %c4_199 = arith.constant 4 : index
    %c6_200 = arith.constant 6 : index
    %c0_201 = arith.constant 0 : index
    %c0_202 = arith.constant 0 : index
    %266 = vector.load %arg4[%c4_199, %c6_200, %c0_201, %c0_202] : memref<9x8x8x1xf32, #tpu.memory_space<vmem>>, vector<1x1x8x1xf32>
    %267 = vector.shape_cast %266 : vector<1x1x8x1xf32> to vector<8x1xf32>
    %268 = vector.broadcast %267 : vector<8x1xf32> to vector<8x128xf32>
    %269 = arith.mulf %268, %51 : vector<8x128xf32>
    %270 = arith.addf %230, %269 : vector<8x128xf32>
    %c4_203 = arith.constant 4 : index
    %c7_204 = arith.constant 7 : index
    %c0_205 = arith.constant 0 : index
    %c0_206 = arith.constant 0 : index
    %271 = vector.load %arg4[%c4_203, %c7_204, %c0_205, %c0_206] : memref<9x8x8x1xf32, #tpu.memory_space<vmem>>, vector<1x1x8x1xf32>
    %272 = vector.shape_cast %271 : vector<1x1x8x1xf32> to vector<8x1xf32>
    %273 = vector.broadcast %272 : vector<8x1xf32> to vector<8x128xf32>
    %274 = arith.mulf %273, %51 : vector<8x128xf32>
    %275 = arith.addf %235, %274 : vector<8x128xf32>
    %c127_i32_207 = arith.constant 127 : i32
    %276 = tpu.dynamic_rotate %51 by %c127_i32_207 dim 1 : vector<8x128xf32>, i32 -> vector<8x128xf32>
    %c5_208 = arith.constant 5 : index
    %c0_209 = arith.constant 0 : index
    %c0_210 = arith.constant 0 : index
    %277 = vector.load %arg3[%c5_208, %c0_209, %c0_210] : memref<9x8x128xf32, #tpu.memory_space<vmem>>, vector<1x8x128xf32>
    %278 = vector.shape_cast %277 : vector<1x8x128xf32> to vector<8x128xf32>
    %279 = arith.mulf %276, %278 : vector<8x128xf32>
    %c5_211 = arith.constant 5 : index
    %c0_212 = arith.constant 0 : index
    %c0_213 = arith.constant 0 : index
    %c0_214 = arith.constant 0 : index
    %280 = vector.load %arg4[%c5_211, %c0_212, %c0_213, %c0_214] : memref<9x8x8x1xf32, #tpu.memory_space<vmem>>, vector<1x1x8x1xf32>
    %281 = vector.shape_cast %280 : vector<1x1x8x1xf32> to vector<8x1xf32>
    %282 = vector.broadcast %281 : vector<8x1xf32> to vector<8x128xf32>
    %283 = arith.mulf %282, %279 : vector<8x128xf32>
    %284 = arith.addf %240, %283 : vector<8x128xf32>
    %c5_215 = arith.constant 5 : index
    %c1_216 = arith.constant 1 : index
    %c0_217 = arith.constant 0 : index
    %c0_218 = arith.constant 0 : index
    %285 = vector.load %arg4[%c5_215, %c1_216, %c0_217, %c0_218] : memref<9x8x8x1xf32, #tpu.memory_space<vmem>>, vector<1x1x8x1xf32>
    %286 = vector.shape_cast %285 : vector<1x1x8x1xf32> to vector<8x1xf32>
    %287 = vector.broadcast %286 : vector<8x1xf32> to vector<8x128xf32>
    %288 = arith.mulf %287, %279 : vector<8x128xf32>
    %289 = arith.addf %245, %288 : vector<8x128xf32>
    %c5_219 = arith.constant 5 : index
    %c2_220 = arith.constant 2 : index
    %c0_221 = arith.constant 0 : index
    %c0_222 = arith.constant 0 : index
    %290 = vector.load %arg4[%c5_219, %c2_220, %c0_221, %c0_222] : memref<9x8x8x1xf32, #tpu.memory_space<vmem>>, vector<1x1x8x1xf32>
    %291 = vector.shape_cast %290 : vector<1x1x8x1xf32> to vector<8x1xf32>
    %292 = vector.broadcast %291 : vector<8x1xf32> to vector<8x128xf32>
    %293 = arith.mulf %292, %279 : vector<8x128xf32>
    %294 = arith.addf %250, %293 : vector<8x128xf32>
    %c5_223 = arith.constant 5 : index
    %c3_224 = arith.constant 3 : index
    %c0_225 = arith.constant 0 : index
    %c0_226 = arith.constant 0 : index
    %295 = vector.load %arg4[%c5_223, %c3_224, %c0_225, %c0_226] : memref<9x8x8x1xf32, #tpu.memory_space<vmem>>, vector<1x1x8x1xf32>
    %296 = vector.shape_cast %295 : vector<1x1x8x1xf32> to vector<8x1xf32>
    %297 = vector.broadcast %296 : vector<8x1xf32> to vector<8x128xf32>
    %298 = arith.mulf %297, %279 : vector<8x128xf32>
    %299 = arith.addf %255, %298 : vector<8x128xf32>
    %c5_227 = arith.constant 5 : index
    %c4_228 = arith.constant 4 : index
    %c0_229 = arith.constant 0 : index
    %c0_230 = arith.constant 0 : index
    %300 = vector.load %arg4[%c5_227, %c4_228, %c0_229, %c0_230] : memref<9x8x8x1xf32, #tpu.memory_space<vmem>>, vector<1x1x8x1xf32>
    %301 = vector.shape_cast %300 : vector<1x1x8x1xf32> to vector<8x1xf32>
    %302 = vector.broadcast %301 : vector<8x1xf32> to vector<8x128xf32>
    %303 = arith.mulf %302, %279 : vector<8x128xf32>
    %304 = arith.addf %260, %303 : vector<8x128xf32>
    %c5_231 = arith.constant 5 : index
    %c5_232 = arith.constant 5 : index
    %c0_233 = arith.constant 0 : index
    %c0_234 = arith.constant 0 : index
    %305 = vector.load %arg4[%c5_231, %c5_232, %c0_233, %c0_234] : memref<9x8x8x1xf32, #tpu.memory_space<vmem>>, vector<1x1x8x1xf32>
    %306 = vector.shape_cast %305 : vector<1x1x8x1xf32> to vector<8x1xf32>
    %307 = vector.broadcast %306 : vector<8x1xf32> to vector<8x128xf32>
    %308 = arith.mulf %307, %279 : vector<8x128xf32>
    %309 = arith.addf %265, %308 : vector<8x128xf32>
    %c5_235 = arith.constant 5 : index
    %c6_236 = arith.constant 6 : index
    %c0_237 = arith.constant 0 : index
    %c0_238 = arith.constant 0 : index
    %310 = vector.load %arg4[%c5_235, %c6_236, %c0_237, %c0_238] : memref<9x8x8x1xf32, #tpu.memory_space<vmem>>, vector<1x1x8x1xf32>
    %311 = vector.shape_cast %310 : vector<1x1x8x1xf32> to vector<8x1xf32>
    %312 = vector.broadcast %311 : vector<8x1xf32> to vector<8x128xf32>
    %313 = arith.mulf %312, %279 : vector<8x128xf32>
    %314 = arith.addf %270, %313 : vector<8x128xf32>
    %c5_239 = arith.constant 5 : index
    %c7_240 = arith.constant 7 : index
    %c0_241 = arith.constant 0 : index
    %c0_242 = arith.constant 0 : index
    %315 = vector.load %arg4[%c5_239, %c7_240, %c0_241, %c0_242] : memref<9x8x8x1xf32, #tpu.memory_space<vmem>>, vector<1x1x8x1xf32>
    %316 = vector.shape_cast %315 : vector<1x1x8x1xf32> to vector<8x1xf32>
    %317 = vector.broadcast %316 : vector<8x1xf32> to vector<8x128xf32>
    %318 = arith.mulf %317, %279 : vector<8x128xf32>
    %319 = arith.addf %275, %318 : vector<8x128xf32>
    %c113_i32_243 = arith.constant 113 : i32
    %320 = tpu.dynamic_rotate %51 by %c113_i32_243 dim 1 : vector<8x128xf32>, i32 -> vector<8x128xf32>
    %c6_244 = arith.constant 6 : index
    %c0_245 = arith.constant 0 : index
    %c0_246 = arith.constant 0 : index
    %321 = vector.load %arg3[%c6_244, %c0_245, %c0_246] : memref<9x8x128xf32, #tpu.memory_space<vmem>>, vector<1x8x128xf32>
    %322 = vector.shape_cast %321 : vector<1x8x128xf32> to vector<8x128xf32>
    %323 = arith.mulf %320, %322 : vector<8x128xf32>
    %c6_247 = arith.constant 6 : index
    %c0_248 = arith.constant 0 : index
    %c0_249 = arith.constant 0 : index
    %c0_250 = arith.constant 0 : index
    %324 = vector.load %arg4[%c6_247, %c0_248, %c0_249, %c0_250] : memref<9x8x8x1xf32, #tpu.memory_space<vmem>>, vector<1x1x8x1xf32>
    %325 = vector.shape_cast %324 : vector<1x1x8x1xf32> to vector<8x1xf32>
    %326 = vector.broadcast %325 : vector<8x1xf32> to vector<8x128xf32>
    %327 = arith.mulf %326, %323 : vector<8x128xf32>
    %328 = arith.addf %284, %327 : vector<8x128xf32>
    %c6_251 = arith.constant 6 : index
    %c1_252 = arith.constant 1 : index
    %c0_253 = arith.constant 0 : index
    %c0_254 = arith.constant 0 : index
    %329 = vector.load %arg4[%c6_251, %c1_252, %c0_253, %c0_254] : memref<9x8x8x1xf32, #tpu.memory_space<vmem>>, vector<1x1x8x1xf32>
    %330 = vector.shape_cast %329 : vector<1x1x8x1xf32> to vector<8x1xf32>
    %331 = vector.broadcast %330 : vector<8x1xf32> to vector<8x128xf32>
    %332 = arith.mulf %331, %323 : vector<8x128xf32>
    %333 = arith.addf %289, %332 : vector<8x128xf32>
    %c6_255 = arith.constant 6 : index
    %c2_256 = arith.constant 2 : index
    %c0_257 = arith.constant 0 : index
    %c0_258 = arith.constant 0 : index
    %334 = vector.load %arg4[%c6_255, %c2_256, %c0_257, %c0_258] : memref<9x8x8x1xf32, #tpu.memory_space<vmem>>, vector<1x1x8x1xf32>
    %335 = vector.shape_cast %334 : vector<1x1x8x1xf32> to vector<8x1xf32>
    %336 = vector.broadcast %335 : vector<8x1xf32> to vector<8x128xf32>
    %337 = arith.mulf %336, %323 : vector<8x128xf32>
    %338 = arith.addf %294, %337 : vector<8x128xf32>
    %c6_259 = arith.constant 6 : index
    %c3_260 = arith.constant 3 : index
    %c0_261 = arith.constant 0 : index
    %c0_262 = arith.constant 0 : index
    %339 = vector.load %arg4[%c6_259, %c3_260, %c0_261, %c0_262] : memref<9x8x8x1xf32, #tpu.memory_space<vmem>>, vector<1x1x8x1xf32>
    %340 = vector.shape_cast %339 : vector<1x1x8x1xf32> to vector<8x1xf32>
    %341 = vector.broadcast %340 : vector<8x1xf32> to vector<8x128xf32>
    %342 = arith.mulf %341, %323 : vector<8x128xf32>
    %343 = arith.addf %299, %342 : vector<8x128xf32>
    %c6_263 = arith.constant 6 : index
    %c4_264 = arith.constant 4 : index
    %c0_265 = arith.constant 0 : index
    %c0_266 = arith.constant 0 : index
    %344 = vector.load %arg4[%c6_263, %c4_264, %c0_265, %c0_266] : memref<9x8x8x1xf32, #tpu.memory_space<vmem>>, vector<1x1x8x1xf32>
    %345 = vector.shape_cast %344 : vector<1x1x8x1xf32> to vector<8x1xf32>
    %346 = vector.broadcast %345 : vector<8x1xf32> to vector<8x128xf32>
    %347 = arith.mulf %346, %323 : vector<8x128xf32>
    %348 = arith.addf %304, %347 : vector<8x128xf32>
    %c6_267 = arith.constant 6 : index
    %c5_268 = arith.constant 5 : index
    %c0_269 = arith.constant 0 : index
    %c0_270 = arith.constant 0 : index
    %349 = vector.load %arg4[%c6_267, %c5_268, %c0_269, %c0_270] : memref<9x8x8x1xf32, #tpu.memory_space<vmem>>, vector<1x1x8x1xf32>
    %350 = vector.shape_cast %349 : vector<1x1x8x1xf32> to vector<8x1xf32>
    %351 = vector.broadcast %350 : vector<8x1xf32> to vector<8x128xf32>
    %352 = arith.mulf %351, %323 : vector<8x128xf32>
    %353 = arith.addf %309, %352 : vector<8x128xf32>
    %c6_271 = arith.constant 6 : index
    %c6_272 = arith.constant 6 : index
    %c0_273 = arith.constant 0 : index
    %c0_274 = arith.constant 0 : index
    %354 = vector.load %arg4[%c6_271, %c6_272, %c0_273, %c0_274] : memref<9x8x8x1xf32, #tpu.memory_space<vmem>>, vector<1x1x8x1xf32>
    %355 = vector.shape_cast %354 : vector<1x1x8x1xf32> to vector<8x1xf32>
    %356 = vector.broadcast %355 : vector<8x1xf32> to vector<8x128xf32>
    %357 = arith.mulf %356, %323 : vector<8x128xf32>
    %358 = arith.addf %314, %357 : vector<8x128xf32>
    %c6_275 = arith.constant 6 : index
    %c7_276 = arith.constant 7 : index
    %c0_277 = arith.constant 0 : index
    %c0_278 = arith.constant 0 : index
    %359 = vector.load %arg4[%c6_275, %c7_276, %c0_277, %c0_278] : memref<9x8x8x1xf32, #tpu.memory_space<vmem>>, vector<1x1x8x1xf32>
    %360 = vector.shape_cast %359 : vector<1x1x8x1xf32> to vector<8x1xf32>
    %361 = vector.broadcast %360 : vector<8x1xf32> to vector<8x128xf32>
    %362 = arith.mulf %361, %323 : vector<8x128xf32>
    %363 = arith.addf %319, %362 : vector<8x128xf32>
    %c112_i32_279 = arith.constant 112 : i32
    %364 = tpu.dynamic_rotate %51 by %c112_i32_279 dim 1 : vector<8x128xf32>, i32 -> vector<8x128xf32>
    %c7_280 = arith.constant 7 : index
    %c0_281 = arith.constant 0 : index
    %c0_282 = arith.constant 0 : index
    %365 = vector.load %arg3[%c7_280, %c0_281, %c0_282] : memref<9x8x128xf32, #tpu.memory_space<vmem>>, vector<1x8x128xf32>
    %366 = vector.shape_cast %365 : vector<1x8x128xf32> to vector<8x128xf32>
    %367 = arith.mulf %364, %366 : vector<8x128xf32>
    %c7_283 = arith.constant 7 : index
    %c0_284 = arith.constant 0 : index
    %c0_285 = arith.constant 0 : index
    %c0_286 = arith.constant 0 : index
    %368 = vector.load %arg4[%c7_283, %c0_284, %c0_285, %c0_286] : memref<9x8x8x1xf32, #tpu.memory_space<vmem>>, vector<1x1x8x1xf32>
    %369 = vector.shape_cast %368 : vector<1x1x8x1xf32> to vector<8x1xf32>
    %370 = vector.broadcast %369 : vector<8x1xf32> to vector<8x128xf32>
    %371 = arith.mulf %370, %367 : vector<8x128xf32>
    %372 = arith.addf %328, %371 : vector<8x128xf32>
    %c7_287 = arith.constant 7 : index
    %c1_288 = arith.constant 1 : index
    %c0_289 = arith.constant 0 : index
    %c0_290 = arith.constant 0 : index
    %373 = vector.load %arg4[%c7_287, %c1_288, %c0_289, %c0_290] : memref<9x8x8x1xf32, #tpu.memory_space<vmem>>, vector<1x1x8x1xf32>
    %374 = vector.shape_cast %373 : vector<1x1x8x1xf32> to vector<8x1xf32>
    %375 = vector.broadcast %374 : vector<8x1xf32> to vector<8x128xf32>
    %376 = arith.mulf %375, %367 : vector<8x128xf32>
    %377 = arith.addf %333, %376 : vector<8x128xf32>
    %c7_291 = arith.constant 7 : index
    %c2_292 = arith.constant 2 : index
    %c0_293 = arith.constant 0 : index
    %c0_294 = arith.constant 0 : index
    %378 = vector.load %arg4[%c7_291, %c2_292, %c0_293, %c0_294] : memref<9x8x8x1xf32, #tpu.memory_space<vmem>>, vector<1x1x8x1xf32>
    %379 = vector.shape_cast %378 : vector<1x1x8x1xf32> to vector<8x1xf32>
    %380 = vector.broadcast %379 : vector<8x1xf32> to vector<8x128xf32>
    %381 = arith.mulf %380, %367 : vector<8x128xf32>
    %382 = arith.addf %338, %381 : vector<8x128xf32>
    %c7_295 = arith.constant 7 : index
    %c3_296 = arith.constant 3 : index
    %c0_297 = arith.constant 0 : index
    %c0_298 = arith.constant 0 : index
    %383 = vector.load %arg4[%c7_295, %c3_296, %c0_297, %c0_298] : memref<9x8x8x1xf32, #tpu.memory_space<vmem>>, vector<1x1x8x1xf32>
    %384 = vector.shape_cast %383 : vector<1x1x8x1xf32> to vector<8x1xf32>
    %385 = vector.broadcast %384 : vector<8x1xf32> to vector<8x128xf32>
    %386 = arith.mulf %385, %367 : vector<8x128xf32>
    %387 = arith.addf %343, %386 : vector<8x128xf32>
    %c7_299 = arith.constant 7 : index
    %c4_300 = arith.constant 4 : index
    %c0_301 = arith.constant 0 : index
    %c0_302 = arith.constant 0 : index
    %388 = vector.load %arg4[%c7_299, %c4_300, %c0_301, %c0_302] : memref<9x8x8x1xf32, #tpu.memory_space<vmem>>, vector<1x1x8x1xf32>
    %389 = vector.shape_cast %388 : vector<1x1x8x1xf32> to vector<8x1xf32>
    %390 = vector.broadcast %389 : vector<8x1xf32> to vector<8x128xf32>
    %391 = arith.mulf %390, %367 : vector<8x128xf32>
    %392 = arith.addf %348, %391 : vector<8x128xf32>
    %c7_303 = arith.constant 7 : index
    %c5_304 = arith.constant 5 : index
    %c0_305 = arith.constant 0 : index
    %c0_306 = arith.constant 0 : index
    %393 = vector.load %arg4[%c7_303, %c5_304, %c0_305, %c0_306] : memref<9x8x8x1xf32, #tpu.memory_space<vmem>>, vector<1x1x8x1xf32>
    %394 = vector.shape_cast %393 : vector<1x1x8x1xf32> to vector<8x1xf32>
    %395 = vector.broadcast %394 : vector<8x1xf32> to vector<8x128xf32>
    %396 = arith.mulf %395, %367 : vector<8x128xf32>
    %397 = arith.addf %353, %396 : vector<8x128xf32>
    %c7_307 = arith.constant 7 : index
    %c6_308 = arith.constant 6 : index
    %c0_309 = arith.constant 0 : index
    %c0_310 = arith.constant 0 : index
    %398 = vector.load %arg4[%c7_307, %c6_308, %c0_309, %c0_310] : memref<9x8x8x1xf32, #tpu.memory_space<vmem>>, vector<1x1x8x1xf32>
    %399 = vector.shape_cast %398 : vector<1x1x8x1xf32> to vector<8x1xf32>
    %400 = vector.broadcast %399 : vector<8x1xf32> to vector<8x128xf32>
    %401 = arith.mulf %400, %367 : vector<8x128xf32>
    %402 = arith.addf %358, %401 : vector<8x128xf32>
    %c7_311 = arith.constant 7 : index
    %c7_312 = arith.constant 7 : index
    %c0_313 = arith.constant 0 : index
    %c0_314 = arith.constant 0 : index
    %403 = vector.load %arg4[%c7_311, %c7_312, %c0_313, %c0_314] : memref<9x8x8x1xf32, #tpu.memory_space<vmem>>, vector<1x1x8x1xf32>
    %404 = vector.shape_cast %403 : vector<1x1x8x1xf32> to vector<8x1xf32>
    %405 = vector.broadcast %404 : vector<8x1xf32> to vector<8x128xf32>
    %406 = arith.mulf %405, %367 : vector<8x128xf32>
    %407 = arith.addf %363, %406 : vector<8x128xf32>
    %c111_i32_315 = arith.constant 111 : i32
    %408 = tpu.dynamic_rotate %51 by %c111_i32_315 dim 1 : vector<8x128xf32>, i32 -> vector<8x128xf32>
    %c8_316 = arith.constant 8 : index
    %c0_317 = arith.constant 0 : index
    %c0_318 = arith.constant 0 : index
    %409 = vector.load %arg3[%c8_316, %c0_317, %c0_318] : memref<9x8x128xf32, #tpu.memory_space<vmem>>, vector<1x8x128xf32>
    %410 = vector.shape_cast %409 : vector<1x8x128xf32> to vector<8x128xf32>
    %411 = arith.mulf %408, %410 : vector<8x128xf32>
    %c8_319 = arith.constant 8 : index
    %c0_320 = arith.constant 0 : index
    %c0_321 = arith.constant 0 : index
    %c0_322 = arith.constant 0 : index
    %412 = vector.load %arg4[%c8_319, %c0_320, %c0_321, %c0_322] : memref<9x8x8x1xf32, #tpu.memory_space<vmem>>, vector<1x1x8x1xf32>
    %413 = vector.shape_cast %412 : vector<1x1x8x1xf32> to vector<8x1xf32>
    %414 = vector.broadcast %413 : vector<8x1xf32> to vector<8x128xf32>
    %415 = arith.mulf %414, %411 : vector<8x128xf32>
    %416 = arith.addf %372, %415 : vector<8x128xf32>
    %c8_323 = arith.constant 8 : index
    %c1_324 = arith.constant 1 : index
    %c0_325 = arith.constant 0 : index
    %c0_326 = arith.constant 0 : index
    %417 = vector.load %arg4[%c8_323, %c1_324, %c0_325, %c0_326] : memref<9x8x8x1xf32, #tpu.memory_space<vmem>>, vector<1x1x8x1xf32>
    %418 = vector.shape_cast %417 : vector<1x1x8x1xf32> to vector<8x1xf32>
    %419 = vector.broadcast %418 : vector<8x1xf32> to vector<8x128xf32>
    %420 = arith.mulf %419, %411 : vector<8x128xf32>
    %421 = arith.addf %377, %420 : vector<8x128xf32>
    %c8_327 = arith.constant 8 : index
    %c2_328 = arith.constant 2 : index
    %c0_329 = arith.constant 0 : index
    %c0_330 = arith.constant 0 : index
    %422 = vector.load %arg4[%c8_327, %c2_328, %c0_329, %c0_330] : memref<9x8x8x1xf32, #tpu.memory_space<vmem>>, vector<1x1x8x1xf32>
    %423 = vector.shape_cast %422 : vector<1x1x8x1xf32> to vector<8x1xf32>
    %424 = vector.broadcast %423 : vector<8x1xf32> to vector<8x128xf32>
    %425 = arith.mulf %424, %411 : vector<8x128xf32>
    %426 = arith.addf %382, %425 : vector<8x128xf32>
    %c8_331 = arith.constant 8 : index
    %c3_332 = arith.constant 3 : index
    %c0_333 = arith.constant 0 : index
    %c0_334 = arith.constant 0 : index
    %427 = vector.load %arg4[%c8_331, %c3_332, %c0_333, %c0_334] : memref<9x8x8x1xf32, #tpu.memory_space<vmem>>, vector<1x1x8x1xf32>
    %428 = vector.shape_cast %427 : vector<1x1x8x1xf32> to vector<8x1xf32>
    %429 = vector.broadcast %428 : vector<8x1xf32> to vector<8x128xf32>
    %430 = arith.mulf %429, %411 : vector<8x128xf32>
    %431 = arith.addf %387, %430 : vector<8x128xf32>
    %c8_335 = arith.constant 8 : index
    %c4_336 = arith.constant 4 : index
    %c0_337 = arith.constant 0 : index
    %c0_338 = arith.constant 0 : index
    %432 = vector.load %arg4[%c8_335, %c4_336, %c0_337, %c0_338] : memref<9x8x8x1xf32, #tpu.memory_space<vmem>>, vector<1x1x8x1xf32>
    %433 = vector.shape_cast %432 : vector<1x1x8x1xf32> to vector<8x1xf32>
    %434 = vector.broadcast %433 : vector<8x1xf32> to vector<8x128xf32>
    %435 = arith.mulf %434, %411 : vector<8x128xf32>
    %436 = arith.addf %392, %435 : vector<8x128xf32>
    %c8_339 = arith.constant 8 : index
    %c5_340 = arith.constant 5 : index
    %c0_341 = arith.constant 0 : index
    %c0_342 = arith.constant 0 : index
    %437 = vector.load %arg4[%c8_339, %c5_340, %c0_341, %c0_342] : memref<9x8x8x1xf32, #tpu.memory_space<vmem>>, vector<1x1x8x1xf32>
    %438 = vector.shape_cast %437 : vector<1x1x8x1xf32> to vector<8x1xf32>
    %439 = vector.broadcast %438 : vector<8x1xf32> to vector<8x128xf32>
    %440 = arith.mulf %439, %411 : vector<8x128xf32>
    %441 = arith.addf %397, %440 : vector<8x128xf32>
    %c8_343 = arith.constant 8 : index
    %c6_344 = arith.constant 6 : index
    %c0_345 = arith.constant 0 : index
    %c0_346 = arith.constant 0 : index
    %442 = vector.load %arg4[%c8_343, %c6_344, %c0_345, %c0_346] : memref<9x8x8x1xf32, #tpu.memory_space<vmem>>, vector<1x1x8x1xf32>
    %443 = vector.shape_cast %442 : vector<1x1x8x1xf32> to vector<8x1xf32>
    %444 = vector.broadcast %443 : vector<8x1xf32> to vector<8x128xf32>
    %445 = arith.mulf %444, %411 : vector<8x128xf32>
    %446 = arith.addf %402, %445 : vector<8x128xf32>
    %c8_347 = arith.constant 8 : index
    %c7_348 = arith.constant 7 : index
    %c0_349 = arith.constant 0 : index
    %c0_350 = arith.constant 0 : index
    %447 = vector.load %arg4[%c8_347, %c7_348, %c0_349, %c0_350] : memref<9x8x8x1xf32, #tpu.memory_space<vmem>>, vector<1x1x8x1xf32>
    %448 = vector.shape_cast %447 : vector<1x1x8x1xf32> to vector<8x1xf32>
    %449 = vector.broadcast %448 : vector<8x1xf32> to vector<8x128xf32>
    %450 = arith.mulf %449, %411 : vector<8x128xf32>
    %451 = arith.addf %407, %450 : vector<8x128xf32>
    %452 = vector.extract_strided_slice %416 {offsets = [0, 0], sizes = [2, 128], strides = [1, 1]} : vector<8x128xf32> to vector<2x128xf32>
    %453 = vector.extract_strided_slice %416 {offsets = [2, 0], sizes = [2, 128], strides = [1, 1]} : vector<8x128xf32> to vector<2x128xf32>
    %454 = arith.addf %452, %453 : vector<2x128xf32>
    %455 = vector.extract_strided_slice %416 {offsets = [4, 0], sizes = [2, 128], strides = [1, 1]} : vector<8x128xf32> to vector<2x128xf32>
    %456 = arith.addf %454, %455 : vector<2x128xf32>
    %457 = vector.extract_strided_slice %416 {offsets = [6, 0], sizes = [2, 128], strides = [1, 1]} : vector<8x128xf32> to vector<2x128xf32>
    %458 = arith.addf %456, %457 : vector<2x128xf32>
    %c0_351 = arith.constant 0 : index
    %c0_352 = arith.constant 0 : index
    %c0_353 = arith.constant 0 : index
    %459 = vector.load %arg5[%c0_351, %c0_352, %c0_353] : memref<8x2x128xf32, #tpu.memory_space<vmem>>, vector<1x2x128xf32>
    %460 = vector.shape_cast %459 : vector<1x2x128xf32> to vector<2x128xf32>
    %461 = arith.addf %458, %460 : vector<2x128xf32>
    %cst_354 = arith.constant 0.000000e+00 : f32
    %462 = vector.broadcast %cst_354 : f32 to vector<2x128xf32>
    %463 = arith.maximumf %461, %462 : vector<2x128xf32>
    %464 = vector.extract_strided_slice %421 {offsets = [0, 0], sizes = [2, 128], strides = [1, 1]} : vector<8x128xf32> to vector<2x128xf32>
    %465 = vector.extract_strided_slice %421 {offsets = [2, 0], sizes = [2, 128], strides = [1, 1]} : vector<8x128xf32> to vector<2x128xf32>
    %466 = arith.addf %464, %465 : vector<2x128xf32>
    %467 = vector.extract_strided_slice %421 {offsets = [4, 0], sizes = [2, 128], strides = [1, 1]} : vector<8x128xf32> to vector<2x128xf32>
    %468 = arith.addf %466, %467 : vector<2x128xf32>
    %469 = vector.extract_strided_slice %421 {offsets = [6, 0], sizes = [2, 128], strides = [1, 1]} : vector<8x128xf32> to vector<2x128xf32>
    %470 = arith.addf %468, %469 : vector<2x128xf32>
    %c1_355 = arith.constant 1 : index
    %c0_356 = arith.constant 0 : index
    %c0_357 = arith.constant 0 : index
    %471 = vector.load %arg5[%c1_355, %c0_356, %c0_357] : memref<8x2x128xf32, #tpu.memory_space<vmem>>, vector<1x2x128xf32>
    %472 = vector.shape_cast %471 : vector<1x2x128xf32> to vector<2x128xf32>
    %473 = arith.addf %470, %472 : vector<2x128xf32>
    %cst_358 = arith.constant 0.000000e+00 : f32
    %474 = vector.broadcast %cst_358 : f32 to vector<2x128xf32>
    %475 = arith.maximumf %473, %474 : vector<2x128xf32>
    %476 = vector.extract_strided_slice %426 {offsets = [0, 0], sizes = [2, 128], strides = [1, 1]} : vector<8x128xf32> to vector<2x128xf32>
    %477 = vector.extract_strided_slice %426 {offsets = [2, 0], sizes = [2, 128], strides = [1, 1]} : vector<8x128xf32> to vector<2x128xf32>
    %478 = arith.addf %476, %477 : vector<2x128xf32>
    %479 = vector.extract_strided_slice %426 {offsets = [4, 0], sizes = [2, 128], strides = [1, 1]} : vector<8x128xf32> to vector<2x128xf32>
    %480 = arith.addf %478, %479 : vector<2x128xf32>
    %481 = vector.extract_strided_slice %426 {offsets = [6, 0], sizes = [2, 128], strides = [1, 1]} : vector<8x128xf32> to vector<2x128xf32>
    %482 = arith.addf %480, %481 : vector<2x128xf32>
    %c2_359 = arith.constant 2 : index
    %c0_360 = arith.constant 0 : index
    %c0_361 = arith.constant 0 : index
    %483 = vector.load %arg5[%c2_359, %c0_360, %c0_361] : memref<8x2x128xf32, #tpu.memory_space<vmem>>, vector<1x2x128xf32>
    %484 = vector.shape_cast %483 : vector<1x2x128xf32> to vector<2x128xf32>
    %485 = arith.addf %482, %484 : vector<2x128xf32>
    %cst_362 = arith.constant 0.000000e+00 : f32
    %486 = vector.broadcast %cst_362 : f32 to vector<2x128xf32>
    %487 = arith.maximumf %485, %486 : vector<2x128xf32>
    %488 = vector.extract_strided_slice %431 {offsets = [0, 0], sizes = [2, 128], strides = [1, 1]} : vector<8x128xf32> to vector<2x128xf32>
    %489 = vector.extract_strided_slice %431 {offsets = [2, 0], sizes = [2, 128], strides = [1, 1]} : vector<8x128xf32> to vector<2x128xf32>
    %490 = arith.addf %488, %489 : vector<2x128xf32>
    %491 = vector.extract_strided_slice %431 {offsets = [4, 0], sizes = [2, 128], strides = [1, 1]} : vector<8x128xf32> to vector<2x128xf32>
    %492 = arith.addf %490, %491 : vector<2x128xf32>
    %493 = vector.extract_strided_slice %431 {offsets = [6, 0], sizes = [2, 128], strides = [1, 1]} : vector<8x128xf32> to vector<2x128xf32>
    %494 = arith.addf %492, %493 : vector<2x128xf32>
    %c3_363 = arith.constant 3 : index
    %c0_364 = arith.constant 0 : index
    %c0_365 = arith.constant 0 : index
    %495 = vector.load %arg5[%c3_363, %c0_364, %c0_365] : memref<8x2x128xf32, #tpu.memory_space<vmem>>, vector<1x2x128xf32>
    %496 = vector.shape_cast %495 : vector<1x2x128xf32> to vector<2x128xf32>
    %497 = arith.addf %494, %496 : vector<2x128xf32>
    %cst_366 = arith.constant 0.000000e+00 : f32
    %498 = vector.broadcast %cst_366 : f32 to vector<2x128xf32>
    %499 = arith.maximumf %497, %498 : vector<2x128xf32>
    %500 = vector.extract_strided_slice %436 {offsets = [0, 0], sizes = [2, 128], strides = [1, 1]} : vector<8x128xf32> to vector<2x128xf32>
    %501 = vector.extract_strided_slice %436 {offsets = [2, 0], sizes = [2, 128], strides = [1, 1]} : vector<8x128xf32> to vector<2x128xf32>
    %502 = arith.addf %500, %501 : vector<2x128xf32>
    %503 = vector.extract_strided_slice %436 {offsets = [4, 0], sizes = [2, 128], strides = [1, 1]} : vector<8x128xf32> to vector<2x128xf32>
    %504 = arith.addf %502, %503 : vector<2x128xf32>
    %505 = vector.extract_strided_slice %436 {offsets = [6, 0], sizes = [2, 128], strides = [1, 1]} : vector<8x128xf32> to vector<2x128xf32>
    %506 = arith.addf %504, %505 : vector<2x128xf32>
    %c4_367 = arith.constant 4 : index
    %c0_368 = arith.constant 0 : index
    %c0_369 = arith.constant 0 : index
    %507 = vector.load %arg5[%c4_367, %c0_368, %c0_369] : memref<8x2x128xf32, #tpu.memory_space<vmem>>, vector<1x2x128xf32>
    %508 = vector.shape_cast %507 : vector<1x2x128xf32> to vector<2x128xf32>
    %509 = arith.addf %506, %508 : vector<2x128xf32>
    %cst_370 = arith.constant 0.000000e+00 : f32
    %510 = vector.broadcast %cst_370 : f32 to vector<2x128xf32>
    %511 = arith.maximumf %509, %510 : vector<2x128xf32>
    %512 = vector.extract_strided_slice %441 {offsets = [0, 0], sizes = [2, 128], strides = [1, 1]} : vector<8x128xf32> to vector<2x128xf32>
    %513 = vector.extract_strided_slice %441 {offsets = [2, 0], sizes = [2, 128], strides = [1, 1]} : vector<8x128xf32> to vector<2x128xf32>
    %514 = arith.addf %512, %513 : vector<2x128xf32>
    %515 = vector.extract_strided_slice %441 {offsets = [4, 0], sizes = [2, 128], strides = [1, 1]} : vector<8x128xf32> to vector<2x128xf32>
    %516 = arith.addf %514, %515 : vector<2x128xf32>
    %517 = vector.extract_strided_slice %441 {offsets = [6, 0], sizes = [2, 128], strides = [1, 1]} : vector<8x128xf32> to vector<2x128xf32>
    %518 = arith.addf %516, %517 : vector<2x128xf32>
    %c5_371 = arith.constant 5 : index
    %c0_372 = arith.constant 0 : index
    %c0_373 = arith.constant 0 : index
    %519 = vector.load %arg5[%c5_371, %c0_372, %c0_373] : memref<8x2x128xf32, #tpu.memory_space<vmem>>, vector<1x2x128xf32>
    %520 = vector.shape_cast %519 : vector<1x2x128xf32> to vector<2x128xf32>
    %521 = arith.addf %518, %520 : vector<2x128xf32>
    %cst_374 = arith.constant 0.000000e+00 : f32
    %522 = vector.broadcast %cst_374 : f32 to vector<2x128xf32>
    %523 = arith.maximumf %521, %522 : vector<2x128xf32>
    %524 = vector.extract_strided_slice %446 {offsets = [0, 0], sizes = [2, 128], strides = [1, 1]} : vector<8x128xf32> to vector<2x128xf32>
    %525 = vector.extract_strided_slice %446 {offsets = [2, 0], sizes = [2, 128], strides = [1, 1]} : vector<8x128xf32> to vector<2x128xf32>
    %526 = arith.addf %524, %525 : vector<2x128xf32>
    %527 = vector.extract_strided_slice %446 {offsets = [4, 0], sizes = [2, 128], strides = [1, 1]} : vector<8x128xf32> to vector<2x128xf32>
    %528 = arith.addf %526, %527 : vector<2x128xf32>
    %529 = vector.extract_strided_slice %446 {offsets = [6, 0], sizes = [2, 128], strides = [1, 1]} : vector<8x128xf32> to vector<2x128xf32>
    %530 = arith.addf %528, %529 : vector<2x128xf32>
    %c6_375 = arith.constant 6 : index
    %c0_376 = arith.constant 0 : index
    %c0_377 = arith.constant 0 : index
    %531 = vector.load %arg5[%c6_375, %c0_376, %c0_377] : memref<8x2x128xf32, #tpu.memory_space<vmem>>, vector<1x2x128xf32>
    %532 = vector.shape_cast %531 : vector<1x2x128xf32> to vector<2x128xf32>
    %533 = arith.addf %530, %532 : vector<2x128xf32>
    %cst_378 = arith.constant 0.000000e+00 : f32
    %534 = vector.broadcast %cst_378 : f32 to vector<2x128xf32>
    %535 = arith.maximumf %533, %534 : vector<2x128xf32>
    %536 = vector.extract_strided_slice %451 {offsets = [0, 0], sizes = [2, 128], strides = [1, 1]} : vector<8x128xf32> to vector<2x128xf32>
    %537 = vector.extract_strided_slice %451 {offsets = [2, 0], sizes = [2, 128], strides = [1, 1]} : vector<8x128xf32> to vector<2x128xf32>
    %538 = arith.addf %536, %537 : vector<2x128xf32>
    %539 = vector.extract_strided_slice %451 {offsets = [4, 0], sizes = [2, 128], strides = [1, 1]} : vector<8x128xf32> to vector<2x128xf32>
    %540 = arith.addf %538, %539 : vector<2x128xf32>
    %541 = vector.extract_strided_slice %451 {offsets = [6, 0], sizes = [2, 128], strides = [1, 1]} : vector<8x128xf32> to vector<2x128xf32>
    %542 = arith.addf %540, %541 : vector<2x128xf32>
    %c7_379 = arith.constant 7 : index
    %c0_380 = arith.constant 0 : index
    %c0_381 = arith.constant 0 : index
    %543 = vector.load %arg5[%c7_379, %c0_380, %c0_381] : memref<8x2x128xf32, #tpu.memory_space<vmem>>, vector<1x2x128xf32>
    %544 = vector.shape_cast %543 : vector<1x2x128xf32> to vector<2x128xf32>
    %545 = arith.addf %542, %544 : vector<2x128xf32>
    %cst_382 = arith.constant 0.000000e+00 : f32
    %546 = vector.broadcast %cst_382 : f32 to vector<2x128xf32>
    %547 = arith.maximumf %545, %546 : vector<2x128xf32>
    %548 = tpu.concatenate %463, %475, %487, %499, %511, %523, %535, %547 in 1 : vector<2x128xf32>, vector<2x128xf32>, vector<2x128xf32>, vector<2x128xf32>, vector<2x128xf32>, vector<2x128xf32>, vector<2x128xf32>, vector<2x128xf32> -> vector<2x1024xf32>
    %c0_i32_383 = arith.constant 0 : i32
    %549 = tpu.memref_slice %arg11[%c0_i32_383] : memref<1x!tpu.dma_semaphore, #tpu.memory_space<semaphore_mem>> -> memref<1x!tpu.dma_semaphore, #tpu.memory_space<semaphore_mem>>
    %550 = tpu.memref_squeeze %549 : memref<1x!tpu.dma_semaphore, #tpu.memory_space<semaphore_mem>> -> memref<!tpu.dma_semaphore, #tpu.memory_space<semaphore_mem>>
    tpu.wait_dma2 semaphore(%550 : memref<!tpu.dma_semaphore, #tpu.memory_space<semaphore_mem>>) src(%arg6 : memref<1024x32xf32, #tpu.memory_space<any>>) dst(%arg10 : memref<1024x32xf32, #tpu.memory_space<vmem>>)
    %c0_384 = arith.constant 0 : index
    %c0_385 = arith.constant 0 : index
    %551 = vector.load %arg10[%c0_384, %c0_385] : memref<1024x32xf32, #tpu.memory_space<vmem>>, vector<1024x32xf32>
    %cst_386 = arith.constant dense<0.000000e+00> : vector<2x32xf32>
    %552 = tpu.matmul %548, %551, %cst_386 {dimension_numbers = #tpu.dot_dimension_numbers<[1], [0], [0], [1], [0, 0, 1, 1], [], []>, precision = #tpu.contract_precision<fp32>} : vector<2x1024xf32>, vector<1024x32xf32>, vector<2x32xf32> -> vector<2x32xf32>
    %c0_387 = arith.constant 0 : index
    %c0_388 = arith.constant 0 : index
    %553 = vector.load %arg7[%c0_387, %c0_388] : memref<1x32xf32, #tpu.memory_space<vmem>>, vector<1x32xf32>
    %554 = vector.broadcast %553 : vector<1x32xf32> to vector<2x32xf32>
    %555 = arith.addf %552, %554 : vector<2x32xf32>
    %cst_389 = arith.constant 0.000000e+00 : f32
    %556 = vector.broadcast %cst_389 : f32 to vector<2x32xf32>
    %557 = arith.maximumf %555, %556 : vector<2x32xf32>
    %c0_390 = arith.constant 0 : index
    %c0_391 = arith.constant 0 : index
    %558 = vector.load %arg8[%c0_390, %c0_391] : memref<1x32xf32, #tpu.memory_space<vmem>>, vector<1x32xf32>
    %559 = vector.broadcast %558 : vector<1x32xf32> to vector<2x32xf32>
    %560 = arith.mulf %557, %559 : vector<2x32xf32>
    %cst_392 = arith.constant dense<0.000000e+00> : vector<2xf32>
    %561 = vector.multi_reduction <add>, %560, %cst_392 [1] : vector<2x32xf32> to vector<2xf32>
    %562 = vector.shape_cast %561 : vector<2xf32> to vector<2x1xf32>
    %cst_393 = arith.constant 0.000000e+00 : f32
    %563 = vector.broadcast %cst_393 : f32 to vector<2x1xf32>
    %564 = arith.subf %563, %562 : vector<2x1xf32>
    %565 = math.exp %564 : vector<2x1xf32>
    %cst_394 = arith.constant 1.000000e+00 : f32
    %566 = vector.broadcast %cst_394 : f32 to vector<2x1xf32>
    %567 = arith.addf %566, %565 : vector<2x1xf32>
    %cst_395 = arith.constant 1.000000e+00 : f32
    %568 = vector.broadcast %cst_395 : f32 to vector<2x1xf32>
    %569 = arith.divf %568, %567 : vector<2x1xf32>
    %c0_396 = arith.constant 0 : index
    %c0_397 = arith.constant 0 : index
    %570 = vector.load %arg9[%c0_396, %c0_397] : memref<2x1xf32, #tpu.memory_space<vmem>>, vector<2x1xf32>
    tpu.vector_store %arg9[%c0_396, %c0_397], %569 {strides = array<i32>} : memref<2x1xf32, #tpu.memory_space<vmem>>, vector<2x1xf32>,
    return
  }
}

</mosaic_0001>

<llo_original>
// kernel: dpcnn_forward.1
$region0: #{dpcnn_forward.1}
  #allocation0 [shape = 'u32[]', space=smem, size = 0x4, offset = 0x4, fixed_abs, tag = 'smem constant byte address 0x4 - core index']
  #allocation1 [shape = 'u32[144,128]{1,0:T(1,128)}', space=vmem, size = 0x12000, scoped, tag = 'internal scratch']
  #allocation2 [shape = 'f32[1024,32]{1,0:T(8,128)}', space=vmem, size = 0x80000, scoped, tag = 'scratch operand']
  #allocation3 [shape = 's32[1]{0}', space=sflag, size = 0x4, scoped, tag = 'scratch operand']
  #allocation4 [shape = 's32[]', space=sflag, size = 0x4, offset = 0, fixed_abs, tag = 'sflag constant byte address 0x0 - dummy sync flag']
  %s0 = inlined_call_operand.vmem [shape: f32[8,128], index: 0, kind: input, shape index: {}]
  %s1 = inlined_call_operand.vmem [shape: f32[9,8,128], index: 1, kind: input, shape index: {}]
  %s2 = inlined_call_operand.vmem [shape: f32[8,128], index: 2, kind: input, shape index: {}]
  %s3 = inlined_call_operand.vmem [shape: f32[9,8,128], index: 3, kind: input, shape index: {}]
  %s4 = inlined_call_operand.vmem [shape: f32[9,8,8,1], index: 4, kind: input, shape index: {}]
  %s5 = inlined_call_operand.vmem [shape: f32[8,2,128], index: 5, kind: input, shape index: {}]
  %s6 = inlined_call_operand.vmem [shape: f32[1024,32], index: 6, kind: input, shape index: {}]
  %s7 = inlined_call_operand.vmem [shape: f32[1,32], index: 7, kind: input, shape index: {}]
  %s8 = inlined_call_operand.vmem [shape: f32[1,32], index: 8, kind: input, shape index: {}]
  %s9 = inlined_call_operand.vmem [shape: f32[2,1], index: 9, kind: output, shape index: {}]
  %s10 = sld [smem:[#allocation0]]
  $region76: #{dpcnn_forward.1} parent=0
    _
  %s12 = ssub.s32 1, %s10
  %s13 = scalar_select 0, %s12, %s10
  // Predicated region
  $region2: #{dpcnn_forward.1} parent=0 // pred_check
    _
  $region3: #{dpcnn_forward.1} parent=0 // pred_check_branch
    %15 = sbr.rel (0) target = $region5
  $region4: #{dpcnn_forward.1} parent=0 // pred_region
    _
  $region5: #{dpcnn_forward.1} parent=0 // pred_fallthru
    _
  // Predicated region
  $region6: #{dpcnn_forward.1} parent=0 // pred_check
    _
  $region7: #{dpcnn_forward.1} parent=0 // pred_check_branch
    %17 = sbr.rel (0) target = $region9
  $region8: #{dpcnn_forward.1} parent=0 // pred_region
    _
  $region9: #{dpcnn_forward.1} parent=0 // pred_fallthru
    _
  // Predicated region
  $region10: #{dpcnn_forward.1} parent=0 // pred_check
    _
  $region11: #{dpcnn_forward.1} parent=0 // pred_check_branch
    %19 = sbr.rel (0) target = $region13
  $region12: #{dpcnn_forward.1} parent=0 // pred_region
    _
  $region13: #{dpcnn_forward.1} parent=0 // pred_fallthru
    _
  // Predicated region
  $region14: #{dpcnn_forward.1} parent=0 // pred_check
    _
  $region15: #{dpcnn_forward.1} parent=0 // pred_check_branch
    %21 = sbr.rel (0) target = $region17
  $region16: #{dpcnn_forward.1} parent=0 // pred_region
    _
  $region17: #{dpcnn_forward.1} parent=0 // pred_fallthru
    _
  // Predicated region
  $region18: #{dpcnn_forward.1} parent=0 // pred_check
    _
  $region19: #{dpcnn_forward.1} parent=0 // pred_check_branch
    %23 = sbr.rel (0) target = $region21
  $region20: #{dpcnn_forward.1} parent=0 // pred_region
    _
  $region21: #{dpcnn_forward.1} parent=0 // pred_fallthru
    _
  // Predicated region
  $region22: #{dpcnn_forward.1} parent=0 // pred_check
    _
  $region23: #{dpcnn_forward.1} parent=0 // pred_check_branch
    %25 = sbr.rel (0) target = $region25
  $region24: #{dpcnn_forward.1} parent=0 // pred_region
    _
  $region25: #{dpcnn_forward.1} parent=0 // pred_fallthru
    _
  // Predicated region
  $region26: #{dpcnn_forward.1} parent=0 // pred_check
    _
  $region27: #{dpcnn_forward.1} parent=0 // pred_check_branch
    %27 = sbr.rel (0) target = $region29
  $region28: #{dpcnn_forward.1} parent=0 // pred_region
    _
  $region29: #{dpcnn_forward.1} parent=0 // pred_fallthru
    _
  // Predicated region
  $region30: #{dpcnn_forward.1} parent=0 // pred_check
    _
  $region31: #{dpcnn_forward.1} parent=0 // pred_check_branch
    %29 = sbr.rel (0) target = $region33
  $region32: #{dpcnn_forward.1} parent=0 // pred_region
    _
  $region33: #{dpcnn_forward.1} parent=0 // pred_fallthru
    _
  %p31 = scmp.lt.u32.totalorder 1024, 8
  %p32 = pneg %p31
  // Predicated region
  $region34: #{dpcnn_forward.1} parent=0 // pred_check
    _
  $region35: #{dpcnn_forward.1} parent=0 // pred_check_branch
    %34 = sbr.rel (%p31) target = $region37
  $region36: #{dpcnn_forward.1} parent=0 // pred_region
    %s49 = sand.u32 1024, 7
    %p50 = scmp.eq.s32.totalorder %s49, 0
    // Predicated region
    $region49: #{dpcnn_forward.1} parent=36 // pred_check
      %p51 = pneg %p50
    $region50: #{dpcnn_forward.1} parent=36 // pred_check_branch
      %53 = sbr.rel (%p51) target = $region52
    $region51: #{dpcnn_forward.1} parent=36 // pred_region
      loop: start=0, step=1, limit=1
      $region53: #{dpcnn_forward.1} parent=51 // loop_pre_header
        _
      $region54: #{dpcnn_forward.1} parent=51 // loop_header
        %s55 = sphi 0, %s59
        %p56 = scmp.ge.s32.totalorder %s55, 1
        %s60 = sphi %s6, %s6
        %s61 = sphi [#allocation2], [#allocation2]
      $region55: #{dpcnn_forward.1} parent=51 // loop_header_branch
        %58 = sbr.rel (%p56) target = $region59
      $region56: #{dpcnn_forward.1} parent=51 // loop_body
        %v62 = vld [vmem:[%s60] sm:$0xff]
        %63 = vst [vmem:[%s61] sm:$0xff] %v62
        %v64 = vld [vmem:[%s60 + $0x8] sm:$0xff]
        %65 = vst [vmem:[%s61 + $0x8] sm:$0xff] %v64
        %v66 = vld [vmem:[%s60 + $0x10] sm:$0xff]
        %67 = vst [vmem:[%s61 + $0x10] sm:$0xff] %v66
        %v68 = vld [vmem:[%s60 + $0x18] sm:$0xff]
        %69 = vst [vmem:[%s61 + $0x18] sm:$0xff] %v68
        %v70 = vld [vmem:[%s60 + $0x20] sm:$0xff]
        %71 = vst [vmem:[%s61 + $0x20] sm:$0xff] %v70
        %v72 = vld [vmem:[%s60 + $0x28] sm:$0xff]
        %73 = vst [vmem:[%s61 + $0x28] sm:$0xff] %v72
        %v74 = vld [vmem:[%s60 + $0x30] sm:$0xff]
        %75 = vst [vmem:[%s61 + $0x30] sm:$0xff] %v74
        %v76 = vld [vmem:[%s60 + $0x38] sm:$0xff]
        %77 = vst [vmem:[%s61 + $0x38] sm:$0xff] %v76
        %v78 = vld [vmem:[%s60 + $0x40] sm:$0xff]
        %79 = vst [vmem:[%s61 + $0x40] sm:$0xff] %v78
        %v80 = vld [vmem:[%s60 + $0x48] sm:$0xff]
        %81 = vst [vmem:[%s61 + $0x48] sm:$0xff] %v80
        %v82 = vld [vmem:[%s60 + $0x50] sm:$0xff]
        %83 = vst [vmem:[%s61 + $0x50] sm:$0xff] %v82
        %v84 = vld [vmem:[%s60 + $0x58] sm:$0xff]
        %85 = vst [vmem:[%s61 + $0x58] sm:$0xff] %v84
        %v86 = vld [vmem:[%s60 + $0x60] sm:$0xff]
        %87 = vst [vmem:[%s61 + $0x60] sm:$0xff] %v86
        %v88 = vld [vmem:[%s60 + $0x68] sm:$0xff]
        %89 = vst [vmem:[%s61 + $0x68] sm:$0xff] %v88
        %v90 = vld [vmem:[%s60 + $0x70] sm:$0xff]
        %91 = vst [vmem:[%s61 + $0x70] sm:$0xff] %v90
        %v92 = vld [vmem:[%s60 + $0x78] sm:$0xff]
        %93 = vst [vmem:[%s61 + $0x78] sm:$0xff] %v92
        %v94 = vld [vmem:[%s60 + $0x80] sm:$0xff]
        %95 = vst [vmem:[%s61 + $0x80] sm:$0xff] %v94
        %v96 = vld [vmem:[%s60 + $0x88] sm:$0xff]
        %97 = vst [vmem:[%s61 + $0x88] sm:$0xff] %v96
        %v98 = vld [vmem:[%s60 + $0x90] sm:$0xff]
        %99 = vst [vmem:[%s61 + $0x90] sm:$0xff] %v98
        %v100 = vld [vmem:[%s60 + $0x98] sm:$0xff]
        %101 = vst [vmem:[%s61 + $0x98] sm:$0xff] %v100
        %v102 = vld [vmem:[%s60 + $0xa0] sm:$0xff]
        %103 = vst [vmem:[%s61 + $0xa0] sm:$0xff] %v102
        %v104 = vld [vmem:[%s60 + $0xa8] sm:$0xff]
        %105 = vst [vmem:[%s61 + $0xa8] sm:$0xff] %v104
        %v106 = vld [vmem:[%s60 + $0xb0] sm:$0xff]
        %107 = vst [vmem:[%s61 + $0xb0] sm:$0xff] %v106
        %v108 = vld [vmem:[%s60 + $0xb8] sm:$0xff]
        %109 = vst [vmem:[%s61 + $0xb8] sm:$0xff] %v108
        %v110 = vld [vmem:[%s60 + $0xc0] sm:$0xff]
        %111 = vst [vmem:[%s61 + $0xc0] sm:$0xff] %v110
        %v112 = vld [vmem:[%s60 + $0xc8] sm:$0xff]
        %113 = vst [vmem:[%s61 + $0xc8] sm:$0xff] %v112
        %v114 = vld [vmem:[%s60 + $0xd0] sm:$0xff]
        %115 = vst [vmem:[%s61 + $0xd0] sm:$0xff] %v114
        %v116 = vld [vmem:[%s60 + $0xd8] sm:$0xff]
        %117 = vst [vmem:[%s61 + $0xd8] sm:$0xff] %v116
        %v118 = vld [vmem:[%s60 + $0xe0] sm:$0xff]
        %119 = vst [vmem:[%s61 + $0xe0] sm:$0xff] %v118
        %v120 = vld [vmem:[%s60 + $0xe8] sm:$0xff]
        %121 = vst [vmem:[%s61 + $0xe8] sm:$0xff] %v120
        %v122 = vld [vmem:[%s60 + $0xf0] sm:$0xff]
        %123 = vst [vmem:[%s61 + $0xf0] sm:$0xff] %v122
        %v124 = vld [vmem:[%s60 + $0xf8] sm:$0xff]
        %125 = vst [vmem:[%s61 + $0xf8] sm:$0xff] %v124
        %v126 = vld [vmem:[%s60 + $0x100] sm:$0xff]
        %127 = vst [vmem:[%s61 + $0x100] sm:$0xff] %v126
        %v128 = vld [vmem:[%s60 + $0x108] sm:$0xff]
        %129 = vst [vmem:[%s61 + $0x108] sm:$0xff] %v128
        %v130 = vld [vmem:[%s60 + $0x110] sm:$0xff]
        %131 = vst [vmem:[%s61 + $0x110] sm:$0xff] %v130
        %v132 = vld [vmem:[%s60 + $0x118] sm:$0xff]
        %133 = vst [vmem:[%s61 + $0x118] sm:$0xff] %v132
        %v134 = vld [vmem:[%s60 + $0x120] sm:$0xff]
        %135 = vst [vmem:[%s61 + $0x120] sm:$0xff] %v134
        %v136 = vld [vmem:[%s60 + $0x128] sm:$0xff]
        %137 = vst [vmem:[%s61 + $0x128] sm:$0xff] %v136
        %v138 = vld [vmem:[%s60 + $0x130] sm:$0xff]
        %139 = vst [vmem:[%s61 + $0x130] sm:$0xff] %v138
        %v140 = vld [vmem:[%s60 + $0x138] sm:$0xff]
        %141 = vst [vmem:[%s61 + $0x138] sm:$0xff] %v140
        %v142 = vld [vmem:[%s60 + $0x140] sm:$0xff]
        %143 = vst [vmem:[%s61 + $0x140] sm:$0xff] %v142
        %v144 = vld [vmem:[%s60 + $0x148] sm:$0xff]
        %145 = vst [vmem:[%s61 + $0x148] sm:$0xff] %v144
        %v146 = vld [vmem:[%s60 + $0x150] sm:$0xff]
        %147 = vst [vmem:[%s61 + $0x150] sm:$0xff] %v146
        %v148 = vld [vmem:[%s60 + $0x158] sm:$0xff]
        %149 = vst [vmem:[%s61 + $0x158] sm:$0xff] %v148
        %v150 = vld [vmem:[%s60 + $0x160] sm:$0xff]
        %151 = vst [vmem:[%s61 + $0x160] sm:$0xff] %v150
        %v152 = vld [vmem:[%s60 + $0x168] sm:$0xff]
        %153 = vst [vmem:[%s61 + $0x168] sm:$0xff] %v152
        %v154 = vld [vmem:[%s60 + $0x170] sm:$0xff]
        %155 = vst [vmem:[%s61 + $0x170] sm:$0xff] %v154
        %v156 = vld [vmem:[%s60 + $0x178] sm:$0xff]
        %157 = vst [vmem:[%s61 + $0x178] sm:$0xff] %v156
        %v158 = vld [vmem:[%s60 + $0x180] sm:$0xff]
        %159 = vst [vmem:[%s61 + $0x180] sm:$0xff] %v158
        %v160 = vld [vmem:[%s60 + $0x188] sm:$0xff]
        %161 = vst [vmem:[%s61 + $0x188] sm:$0xff] %v160
        %v162 = vld [vmem:[%s60 + $0x190] sm:$0xff]
        %163 = vst [vmem:[%s61 + $0x190] sm:$0xff] %v162
        %v164 = vld [vmem:[%s60 + $0x198] sm:$0xff]
        %165 = vst [vmem:[%s61 + $0x198] sm:$0xff] %v164
        %v166 = vld [vmem:[%s60 + $0x1a0] sm:$0xff]
        %167 = vst [vmem:[%s61 + $0x1a0] sm:$0xff] %v166
        %v168 = vld [vmem:[%s60 + $0x1a8] sm:$0xff]
        %169 = vst [vmem:[%s61 + $0x1a8] sm:$0xff] %v168
        %v170 = vld [vmem:[%s60 + $0x1b0] sm:$0xff]
        %171 = vst [vmem:[%s61 + $0x1b0] sm:$0xff] %v170
        %v172 = vld [vmem:[%s60 + $0x1b8] sm:$0xff]
        %173 = vst [vmem:[%s61 + $0x1b8] sm:$0xff] %v172
        %v174 = vld [vmem:[%s60 + $0x1c0] sm:$0xff]
        %175 = vst [vmem:[%s61 + $0x1c0] sm:$0xff] %v174
        %v176 = vld [vmem:[%s60 + $0x1c8] sm:$0xff]
        %177 = vst [vmem:[%s61 + $0x1c8] sm:$0xff] %v176
        %v178 = vld [vmem:[%s60 + $0x1d0] sm:$0xff]
        %179 = vst [vmem:[%s61 + $0x1d0] sm:$0xff] %v178
        %v180 = vld [vmem:[%s60 + $0x1d8] sm:$0xff]
        %181 = vst [vmem:[%s61 + $0x1d8] sm:$0xff] %v180
        %v182 = vld [vmem:[%s60 + $0x1e0] sm:$0xff]
        %183 = vst [vmem:[%s61 + $0x1e0] sm:$0xff] %v182
        %v184 = vld [vmem:[%s60 + $0x1e8] sm:$0xff]
        %185 = vst [vmem:[%s61 + $0x1e8] sm:$0xff] %v184
        %v186 = vld [vmem:[%s60 + $0x1f0] sm:$0xff]
        %187 = vst [vmem:[%s61 + $0x1f0] sm:$0xff] %v186
        %v188 = vld [vmem:[%s60 + $0x1f8] sm:$0xff]
        %189 = vst [vmem:[%s61 + $0x1f8] sm:$0xff] %v188
        %v190 = vld [vmem:[%s60 + $0x200] sm:$0xff]
        %191 = vst [vmem:[%s61 + $0x200] sm:$0xff] %v190
        %v192 = vld [vmem:[%s60 + $0x208] sm:$0xff]
        %193 = vst [vmem:[%s61 + $0x208] sm:$0xff] %v192
        %v194 = vld [vmem:[%s60 + $0x210] sm:$0xff]
        %195 = vst [vmem:[%s61 + $0x210] sm:$0xff] %v194
        %v196 = vld [vmem:[%s60 + $0x218] sm:$0xff]
        %197 = vst [vmem:[%s61 + $0x218] sm:$0xff] %v196
        %v198 = vld [vmem:[%s60 + $0x220] sm:$0xff]
        %199 = vst [vmem:[%s61 + $0x220] sm:$0xff] %v198
        %v200 = vld [vmem:[%s60 + $0x228] sm:$0xff]
        %201 = vst [vmem:[%s61 + $0x228] sm:$0xff] %v200
        %v202 = vld [vmem:[%s60 + $0x230] sm:$0xff]
        %203 = vst [vmem:[%s61 + $0x230] sm:$0xff] %v202
        %v204 = vld [vmem:[%s60 + $0x238] sm:$0xff]
        %205 = vst [vmem:[%s61 + $0x238] sm:$0xff] %v204
        %v206 = vld [vmem:[%s60 + $0x240] sm:$0xff]
        %207 = vst [vmem:[%s61 + $0x240] sm:$0xff] %v206
        %v208 = vld [vmem:[%s60 + $0x248] sm:$0xff]
        %209 = vst [vmem:[%s61 + $0x248] sm:$0xff] %v208
        %v210 = vld [vmem:[%s60 + $0x250] sm:$0xff]
        %211 = vst [vmem:[%s61 + $0x250] sm:$0xff] %v210
        %v212 = vld [vmem:[%s60 + $0x258] sm:$0xff]
        %213 = vst [vmem:[%s61 + $0x258] sm:$0xff] %v212
        %v214 = vld [vmem:[%s60 + $0x260] sm:$0xff]
        %215 = vst [vmem:[%s61 + $0x260] sm:$0xff] %v214
        %v216 = vld [vmem:[%s60 + $0x268] sm:$0xff]
        %217 = vst [vmem:[%s61 + $0x268] sm:$0xff] %v216
        %v218 = vld [vmem:[%s60 + $0x270] sm:$0xff]
        %219 = vst [vmem:[%s61 + $0x270] sm:$0xff] %v218
        %v220 = vld [vmem:[%s60 + $0x278] sm:$0xff]
        %221 = vst [vmem:[%s61 + $0x278] sm:$0xff] %v220
        %v222 = vld [vmem:[%s60 + $0x280] sm:$0xff]
        %223 = vst [vmem:[%s61 + $0x280] sm:$0xff] %v222
        %v224 = vld [vmem:[%s60 + $0x288] sm:$0xff]
        %225 = vst [vmem:[%s61 + $0x288] sm:$0xff] %v224
        %v226 = vld [vmem:[%s60 + $0x290] sm:$0xff]
        %227 = vst [vmem:[%s61 + $0x290] sm:$0xff] %v226
        %v228 = vld [vmem:[%s60 + $0x298] sm:$0xff]
        %229 = vst [vmem:[%s61 + $0x298] sm:$0xff] %v228
        %v230 = vld [vmem:[%s60 + $0x2a0] sm:$0xff]
        %231 = vst [vmem:[%s61 + $0x2a0] sm:$0xff] %v230
        %v232 = vld [vmem:[%s60 + $0x2a8] sm:$0xff]
        %233 = vst [vmem:[%s61 + $0x2a8] sm:$0xff] %v232
        %v234 = vld [vmem:[%s60 + $0x2b0] sm:$0xff]
        %235 = vst [vmem:[%s61 + $0x2b0] sm:$0xff] %v234
        %v236 = vld [vmem:[%s60 + $0x2b8] sm:$0xff]
        %237 = vst [vmem:[%s61 + $0x2b8] sm:$0xff] %v236
        %v238 = vld [vmem:[%s60 + $0x2c0] sm:$0xff]
        %239 = vst [vmem:[%s61 + $0x2c0] sm:$0xff] %v238
        %v240 = vld [vmem:[%s60 + $0x2c8] sm:$0xff]
        %241 = vst [vmem:[%s61 + $0x2c8] sm:$0xff] %v240
        %v242 = vld [vmem:[%s60 + $0x2d0] sm:$0xff]
        %243 = vst [vmem:[%s61 + $0x2d0] sm:$0xff] %v242
        %v244 = vld [vmem:[%s60 + $0x2d8] sm:$0xff]
        %245 = vst [vmem:[%s61 + $0x2d8] sm:$0xff] %v244
        %v246 = vld [vmem:[%s60 + $0x2e0] sm:$0xff]
        %247 = vst [vmem:[%s61 + $0x2e0] sm:$0xff] %v246
        %v248 = vld [vmem:[%s60 + $0x2e8] sm:$0xff]
        %249 = vst [vmem:[%s61 + $0x2e8] sm:$0xff] %v248
        %v250 = vld [vmem:[%s60 + $0x2f0] sm:$0xff]
        %251 = vst [vmem:[%s61 + $0x2f0] sm:$0xff] %v250
        %v252 = vld [vmem:[%s60 + $0x2f8] sm:$0xff]
        %253 = vst [vmem:[%s61 + $0x2f8] sm:$0xff] %v252
        %v254 = vld [vmem:[%s60 + $0x300] sm:$0xff]
        %255 = vst [vmem:[%s61 + $0x300] sm:$0xff] %v254
        %v256 = vld [vmem:[%s60 + $0x308] sm:$0xff]
        %257 = vst [vmem:[%s61 + $0x308] sm:$0xff] %v256
        %v258 = vld [vmem:[%s60 + $0x310] sm:$0xff]
        %259 = vst [vmem:[%s61 + $0x310] sm:$0xff] %v258
        %v260 = vld [vmem:[%s60 + $0x318] sm:$0xff]
        %261 = vst [vmem:[%s61 + $0x318] sm:$0xff] %v260
        %v262 = vld [vmem:[%s60 + $0x320] sm:$0xff]
        %263 = vst [vmem:[%s61 + $0x320] sm:$0xff] %v262
        %v264 = vld [vmem:[%s60 + $0x328] sm:$0xff]
        %265 = vst [vmem:[%s61 + $0x328] sm:$0xff] %v264
        %v266 = vld [vmem:[%s60 + $0x330] sm:$0xff]
        %267 = vst [vmem:[%s61 + $0x330] sm:$0xff] %v266
        %v268 = vld [vmem:[%s60 + $0x338] sm:$0xff]
        %269 = vst [vmem:[%s61 + $0x338] sm:$0xff] %v268
        %v270 = vld [vmem:[%s60 + $0x340] sm:$0xff]
        %271 = vst [vmem:[%s61 + $0x340] sm:$0xff] %v270
        %v272 = vld [vmem:[%s60 + $0x348] sm:$0xff]
        %273 = vst [vmem:[%s61 + $0x348] sm:$0xff] %v272
        %v274 = vld [vmem:[%s60 + $0x350] sm:$0xff]
        %275 = vst [vmem:[%s61 + $0x350] sm:$0xff] %v274
        %v276 = vld [vmem:[%s60 + $0x358] sm:$0xff]
        %277 = vst [vmem:[%s61 + $0x358] sm:$0xff] %v276
        %v278 = vld [vmem:[%s60 + $0x360] sm:$0xff]
        %279 = vst [vmem:[%s61 + $0x360] sm:$0xff] %v278
        %v280 = vld [vmem:[%s60 + $0x368] sm:$0xff]
        %281 = vst [vmem:[%s61 + $0x368] sm:$0xff] %v280
        %v282 = vld [vmem:[%s60 + $0x370] sm:$0xff]
        %283 = vst [vmem:[%s61 + $0x370] sm:$0xff] %v282
        %v284 = vld [vmem:[%s60 + $0x378] sm:$0xff]
        %285 = vst [vmem:[%s61 + $0x378] sm:$0xff] %v284
        %v286 = vld [vmem:[%s60 + $0x380] sm:$0xff]
        %287 = vst [vmem:[%s61 + $0x380] sm:$0xff] %v286
        %v288 = vld [vmem:[%s60 + $0x388] sm:$0xff]
        %289 = vst [vmem:[%s61 + $0x388] sm:$0xff] %v288
        %v290 = vld [vmem:[%s60 + $0x390] sm:$0xff]
        %291 = vst [vmem:[%s61 + $0x390] sm:$0xff] %v290
        %v292 = vld [vmem:[%s60 + $0x398] sm:$0xff]
        %293 = vst [vmem:[%s61 + $0x398] sm:$0xff] %v292
        %v294 = vld [vmem:[%s60 + $0x3a0] sm:$0xff]
        %295 = vst [vmem:[%s61 + $0x3a0] sm:$0xff] %v294
        %v296 = vld [vmem:[%s60 + $0x3a8] sm:$0xff]
        %297 = vst [vmem:[%s61 + $0x3a8] sm:$0xff] %v296
        %v298 = vld [vmem:[%s60 + $0x3b0] sm:$0xff]
        %299 = vst [vmem:[%s61 + $0x3b0] sm:$0xff] %v298
        %v300 = vld [vmem:[%s60 + $0x3b8] sm:$0xff]
        %301 = vst [vmem:[%s61 + $0x3b8] sm:$0xff] %v300
        %v302 = vld [vmem:[%s60 + $0x3c0] sm:$0xff]
        %303 = vst [vmem:[%s61 + $0x3c0] sm:$0xff] %v302
        %v304 = vld [vmem:[%s60 + $0x3c8] sm:$0xff]
        %305 = vst [vmem:[%s61 + $0x3c8] sm:$0xff] %v304
        %v306 = vld [vmem:[%s60 + $0x3d0] sm:$0xff]
        %307 = vst [vmem:[%s61 + $0x3d0] sm:$0xff] %v306
        %v308 = vld [vmem:[%s60 + $0x3d8] sm:$0xff]
        %309 = vst [vmem:[%s61 + $0x3d8] sm:$0xff] %v308
        %v310 = vld [vmem:[%s60 + $0x3e0] sm:$0xff]
        %311 = vst [vmem:[%s61 + $0x3e0] sm:$0xff] %v310
        %v312 = vld [vmem:[%s60 + $0x3e8] sm:$0xff]
        %313 = vst [vmem:[%s61 + $0x3e8] sm:$0xff] %v312
        %v314 = vld [vmem:[%s60 + $0x3f0] sm:$0xff]
        %315 = vst [vmem:[%s61 + $0x3f0] sm:$0xff] %v314
        %v316 = vld [vmem:[%s60 + $0x3f8] sm:$0xff]
        %317 = vst [vmem:[%s61 + $0x3f8] sm:$0xff] %v316
      $region57: #{dpcnn_forward.1} parent=51 // loop_footer
        %s59 = sadd.s32 1, %s55
      $region58: #{dpcnn_forward.1} parent=51 // loop_footer_branch
        %54 = sbr.rel target = $region54
      $region59: #{dpcnn_forward.1} parent=51 // loop_exit
        _
    $region52: #{dpcnn_forward.1} parent=36 // pred_fallthru
      _
    %p318 = pneg %p50
    // Predicated region
    $region60: #{dpcnn_forward.1} parent=36 // pred_check
      _
    $region61: #{dpcnn_forward.1} parent=36 // pred_check_branch
      %320 = sbr.rel (%p50) target = $region63
    $region62: #{dpcnn_forward.1} parent=36 // pred_region
      %s321 = sand.u32 1024, 7
    $region63: #{dpcnn_forward.1} parent=36 // pred_fallthru
      _
  $region37: #{dpcnn_forward.1} parent=0 // pred_fallthru
    _
  // Predicated region
  $region38: #{dpcnn_forward.1} parent=0 // pred_check
    %p35 = pneg %p31
  $region39: #{dpcnn_forward.1} parent=0 // pred_check_branch
    %37 = sbr.rel (%p35) target = $region41
  $region40: #{dpcnn_forward.1} parent=0 // pred_region
    %s38 = sshllo.u32 0, 1024
    loop: start=0, step=1, limit=1
    $region42: #{dpcnn_forward.1} parent=40 // loop_pre_header
      _
    $region43: #{dpcnn_forward.1} parent=40 // loop_header
      %s40 = sphi 0, %s44
      %p41 = scmp.ge.s32.totalorder %s40, 1
      %s45 = sphi %s6, %s6
      %s46 = sphi [#allocation2], [#allocation2]
    $region44: #{dpcnn_forward.1} parent=40 // loop_header_branch
      %43 = sbr.rel (%p41) target = $region48
    $region45: #{dpcnn_forward.1} parent=40 // loop_body
      %v47 = vld [vmem:[%s45] sm:%s38]
      %48 = vst [vmem:[%s46] sm:%s38] %v47
    $region46: #{dpcnn_forward.1} parent=40 // loop_footer
      %s44 = sadd.s32 1, %s40
    $region47: #{dpcnn_forward.1} parent=40 // loop_footer_branch
      %39 = sbr.rel target = $region43
    $region48: #{dpcnn_forward.1} parent=40 // loop_exit
      _
  $region41: #{dpcnn_forward.1} parent=0 // pred_fallthru
    _
  // Predicated region
  $region64: #{dpcnn_forward.1} parent=0 // pred_check
    _
  $region65: #{dpcnn_forward.1} parent=0 // pred_check_branch
    %324 = sbr.rel (0) target = $region67
  $region66: #{dpcnn_forward.1} parent=0 // pred_region
    %325 = vsyncadd [#allocation3], 16384
  $region67: #{dpcnn_forward.1} parent=0 // pred_fallthru
    _
  %v326 = vld [vmem:[%s0] sm:$0xff]
  %327 = vrot.lane.b32.xlu0 %v326, 17
  %v328 = vpop.permute.xlu0 %327
  %v329 = vld [vmem:[%s1] sm:$0xff]
  %v330 = vmul.f32 %v329, %v328
  %v331 = vadd.f32 %v330, 0.0
  %332 = vrot.lane.b32.xlu0 %v326, 16
  %v333 = vpop.permute.xlu0 %332
  %s334 = scalar_lea.vmem %s1, 8
  %v335 = vld [vmem:[%s334] sm:$0xff]
  %v336 = vmul.f32 %v335, %v333
  %v337 = vadd.f32 %v331, %v336
  %338 = vrot.lane.b32.xlu0 %v326, 15
  %v339 = vpop.permute.xlu0 %338
  %s340 = scalar_lea.vmem %s1, 16
  %v341 = vld [vmem:[%s340] sm:$0xff]
  %v342 = vmul.f32 %v341, %v339
  %v343 = vadd.f32 %v337, %v342
  %344 = vrot.lane.b32.xlu0 %v326, 1
  %v345 = vpop.permute.xlu0 %344
  %s346 = scalar_lea.vmem %s1, 24
  %v347 = vld [vmem:[%s346] sm:$0xff]
  %v348 = vmul.f32 %v347, %v345
  %v349 = vadd.f32 %v343, %v348
  %s350 = scalar_lea.vmem %s1, 32
  %v351 = vld [vmem:[%s350] sm:$0xff]
  %v352 = vmul.f32 %v351, %v326
  %v353 = vadd.f32 %v349, %v352
  %354 = vrot.lane.b32.xlu0 %v326, 127
  %v355 = vpop.permute.xlu0 %354
  %s356 = scalar_lea.vmem %s1, 40
  %v357 = vld [vmem:[%s356] sm:$0xff]
  %v358 = vmul.f32 %v357, %v355
  %v359 = vadd.f32 %v353, %v358
  %360 = vrot.lane.b32.xlu0 %v326, 113
  %v361 = vpop.permute.xlu0 %360
  %s362 = scalar_lea.vmem %s1, 48
  %v363 = vld [vmem:[%s362] sm:$0xff]
  %v364 = vmul.f32 %v363, %v361
  %v365 = vadd.f32 %v359, %v364
  %366 = vrot.lane.b32.xlu0 %v326, 112
  %v367 = vpop.permute.xlu0 %366
  %s368 = scalar_lea.vmem %s1, 56
  %v369 = vld [vmem:[%s368] sm:$0xff]
  %v370 = vmul.f32 %v369, %v367
  %v371 = vadd.f32 %v365, %v370
  %372 = vrot.lane.b32.xlu0 %v326, 111
  %v373 = vpop.permute.xlu0 %372
  %s374 = scalar_lea.vmem %s1, 64
  %v375 = vld [vmem:[%s374] sm:$0xff]
  %v376 = vmul.f32 %v375, %v373
  %v377 = vadd.f32 %v371, %v376
  %v378 = vld [vmem:[%s2] sm:$0xff]
  %v379 = vadd.f32 %v377, %v378
  %v380 = vmax.f32 %v379, 0.0
  %381 = vrot.lane.b32.xlu0 %v380, 17
  %v382 = vpop.permute.xlu0 %381
  %v383 = vld [vmem:[%s3] sm:$0xff]
  %v384 = vmul.f32 %v382, %v383
  %v385 = vld [vmem:[%s4] sm:$0xff]
  %387 = vset.pattern.permute.xlu0 0
  %388 = vperm.xlu0 %387, %v385
  %v389 = vpop.permute.xlu0 %388
  %v391 = vmul.f32 %v389, %v384
  %v392 = vadd.f32 %v391, 0.0
  %s393 = scalar_lea.vmem %s4, 8
  %v394 = vld [vmem:[%s393] sm:$0xff]
  %396 = vset.pattern.permute.xlu0 0
  %397 = vperm.xlu0 %396, %v394
  %v398 = vpop.permute.xlu0 %397
  %v400 = vmul.f32 %v398, %v384
  %v401 = vadd.f32 %v400, 0.0
  %s402 = scalar_lea.vmem %s4, 16
  %v403 = vld [vmem:[%s402] sm:$0xff]
  %405 = vset.pattern.permute.xlu0 0
  %406 = vperm.xlu0 %405, %v403
  %v407 = vpop.permute.xlu0 %406
  %v409 = vmul.f32 %v407, %v384
  %v410 = vadd.f32 %v409, 0.0
  %s411 = scalar_lea.vmem %s4, 24
  %v412 = vld [vmem:[%s411] sm:$0xff]
  %414 = vset.pattern.permute.xlu0 0
  %415 = vperm.xlu0 %414, %v412
  %v416 = vpop.permute.xlu0 %415
  %v418 = vmul.f32 %v416, %v384
  %v419 = vadd.f32 %v418, 0.0
  %s420 = scalar_lea.vmem %s4, 32
  %v421 = vld [vmem:[%s420] sm:$0xff]
  %423 = vset.pattern.permute.xlu0 0
  %424 = vperm.xlu0 %423, %v421
  %v425 = vpop.permute.xlu0 %424
  %v427 = vmul.f32 %v425, %v384
  %v428 = vadd.f32 %v427, 0.0
  %s429 = scalar_lea.vmem %s4, 40
  %v430 = vld [vmem:[%s429] sm:$0xff]
  %432 = vset.pattern.permute.xlu0 0
  %433 = vperm.xlu0 %432, %v430
  %v434 = vpop.permute.xlu0 %433
  %v436 = vmul.f32 %v434, %v384
  %v437 = vadd.f32 %v436, 0.0
  %s438 = scalar_lea.vmem %s4, 48
  %v439 = vld [vmem:[%s438] sm:$0xff]
  %441 = vset.pattern.permute.xlu0 0
  %442 = vperm.xlu0 %441, %v439
  %v443 = vpop.permute.xlu0 %442
  %v445 = vmul.f32 %v443, %v384
  %v446 = vadd.f32 %v445, 0.0
  %s447 = scalar_lea.vmem %s4, 56
  %v448 = vld [vmem:[%s447] sm:$0xff]
  %450 = vset.pattern.permute.xlu0 0
  %451 = vperm.xlu0 %450, %v448
  %v452 = vpop.permute.xlu0 %451
  %v454 = vmul.f32 %v452, %v384
  %v455 = vadd.f32 %v454, 0.0
  %456 = vrot.lane.b32.xlu0 %v380, 16
  %v457 = vpop.permute.xlu0 %456
  %s458 = scalar_lea.vmem %s3, 8
  %v459 = vld [vmem:[%s458] sm:$0xff]
  %v460 = vmul.f32 %v457, %v459
  %s461 = scalar_lea.vmem %s4, 64
  %v462 = vld [vmem:[%s461] sm:$0xff]
  %464 = vset.pattern.permute.xlu0 0
  %465 = vperm.xlu0 %464, %v462
  %v466 = vpop.permute.xlu0 %465
  %v468 = vmul.f32 %v466, %v460
  %v469 = vadd.f32 %v392, %v468
  %s470 = scalar_lea.vmem %s4, 72
  %v471 = vld [vmem:[%s470] sm:$0xff]
  %473 = vset.pattern.permute.xlu0 0
  %474 = vperm.xlu0 %473, %v471
  %v475 = vpop.permute.xlu0 %474
  %v477 = vmul.f32 %v475, %v460
  %v478 = vadd.f32 %v401, %v477
  %s479 = scalar_lea.vmem %s4, 80
  %v480 = vld [vmem:[%s479] sm:$0xff]
  %482 = vset.pattern.permute.xlu0 0
  %483 = vperm.xlu0 %482, %v480
  %v484 = vpop.permute.xlu0 %483
  %v486 = vmul.f32 %v484, %v460
  %v487 = vadd.f32 %v410, %v486
  %s488 = scalar_lea.vmem %s4, 88
  %v489 = vld [vmem:[%s488] sm:$0xff]
  %491 = vset.pattern.permute.xlu0 0
  %492 = vperm.xlu0 %491, %v489
  %v493 = vpop.permute.xlu0 %492
  %v495 = vmul.f32 %v493, %v460
  %v496 = vadd.f32 %v419, %v495
  %s497 = scalar_lea.vmem %s4, 96
  %v498 = vld [vmem:[%s497] sm:$0xff]
  %500 = vset.pattern.permute.xlu0 0
  %501 = vperm.xlu0 %500, %v498
  %v502 = vpop.permute.xlu0 %501
  %v504 = vmul.f32 %v502, %v460
  %v505 = vadd.f32 %v428, %v504
  %s506 = scalar_lea.vmem %s4, 104
  %v507 = vld [vmem:[%s506] sm:$0xff]
  %509 = vset.pattern.permute.xlu0 0
  %510 = vperm.xlu0 %509, %v507
  %v511 = vpop.permute.xlu0 %510
  %v513 = vmul.f32 %v511, %v460
  %v514 = vadd.f32 %v437, %v513
  %s515 = scalar_lea.vmem %s4, 112
  %v516 = vld [vmem:[%s515] sm:$0xff]
  %518 = vset.pattern.permute.xlu0 0
  %519 = vperm.xlu0 %518, %v516
  %v520 = vpop.permute.xlu0 %519
  %v522 = vmul.f32 %v520, %v460
  %v523 = vadd.f32 %v446, %v522
  %s524 = scalar_lea.vmem %s4, 120
  %v525 = vld [vmem:[%s524] sm:$0xff]
  %527 = vset.pattern.permute.xlu0 0
  %528 = vperm.xlu0 %527, %v525
  %v529 = vpop.permute.xlu0 %528
  %v531 = vmul.f32 %v529, %v460
  %v532 = vadd.f32 %v455, %v531
  %533 = vrot.lane.b32.xlu0 %v380, 15
  %v534 = vpop.permute.xlu0 %533
  %s535 = scalar_lea.vmem %s3, 16
  %v536 = vld [vmem:[%s535] sm:$0xff]
  %v537 = vmul.f32 %v534, %v536
  %s538 = scalar_lea.vmem %s4, 128
  %v539 = vld [vmem:[%s538] sm:$0xff]
  %541 = vset.pattern.permute.xlu0 0
  %542 = vperm.xlu0 %541, %v539
  %v543 = vpop.permute.xlu0 %542
  %v545 = vmul.f32 %v543, %v537
  %v546 = vadd.f32 %v469, %v545
  %s547 = scalar_lea.vmem %s4, 136
  %v548 = vld [vmem:[%s547] sm:$0xff]
  %550 = vset.pattern.permute.xlu0 0
  %551 = vperm.xlu0 %550, %v548
  %v552 = vpop.permute.xlu0 %551
  %v554 = vmul.f32 %v552, %v537
  %v555 = vadd.f32 %v478, %v554
  %s556 = scalar_lea.vmem %s4, 144
  %v557 = vld [vmem:[%s556] sm:$0xff]
  %559 = vset.pattern.permute.xlu0 0
  %560 = vperm.xlu0 %559, %v557
  %v561 = vpop.permute.xlu0 %560
  %v563 = vmul.f32 %v561, %v537
  %v564 = vadd.f32 %v487, %v563
  %s565 = scalar_lea.vmem %s4, 152
  %v566 = vld [vmem:[%s565] sm:$0xff]
  %568 = vset.pattern.permute.xlu0 0
  %569 = vperm.xlu0 %568, %v566
  %v570 = vpop.permute.xlu0 %569
  %v572 = vmul.f32 %v570, %v537
  %v573 = vadd.f32 %v496, %v572
  %s574 = scalar_lea.vmem %s4, 160
  %v575 = vld [vmem:[%s574] sm:$0xff]
  %577 = vset.pattern.permute.xlu0 0
  %578 = vperm.xlu0 %577, %v575
  %v579 = vpop.permute.xlu0 %578
  %v581 = vmul.f32 %v579, %v537
  %v582 = vadd.f32 %v505, %v581
  %s583 = scalar_lea.vmem %s4, 168
  %v584 = vld [vmem:[%s583] sm:$0xff]
  %586 = vset.pattern.permute.xlu0 0
  %587 = vperm.xlu0 %586, %v584
  %v588 = vpop.permute.xlu0 %587
  %v590 = vmul.f32 %v588, %v537
  %v591 = vadd.f32 %v514, %v590
  %s592 = scalar_lea.vmem %s4, 176
  %v593 = vld [vmem:[%s592] sm:$0xff]
  %595 = vset.pattern.permute.xlu0 0
  %596 = vperm.xlu0 %595, %v593
  %v597 = vpop.permute.xlu0 %596
  %v599 = vmul.f32 %v597, %v537
  %v600 = vadd.f32 %v523, %v599
  %s601 = scalar_lea.vmem %s4, 184
  %v602 = vld [vmem:[%s601] sm:$0xff]
  %604 = vset.pattern.permute.xlu0 0
  %605 = vperm.xlu0 %604, %v602
  %v606 = vpop.permute.xlu0 %605
  %v608 = vmul.f32 %v606, %v537
  %v609 = vadd.f32 %v532, %v608
  %610 = vrot.lane.b32.xlu0 %v380, 1
  %v611 = vpop.permute.xlu0 %610
  %s612 = scalar_lea.vmem %s3, 24
  %v613 = vld [vmem:[%s612] sm:$0xff]
  %v614 = vmul.f32 %v611, %v613
  %s615 = scalar_lea.vmem %s4, 192
  %v616 = vld [vmem:[%s615] sm:$0xff]
  %618 = vset.pattern.permute.xlu0 0
  %619 = vperm.xlu0 %618, %v616
  %v620 = vpop.permute.xlu0 %619
  %v622 = vmul.f32 %v620, %v614
  %v623 = vadd.f32 %v546, %v622
  %s624 = scalar_lea.vmem %s4, 200
  %v625 = vld [vmem:[%s624] sm:$0xff]
  %627 = vset.pattern.permute.xlu0 0
  %628 = vperm.xlu0 %627, %v625
  %v629 = vpop.permute.xlu0 %628
  %v631 = vmul.f32 %v629, %v614
  %v632 = vadd.f32 %v555, %v631
  %s633 = scalar_lea.vmem %s4, 208
  %v634 = vld [vmem:[%s633] sm:$0xff]
  %636 = vset.pattern.permute.xlu0 0
  %637 = vperm.xlu0 %636, %v634
  %v638 = vpop.permute.xlu0 %637
  %v640 = vmul.f32 %v638, %v614
  %v641 = vadd.f32 %v564, %v640
  %s642 = scalar_lea.vmem %s4, 216
  %v643 = vld [vmem:[%s642] sm:$0xff]
  %645 = vset.pattern.permute.xlu0 0
  %646 = vperm.xlu0 %645, %v643
  %v647 = vpop.permute.xlu0 %646
  %v649 = vmul.f32 %v647, %v614
  %v650 = vadd.f32 %v573, %v649
  %s651 = scalar_lea.vmem %s4, 224
  %v652 = vld [vmem:[%s651] sm:$0xff]
  %654 = vset.pattern.permute.xlu0 0
  %655 = vperm.xlu0 %654, %v652
  %v656 = vpop.permute.xlu0 %655
  %v658 = vmul.f32 %v656, %v614
  %v659 = vadd.f32 %v582, %v658
  %s660 = scalar_lea.vmem %s4, 232
  %v661 = vld [vmem:[%s660] sm:$0xff]
  %663 = vset.pattern.permute.xlu0 0
  %664 = vperm.xlu0 %663, %v661
  %v665 = vpop.permute.xlu0 %664
  %v667 = vmul.f32 %v665, %v614
  %v668 = vadd.f32 %v591, %v667
  %s669 = scalar_lea.vmem %s4, 240
  %v670 = vld [vmem:[%s669] sm:$0xff]
  %672 = vset.pattern.permute.xlu0 0
  %673 = vperm.xlu0 %672, %v670
  %v674 = vpop.permute.xlu0 %673
  %v676 = vmul.f32 %v674, %v614
  %v677 = vadd.f32 %v600, %v676
  %s678 = scalar_lea.vmem %s4, 248
  %v679 = vld [vmem:[%s678] sm:$0xff]
  %681 = vset.pattern.permute.xlu0 0
  %682 = vperm.xlu0 %681, %v679
  %v683 = vpop.permute.xlu0 %682
  %v685 = vmul.f32 %v683, %v614
  %v686 = vadd.f32 %v609, %v685
  %s687 = scalar_lea.vmem %s4, 256
  %v688 = vld [vmem:[%s687] sm:$0xff]
  %690 = vset.pattern.permute.xlu0 0
  %691 = vperm.xlu0 %690, %v688
  %v692 = vpop.permute.xlu0 %691
  %v694 = vmul.f32 %v692, %v380
  %v695 = vadd.f32 %v623, %v694
  %s696 = scalar_lea.vmem %s4, 264
  %v697 = vld [vmem:[%s696] sm:$0xff]
  %699 = vset.pattern.permute.xlu0 0
  %700 = vperm.xlu0 %699, %v697
  %v701 = vpop.permute.xlu0 %700
  %v703 = vmul.f32 %v701, %v380
  %v704 = vadd.f32 %v632, %v703
  %s705 = scalar_lea.vmem %s4, 272
  %v706 = vld [vmem:[%s705] sm:$0xff]
  %708 = vset.pattern.permute.xlu0 0
  %709 = vperm.xlu0 %708, %v706
  %v710 = vpop.permute.xlu0 %709
  %v712 = vmul.f32 %v710, %v380
  %v713 = vadd.f32 %v641, %v712
  %s714 = scalar_lea.vmem %s4, 280
  %v715 = vld [vmem:[%s714] sm:$0xff]
  %717 = vset.pattern.permute.xlu0 0
  %718 = vperm.xlu0 %717, %v715
  %v719 = vpop.permute.xlu0 %718
  %v721 = vmul.f32 %v719, %v380
  %v722 = vadd.f32 %v650, %v721
  %s723 = scalar_lea.vmem %s4, 288
  %v724 = vld [vmem:[%s723] sm:$0xff]
  %726 = vset.pattern.permute.xlu0 0
  %727 = vperm.xlu0 %726, %v724
  %v728 = vpop.permute.xlu0 %727
  %v730 = vmul.f32 %v728, %v380
  %v731 = vadd.f32 %v659, %v730
  %s732 = scalar_lea.vmem %s4, 296
  %v733 = vld [vmem:[%s732] sm:$0xff]
  %735 = vset.pattern.permute.xlu0 0
  %736 = vperm.xlu0 %735, %v733
  %v737 = vpop.permute.xlu0 %736
  %v739 = vmul.f32 %v737, %v380
  %v740 = vadd.f32 %v668, %v739
  %s741 = scalar_lea.vmem %s4, 304
  %v742 = vld [vmem:[%s741] sm:$0xff]
  %744 = vset.pattern.permute.xlu0 0
  %745 = vperm.xlu0 %744, %v742
  %v746 = vpop.permute.xlu0 %745
  %v748 = vmul.f32 %v746, %v380
  %v749 = vadd.f32 %v677, %v748
  %s750 = scalar_lea.vmem %s4, 312
  %v751 = vld [vmem:[%s750] sm:$0xff]
  %753 = vset.pattern.permute.xlu0 0
  %754 = vperm.xlu0 %753, %v751
  %v755 = vpop.permute.xlu0 %754
  %v757 = vmul.f32 %v755, %v380
  %v758 = vadd.f32 %v686, %v757
  %759 = vrot.lane.b32.xlu0 %v380, 127
  %v760 = vpop.permute.xlu0 %759
  %s761 = scalar_lea.vmem %s3, 40
  %v762 = vld [vmem:[%s761] sm:$0xff]
  %v763 = vmul.f32 %v760, %v762
  %s764 = scalar_lea.vmem %s4, 320
  %v765 = vld [vmem:[%s764] sm:$0xff]
  %767 = vset.pattern.permute.xlu0 0
  %768 = vperm.xlu0 %767, %v765
  %v769 = vpop.permute.xlu0 %768
  %v771 = vmul.f32 %v769, %v763
  %v772 = vadd.f32 %v695, %v771
  %s773 = scalar_lea.vmem %s4, 328
  %v774 = vld [vmem:[%s773] sm:$0xff]
  %776 = vset.pattern.permute.xlu0 0
  %777 = vperm.xlu0 %776, %v774
  %v778 = vpop.permute.xlu0 %777
  %v780 = vmul.f32 %v778, %v763
  %v781 = vadd.f32 %v704, %v780
  %s782 = scalar_lea.vmem %s4, 336
  %v783 = vld [vmem:[%s782] sm:$0xff]
  %785 = vset.pattern.permute.xlu0 0
  %786 = vperm.xlu0 %785, %v783
  %v787 = vpop.permute.xlu0 %786
  %v789 = vmul.f32 %v787, %v763
  %v790 = vadd.f32 %v713, %v789
  %s791 = scalar_lea.vmem %s4, 344
  %v792 = vld [vmem:[%s791] sm:$0xff]
  %794 = vset.pattern.permute.xlu0 0
  %795 = vperm.xlu0 %794, %v792
  %v796 = vpop.permute.xlu0 %795
  %v798 = vmul.f32 %v796, %v763
  %v799 = vadd.f32 %v722, %v798
  %s800 = scalar_lea.vmem %s4, 352
  %v801 = vld [vmem:[%s800] sm:$0xff]
  %803 = vset.pattern.permute.xlu0 0
  %804 = vperm.xlu0 %803, %v801
  %v805 = vpop.permute.xlu0 %804
  %v807 = vmul.f32 %v805, %v763
  %v808 = vadd.f32 %v731, %v807
  %s809 = scalar_lea.vmem %s4, 360
  %v810 = vld [vmem:[%s809] sm:$0xff]
  %812 = vset.pattern.permute.xlu0 0
  %813 = vperm.xlu0 %812, %v810
  %v814 = vpop.permute.xlu0 %813
  %v816 = vmul.f32 %v814, %v763
  %v817 = vadd.f32 %v740, %v816
  %s818 = scalar_lea.vmem %s4, 368
  %v819 = vld [vmem:[%s818] sm:$0xff]
  %821 = vset.pattern.permute.xlu0 0
  %822 = vperm.xlu0 %821, %v819
  %v823 = vpop.permute.xlu0 %822
  %v825 = vmul.f32 %v823, %v763
  %v826 = vadd.f32 %v749, %v825
  %s827 = scalar_lea.vmem %s4, 376
  %v828 = vld [vmem:[%s827] sm:$0xff]
  %830 = vset.pattern.permute.xlu0 0
  %831 = vperm.xlu0 %830, %v828
  %v832 = vpop.permute.xlu0 %831
  %v834 = vmul.f32 %v832, %v763
  %v835 = vadd.f32 %v758, %v834
  %836 = vrot.lane.b32.xlu0 %v380, 113
  %v837 = vpop.permute.xlu0 %836
  %s838 = scalar_lea.vmem %s3, 48
  %v839 = vld [vmem:[%s838] sm:$0xff]
  %v840 = vmul.f32 %v837, %v839
  %s841 = scalar_lea.vmem %s4, 384
  %v842 = vld [vmem:[%s841] sm:$0xff]
  %844 = vset.pattern.permute.xlu0 0
  %845 = vperm.xlu0 %844, %v842
  %v846 = vpop.permute.xlu0 %845
  %v848 = vmul.f32 %v846, %v840
  %v849 = vadd.f32 %v772, %v848
  %s850 = scalar_lea.vmem %s4, 392
  %v851 = vld [vmem:[%s850] sm:$0xff]
  %853 = vset.pattern.permute.xlu0 0
  %854 = vperm.xlu0 %853, %v851
  %v855 = vpop.permute.xlu0 %854
  %v857 = vmul.f32 %v855, %v840
  %v858 = vadd.f32 %v781, %v857
  %s859 = scalar_lea.vmem %s4, 400
  %v860 = vld [vmem:[%s859] sm:$0xff]
  %862 = vset.pattern.permute.xlu0 0
  %863 = vperm.xlu0 %862, %v860
  %v864 = vpop.permute.xlu0 %863
  %v866 = vmul.f32 %v864, %v840
  %v867 = vadd.f32 %v790, %v866
  %s868 = scalar_lea.vmem %s4, 408
  %v869 = vld [vmem:[%s868] sm:$0xff]
  %871 = vset.pattern.permute.xlu0 0
  %872 = vperm.xlu0 %871, %v869
  %v873 = vpop.permute.xlu0 %872
  %v875 = vmul.f32 %v873, %v840
  %v876 = vadd.f32 %v799, %v875
  %s877 = scalar_lea.vmem %s4, 416
  %v878 = vld [vmem:[%s877] sm:$0xff]
  %880 = vset.pattern.permute.xlu0 0
  %881 = vperm.xlu0 %880, %v878
  %v882 = vpop.permute.xlu0 %881
  %v884 = vmul.f32 %v882, %v840
  %v885 = vadd.f32 %v808, %v884
  %s886 = scalar_lea.vmem %s4, 424
  %v887 = vld [vmem:[%s886] sm:$0xff]
  %889 = vset.pattern.permute.xlu0 0
  %890 = vperm.xlu0 %889, %v887
  %v891 = vpop.permute.xlu0 %890
  %v893 = vmul.f32 %v891, %v840
  %v894 = vadd.f32 %v817, %v893
  %s895 = scalar_lea.vmem %s4, 432
  %v896 = vld [vmem:[%s895] sm:$0xff]
  %898 = vset.pattern.permute.xlu0 0
  %899 = vperm.xlu0 %898, %v896
  %v900 = vpop.permute.xlu0 %899
  %v902 = vmul.f32 %v900, %v840
  %v903 = vadd.f32 %v826, %v902
  %s904 = scalar_lea.vmem %s4, 440
  %v905 = vld [vmem:[%s904] sm:$0xff]
  %907 = vset.pattern.permute.xlu0 0
  %908 = vperm.xlu0 %907, %v905
  %v909 = vpop.permute.xlu0 %908
  %v911 = vmul.f32 %v909, %v840
  %v912 = vadd.f32 %v835, %v911
  %913 = vrot.lane.b32.xlu0 %v380, 112
  %v914 = vpop.permute.xlu0 %913
  %s915 = scalar_lea.vmem %s3, 56
  %v916 = vld [vmem:[%s915] sm:$0xff]
  %v917 = vmul.f32 %v914, %v916
  %s918 = scalar_lea.vmem %s4, 448
  %v919 = vld [vmem:[%s918] sm:$0xff]
  %921 = vset.pattern.permute.xlu0 0
  %922 = vperm.xlu0 %921, %v919
  %v923 = vpop.permute.xlu0 %922
  %v925 = vmul.f32 %v923, %v917
  %v926 = vadd.f32 %v849, %v925
  %s927 = scalar_lea.vmem %s4, 456
  %v928 = vld [vmem:[%s927] sm:$0xff]
  %930 = vset.pattern.permute.xlu0 0
  %931 = vperm.xlu0 %930, %v928
  %v932 = vpop.permute.xlu0 %931
  %v934 = vmul.f32 %v932, %v917
  %v935 = vadd.f32 %v858, %v934
  %s936 = scalar_lea.vmem %s4, 464
  %v937 = vld [vmem:[%s936] sm:$0xff]
  %939 = vset.pattern.permute.xlu0 0
  %940 = vperm.xlu0 %939, %v937
  %v941 = vpop.permute.xlu0 %940
  %v943 = vmul.f32 %v941, %v917
  %v944 = vadd.f32 %v867, %v943
  %s945 = scalar_lea.vmem %s4, 472
  %v946 = vld [vmem:[%s945] sm:$0xff]
  %948 = vset.pattern.permute.xlu0 0
  %949 = vperm.xlu0 %948, %v946
  %v950 = vpop.permute.xlu0 %949
  %v952 = vmul.f32 %v950, %v917
  %v953 = vadd.f32 %v876, %v952
  %s954 = scalar_lea.vmem %s4, 480
  %v955 = vld [vmem:[%s954] sm:$0xff]
  %957 = vset.pattern.permute.xlu0 0
  %958 = vperm.xlu0 %957, %v955
  %v959 = vpop.permute.xlu0 %958
  %v961 = vmul.f32 %v959, %v917
  %v962 = vadd.f32 %v885, %v961
  %s963 = scalar_lea.vmem %s4, 488
  %v964 = vld [vmem:[%s963] sm:$0xff]
  %966 = vset.pattern.permute.xlu0 0
  %967 = vperm.xlu0 %966, %v964
  %v968 = vpop.permute.xlu0 %967
  %v970 = vmul.f32 %v968, %v917
  %v971 = vadd.f32 %v894, %v970
  %s972 = scalar_lea.vmem %s4, 496
  %v973 = vld [vmem:[%s972] sm:$0xff]
  %975 = vset.pattern.permute.xlu0 0
  %976 = vperm.xlu0 %975, %v973
  %v977 = vpop.permute.xlu0 %976
  %v979 = vmul.f32 %v977, %v917
  %v980 = vadd.f32 %v903, %v979
  %s981 = scalar_lea.vmem %s4, 504
  %v982 = vld [vmem:[%s981] sm:$0xff]
  %984 = vset.pattern.permute.xlu0 0
  %985 = vperm.xlu0 %984, %v982
  %v986 = vpop.permute.xlu0 %985
  %v988 = vmul.f32 %v986, %v917
  %v989 = vadd.f32 %v912, %v988
  %990 = vrot.lane.b32.xlu0 %v380, 111
  %v991 = vpop.permute.xlu0 %990
  %s992 = scalar_lea.vmem %s3, 64
  %v993 = vld [vmem:[%s992] sm:$0xff]
  %v994 = vmul.f32 %v991, %v993
  %s995 = scalar_lea.vmem %s4, 512
  %v996 = vld [vmem:[%s995] sm:$0xff]
  %998 = vset.pattern.permute.xlu0 0
  %999 = vperm.xlu0 %998, %v996
  %v1000 = vpop.permute.xlu0 %999
  %v1002 = vmul.f32 %v1000, %v994
  %v1003 = vadd.f32 %v926, %v1002
  %s1004 = scalar_lea.vmem %s4, 520
  %v1005 = vld [vmem:[%s1004] sm:$0xff]
  %1007 = vset.pattern.permute.xlu0 0
  %1008 = vperm.xlu0 %1007, %v1005
  %v1009 = vpop.permute.xlu0 %1008
  %v1011 = vmul.f32 %v1009, %v994
  %v1012 = vadd.f32 %v935, %v1011
  %s1013 = scalar_lea.vmem %s4, 528
  %v1014 = vld [vmem:[%s1013] sm:$0xff]
  %1016 = vset.pattern.permute.xlu0 0
  %1017 = vperm.xlu0 %1016, %v1014
  %v1018 = vpop.permute.xlu0 %1017
  %v1020 = vmul.f32 %v1018, %v994
  %v1021 = vadd.f32 %v944, %v1020
  %s1022 = scalar_lea.vmem %s4, 536
  %v1023 = vld [vmem:[%s1022] sm:$0xff]
  %1025 = vset.pattern.permute.xlu0 0
  %1026 = vperm.xlu0 %1025, %v1023
  %v1027 = vpop.permute.xlu0 %1026
  %v1029 = vmul.f32 %v1027, %v994
  %v1030 = vadd.f32 %v953, %v1029
  %s1031 = scalar_lea.vmem %s4, 544
  %v1032 = vld [vmem:[%s1031] sm:$0xff]
  %1034 = vset.pattern.permute.xlu0 0
  %1035 = vperm.xlu0 %1034, %v1032
  %v1036 = vpop.permute.xlu0 %1035
  %v1038 = vmul.f32 %v1036, %v994
  %v1039 = vadd.f32 %v962, %v1038
  %s1040 = scalar_lea.vmem %s4, 552
  %v1041 = vld [vmem:[%s1040] sm:$0xff]
  %1043 = vset.pattern.permute.xlu0 0
  %1044 = vperm.xlu0 %1043, %v1041
  %v1045 = vpop.permute.xlu0 %1044
  %v1047 = vmul.f32 %v1045, %v994
  %v1048 = vadd.f32 %v971, %v1047
  %s1049 = scalar_lea.vmem %s4, 560
  %v1050 = vld [vmem:[%s1049] sm:$0xff]
  %1052 = vset.pattern.permute.xlu0 0
  %1053 = vperm.xlu0 %1052, %v1050
  %v1054 = vpop.permute.xlu0 %1053
  %v1056 = vmul.f32 %v1054, %v994
  %v1057 = vadd.f32 %v980, %v1056
  %s1058 = scalar_lea.vmem %s4, 568
  %v1059 = vld [vmem:[%s1058] sm:$0xff]
  %1061 = vset.pattern.permute.xlu0 0
  %1062 = vperm.xlu0 %1061, %v1059
  %v1063 = vpop.permute.xlu0 %1062
  %v1065 = vmul.f32 %v1063, %v994
  %v1066 = vadd.f32 %v989, %v1065
  %v1068 = vrot.slane %v1003, 2
  %v1070 = vadd.f32 %v1003, %v1068
  %v1071 = vrot.slane %v1003, 4
  %v1073 = vadd.f32 %v1070, %v1071
  %v1074 = vrot.slane %v1003, 6
  %v1076 = vadd.f32 %v1073, %v1074
  %v1077 = vld [vmem:[%s5] sm:$0x3]
  %v1078 = vadd.f32 %v1076, %v1077
  %v1079 = vmax.f32 %v1078, 0.0
  %v1081 = vrot.slane %v1012, 2
  %v1083 = vadd.f32 %v1012, %v1081
  %v1084 = vrot.slane %v1012, 4
  %v1086 = vadd.f32 %v1083, %v1084
  %v1087 = vrot.slane %v1012, 6
  %v1089 = vadd.f32 %v1086, %v1087
  %s1090 = scalar_lea.vmem %s5, 2
  %v1091 = vld [vmem:[%s1090] sm:$0x3]
  %v1092 = vadd.f32 %v1089, %v1091
  %v1093 = vmax.f32 %v1092, 0.0
  %v1095 = vrot.slane %v1021, 2
  %v1097 = vadd.f32 %v1021, %v1095
  %v1098 = vrot.slane %v1021, 4
  %v1100 = vadd.f32 %v1097, %v1098
  %v1101 = vrot.slane %v1021, 6
  %v1103 = vadd.f32 %v1100, %v1101
  %s1104 = scalar_lea.vmem %s5, 4
  %v1105 = vld [vmem:[%s1104] sm:$0x3]
  %v1106 = vadd.f32 %v1103, %v1105
  %v1107 = vmax.f32 %v1106, 0.0
  %v1109 = vrot.slane %v1030, 2
  %v1111 = vadd.f32 %v1030, %v1109
  %v1112 = vrot.slane %v1030, 4
  %v1114 = vadd.f32 %v1111, %v1112
  %v1115 = vrot.slane %v1030, 6
  %v1117 = vadd.f32 %v1114, %v1115
  %s1118 = scalar_lea.vmem %s5, 6
  %v1119 = vld [vmem:[%s1118] sm:$0x3]
  %v1120 = vadd.f32 %v1117, %v1119
  %v1121 = vmax.f32 %v1120, 0.0
  %v1123 = vrot.slane %v1039, 2
  %v1125 = vadd.f32 %v1039, %v1123
  %v1126 = vrot.slane %v1039, 4
  %v1128 = vadd.f32 %v1125, %v1126
  %v1129 = vrot.slane %v1039, 6
  %v1131 = vadd.f32 %v1128, %v1129
  %s1132 = scalar_lea.vmem %s5, 8
  %v1133 = vld [vmem:[%s1132] sm:$0x3]
  %v1134 = vadd.f32 %v1131, %v1133
  %v1135 = vmax.f32 %v1134, 0.0
  %v1137 = vrot.slane %v1048, 2
  %v1139 = vadd.f32 %v1048, %v1137
  %v1140 = vrot.slane %v1048, 4
  %v1142 = vadd.f32 %v1139, %v1140
  %v1143 = vrot.slane %v1048, 6
  %v1145 = vadd.f32 %v1142, %v1143
  %s1146 = scalar_lea.vmem %s5, 10
  %v1147 = vld [vmem:[%s1146] sm:$0x3]
  %v1148 = vadd.f32 %v1145, %v1147
  %v1149 = vmax.f32 %v1148, 0.0
  %v1151 = vrot.slane %v1057, 2
  %v1153 = vadd.f32 %v1057, %v1151
  %v1154 = vrot.slane %v1057, 4
  %v1156 = vadd.f32 %v1153, %v1154
  %v1157 = vrot.slane %v1057, 6
  %v1159 = vadd.f32 %v1156, %v1157
  %s1160 = scalar_lea.vmem %s5, 12
  %v1161 = vld [vmem:[%s1160] sm:$0x3]
  %v1162 = vadd.f32 %v1159, %v1161
  %v1163 = vmax.f32 %v1162, 0.0
  %v1165 = vrot.slane %v1066, 2
  %v1167 = vadd.f32 %v1066, %v1165
  %v1168 = vrot.slane %v1066, 4
  %v1170 = vadd.f32 %v1167, %v1168
  %v1171 = vrot.slane %v1066, 6
  %v1173 = vadd.f32 %v1170, %v1171
  %s1174 = scalar_lea.vmem %s5, 14
  %v1175 = vld [vmem:[%s1174] sm:$0x3]
  %v1176 = vadd.f32 %v1173, %v1175
  %v1177 = vmax.f32 %v1176, 0.0
  %s1178 = smul.u32 1024, 1
  %s1179 = sshll.u32 %s1178, 4
  %1180 = dma.done [#allocation3], %s1179
  %v1181 = vld [vmem:[#allocation2] sm:$0xff]
  %v1182 = vld [vmem:[#allocation2 + $0x8] sm:$0xff]
  %v1183 = vld [vmem:[#allocation2 + $0x10] sm:$0xff]
  %v1184 = vld [vmem:[#allocation2 + $0x18] sm:$0xff]
  %v1185 = vld [vmem:[#allocation2 + $0x20] sm:$0xff]
  %v1186 = vld [vmem:[#allocation2 + $0x28] sm:$0xff]
  %v1187 = vld [vmem:[#allocation2 + $0x30] sm:$0xff]
  %v1188 = vld [vmem:[#allocation2 + $0x38] sm:$0xff]
  %v1189 = vld [vmem:[#allocation2 + $0x40] sm:$0xff]
  %v1190 = vld [vmem:[#allocation2 + $0x48] sm:$0xff]
  %v1191 = vld [vmem:[#allocation2 + $0x50] sm:$0xff]
  %v1192 = vld [vmem:[#allocation2 + $0x58] sm:$0xff]
  %v1193 = vld [vmem:[#allocation2 + $0x60] sm:$0xff]
  %v1194 = vld [vmem:[#allocation2 + $0x68] sm:$0xff]
  %v1195 = vld [vmem:[#allocation2 + $0x70] sm:$0xff]
  %v1196 = vld [vmem:[#allocation2 + $0x78] sm:$0xff]
  %v1197 = vld [vmem:[#allocation2 + $0x80] sm:$0xff]
  %v1198 = vld [vmem:[#allocation2 + $0x88] sm:$0xff]
  %v1199 = vld [vmem:[#allocation2 + $0x90] sm:$0xff]
  %v1200 = vld [vmem:[#allocation2 + $0x98] sm:$0xff]
  %v1201 = vld [vmem:[#allocation2 + $0xa0] sm:$0xff]
  %v1202 = vld [vmem:[#allocation2 + $0xa8] sm:$0xff]
  %v1203 = vld [vmem:[#allocation2 + $0xb0] sm:$0xff]
  %v1204 = vld [vmem:[#allocation2 + $0xb8] sm:$0xff]
  %v1205 = vld [vmem:[#allocation2 + $0xc0] sm:$0xff]
  %v1206 = vld [vmem:[#allocation2 + $0xc8] sm:$0xff]
  %v1207 = vld [vmem:[#allocation2 + $0xd0] sm:$0xff]
  %v1208 = vld [vmem:[#allocation2 + $0xd8] sm:$0xff]
  %v1209 = vld [vmem:[#allocation2 + $0xe0] sm:$0xff]
  %v1210 = vld [vmem:[#allocation2 + $0xe8] sm:$0xff]
  %v1211 = vld [vmem:[#allocation2 + $0xf0] sm:$0xff]
  %v1212 = vld [vmem:[#allocation2 + $0xf8] sm:$0xff]
  %v1213 = vld [vmem:[#allocation2 + $0x100] sm:$0xff]
  %v1214 = vld [vmem:[#allocation2 + $0x108] sm:$0xff]
  %v1215 = vld [vmem:[#allocation2 + $0x110] sm:$0xff]
  %v1216 = vld [vmem:[#allocation2 + $0x118] sm:$0xff]
  %v1217 = vld [vmem:[#allocation2 + $0x120] sm:$0xff]
  %v1218 = vld [vmem:[#allocation2 + $0x128] sm:$0xff]
  %v1219 = vld [vmem:[#allocation2 + $0x130] sm:$0xff]
  %v1220 = vld [vmem:[#allocation2 + $0x138] sm:$0xff]
  %v1221 = vld [vmem:[#allocation2 + $0x140] sm:$0xff]
  %v1222 = vld [vmem:[#allocation2 + $0x148] sm:$0xff]
  %v1223 = vld [vmem:[#allocation2 + $0x150] sm:$0xff]
  %v1224 = vld [vmem:[#allocation2 + $0x158] sm:$0xff]
  %v1225 = vld [vmem:[#allocation2 + $0x160] sm:$0xff]
  %v1226 = vld [vmem:[#allocation2 + $0x168] sm:$0xff]
  %v1227 = vld [vmem:[#allocation2 + $0x170] sm:$0xff]
  %v1228 = vld [vmem:[#allocation2 + $0x178] sm:$0xff]
  %v1229 = vld [vmem:[#allocation2 + $0x180] sm:$0xff]
  %v1230 = vld [vmem:[#allocation2 + $0x188] sm:$0xff]
  %v1231 = vld [vmem:[#allocation2 + $0x190] sm:$0xff]
  %v1232 = vld [vmem:[#allocation2 + $0x198] sm:$0xff]
  %v1233 = vld [vmem:[#allocation2 + $0x1a0] sm:$0xff]
  %v1234 = vld [vmem:[#allocation2 + $0x1a8] sm:$0xff]
  %v1235 = vld [vmem:[#allocation2 + $0x1b0] sm:$0xff]
  %v1236 = vld [vmem:[#allocation2 + $0x1b8] sm:$0xff]
  %v1237 = vld [vmem:[#allocation2 + $0x1c0] sm:$0xff]
  %v1238 = vld [vmem:[#allocation2 + $0x1c8] sm:$0xff]
  %v1239 = vld [vmem:[#allocation2 + $0x1d0] sm:$0xff]
  %v1240 = vld [vmem:[#allocation2 + $0x1d8] sm:$0xff]
  %v1241 = vld [vmem:[#allocation2 + $0x1e0] sm:$0xff]
  %v1242 = vld [vmem:[#allocation2 + $0x1e8] sm:$0xff]
  %v1243 = vld [vmem:[#allocation2 + $0x1f0] sm:$0xff]
  %v1244 = vld [vmem:[#allocation2 + $0x1f8] sm:$0xff]
  %v1245 = vld [vmem:[#allocation2 + $0x200] sm:$0xff]
  %v1246 = vld [vmem:[#allocation2 + $0x208] sm:$0xff]
  %v1247 = vld [vmem:[#allocation2 + $0x210] sm:$0xff]
  %v1248 = vld [vmem:[#allocation2 + $0x218] sm:$0xff]
  %v1249 = vld [vmem:[#allocation2 + $0x220] sm:$0xff]
  %v1250 = vld [vmem:[#allocation2 + $0x228] sm:$0xff]
  %v1251 = vld [vmem:[#allocation2 + $0x230] sm:$0xff]
  %v1252 = vld [vmem:[#allocation2 + $0x238] sm:$0xff]
  %v1253 = vld [vmem:[#allocation2 + $0x240] sm:$0xff]
  %v1254 = vld [vmem:[#allocation2 + $0x248] sm:$0xff]
  %v1255 = vld [vmem:[#allocation2 + $0x250] sm:$0xff]
  %v1256 = vld [vmem:[#allocation2 + $0x258] sm:$0xff]
  %v1257 = vld [vmem:[#allocation2 + $0x260] sm:$0xff]
  %v1258 = vld [vmem:[#allocation2 + $0x268] sm:$0xff]
  %v1259 = vld [vmem:[#allocation2 + $0x270] sm:$0xff]
  %v1260 = vld [vmem:[#allocation2 + $0x278] sm:$0xff]
  %v1261 = vld [vmem:[#allocation2 + $0x280] sm:$0xff]
  %v1262 = vld [vmem:[#allocation2 + $0x288] sm:$0xff]
  %v1263 = vld [vmem:[#allocation2 + $0x290] sm:$0xff]
  %v1264 = vld [vmem:[#allocation2 + $0x298] sm:$0xff]
  %v1265 = vld [vmem:[#allocation2 + $0x2a0] sm:$0xff]
  %v1266 = vld [vmem:[#allocation2 + $0x2a8] sm:$0xff]
  %v1267 = vld [vmem:[#allocation2 + $0x2b0] sm:$0xff]
  %v1268 = vld [vmem:[#allocation2 + $0x2b8] sm:$0xff]
  %v1269 = vld [vmem:[#allocation2 + $0x2c0] sm:$0xff]
  %v1270 = vld [vmem:[#allocation2 + $0x2c8] sm:$0xff]
  %v1271 = vld [vmem:[#allocation2 + $0x2d0] sm:$0xff]
  %v1272 = vld [vmem:[#allocation2 + $0x2d8] sm:$0xff]
  %v1273 = vld [vmem:[#allocation2 + $0x2e0] sm:$0xff]
  %v1274 = vld [vmem:[#allocation2 + $0x2e8] sm:$0xff]
  %v1275 = vld [vmem:[#allocation2 + $0x2f0] sm:$0xff]
  %v1276 = vld [vmem:[#allocation2 + $0x2f8] sm:$0xff]
  %v1277 = vld [vmem:[#allocation2 + $0x300] sm:$0xff]
  %v1278 = vld [vmem:[#allocation2 + $0x308] sm:$0xff]
  %v1279 = vld [vmem:[#allocation2 + $0x310] sm:$0xff]
  %v1280 = vld [vmem:[#allocation2 + $0x318] sm:$0xff]
  %v1281 = vld [vmem:[#allocation2 + $0x320] sm:$0xff]
  %v1282 = vld [vmem:[#allocation2 + $0x328] sm:$0xff]
  %v1283 = vld [vmem:[#allocation2 + $0x330] sm:$0xff]
  %v1284 = vld [vmem:[#allocation2 + $0x338] sm:$0xff]
  %v1285 = vld [vmem:[#allocation2 + $0x340] sm:$0xff]
  %v1286 = vld [vmem:[#allocation2 + $0x348] sm:$0xff]
  %v1287 = vld [vmem:[#allocation2 + $0x350] sm:$0xff]
  %v1288 = vld [vmem:[#allocation2 + $0x358] sm:$0xff]
  %v1289 = vld [vmem:[#allocation2 + $0x360] sm:$0xff]
  %v1290 = vld [vmem:[#allocation2 + $0x368] sm:$0xff]
  %v1291 = vld [vmem:[#allocation2 + $0x370] sm:$0xff]
  %v1292 = vld [vmem:[#allocation2 + $0x378] sm:$0xff]
  %v1293 = vld [vmem:[#allocation2 + $0x380] sm:$0xff]
  %v1294 = vld [vmem:[#allocation2 + $0x388] sm:$0xff]
  %v1295 = vld [vmem:[#allocation2 + $0x390] sm:$0xff]
  %v1296 = vld [vmem:[#allocation2 + $0x398] sm:$0xff]
  %v1297 = vld [vmem:[#allocation2 + $0x3a0] sm:$0xff]
  %v1298 = vld [vmem:[#allocation2 + $0x3a8] sm:$0xff]
  %v1299 = vld [vmem:[#allocation2 + $0x3b0] sm:$0xff]
  %v1300 = vld [vmem:[#allocation2 + $0x3b8] sm:$0xff]
  %v1301 = vld [vmem:[#allocation2 + $0x3c0] sm:$0xff]
  %v1302 = vld [vmem:[#allocation2 + $0x3c8] sm:$0xff]
  %v1303 = vld [vmem:[#allocation2 + $0x3d0] sm:$0xff]
  %v1304 = vld [vmem:[#allocation2 + $0x3d8] sm:$0xff]
  %v1305 = vld [vmem:[#allocation2 + $0x3e0] sm:$0xff]
  %v1306 = vld [vmem:[#allocation2 + $0x3e8] sm:$0xff]
  %v1307 = vld [vmem:[#allocation2 + $0x3f0] sm:$0xff]
  %v1308 = vld [vmem:[#allocation2 + $0x3f8] sm:$0xff]
  %v1309 = vld [vmem:[%s7] sm:$0x1]
  %v1311 = vlaneseq
  %v1312 = vshrl.u32 %v1311, 7
  %v1313 = vsub.s32 0, %v1312
  %v1314 = vrot.slane %v1309, %v1313
  %1316 = vmatprep.subr.mxu0 0.0
  %v1317 = vand.u32 %v1181, 4294901760
  %1318 = vmatpush1.msra.mxu0 %v1317
  %1319 = vmatprep.subr.mxu0 0.0
  %v1320 = vand.u32 %v1182, 4294901760
  %1321 = vmatpush1.msra.mxu0 %v1320
  %1322 = vmatprep.subr.mxu0 0.0
  %v1323 = vand.u32 %v1183, 4294901760
  %1324 = vmatpush1.msra.mxu0 %v1323
  %1325 = vmatprep.subr.mxu0 0.0
  %v1326 = vand.u32 %v1184, 4294901760
  %1327 = vmatpush1.msra.mxu0 %v1326
  %1328 = vmatprep.subr.mxu0 0.0
  %v1329 = vand.u32 %v1185, 4294901760
  %1330 = vmatpush1.msra.mxu0 %v1329
  %1331 = vmatprep.subr.mxu0 0.0
  %v1332 = vand.u32 %v1186, 4294901760
  %1333 = vmatpush1.msra.mxu0 %v1332
  %1334 = vmatprep.subr.mxu0 0.0
  %v1335 = vand.u32 %v1187, 4294901760
  %1336 = vmatpush1.msra.mxu0 %v1335
  %1337 = vmatprep.subr.mxu0 0.0
  %v1338 = vand.u32 %v1188, 4294901760
  %1339 = vmatpush1.msra.mxu0 %v1338
  %1340 = vmatprep.subr.mxu0 0.0
  %v1341 = vand.u32 %v1189, 4294901760
  %1342 = vmatpush1.msra.mxu0 %v1341
  %1343 = vmatprep.subr.mxu0 0.0
  %v1344 = vand.u32 %v1190, 4294901760
  %1345 = vmatpush1.msra.mxu0 %v1344
  %1346 = vmatprep.subr.mxu0 0.0
  %v1347 = vand.u32 %v1191, 4294901760
  %1348 = vmatpush1.msra.mxu0 %v1347
  %1349 = vmatprep.subr.mxu0 0.0
  %v1350 = vand.u32 %v1192, 4294901760
  %1351 = vmatpush1.msra.mxu0 %v1350
  %1352 = vmatprep.subr.mxu0 0.0
  %v1353 = vand.u32 %v1193, 4294901760
  %1354 = vmatpush1.msra.mxu0 %v1353
  %1355 = vmatprep.subr.mxu0 0.0
  %v1356 = vand.u32 %v1194, 4294901760
  %1357 = vmatpush1.msra.mxu0 %v1356
  %1358 = vmatprep.subr.mxu0 0.0
  %v1359 = vand.u32 %v1195, 4294901760
  %1360 = vmatpush1.msra.mxu0 %v1359
  %1361 = vmatprep.subr.mxu0 0.0
  %v1362 = vand.u32 %v1196, 4294901760
  %1363 = vmatpush1.msra.mxu0 %v1362
  %1364 = vmatprep.subr.mxu0 0.0
  %v1365 = vand.u32 %v1197, 4294901760
  %1366 = vmatpush1.msra.mxu0 %v1365
  %1367 = vmatprep.subr.mxu0 0.0
  %v1368 = vand.u32 %v1198, 4294901760
  %1369 = vmatpush1.msra.mxu0 %v1368
  %1370 = vmatprep.subr.mxu0 0.0
  %v1371 = vand.u32 %v1199, 4294901760
  %1372 = vmatpush1.msra.mxu0 %v1371
  %1373 = vmatprep.subr.mxu0 0.0
  %v1374 = vand.u32 %v1200, 4294901760
  %1375 = vmatpush1.msra.mxu0 %v1374
  %1376 = vmatprep.subr.mxu0 0.0
  %v1377 = vand.u32 %v1201, 4294901760
  %1378 = vmatpush1.msra.mxu0 %v1377
  %1379 = vmatprep.subr.mxu0 0.0
  %v1380 = vand.u32 %v1202, 4294901760
  %1381 = vmatpush1.msra.mxu0 %v1380
  %1382 = vmatprep.subr.mxu0 0.0
  %v1383 = vand.u32 %v1203, 4294901760
  %1384 = vmatpush1.msra.mxu0 %v1383
  %1385 = vmatprep.subr.mxu0 0.0
  %v1386 = vand.u32 %v1204, 4294901760
  %1387 = vmatpush1.msra.mxu0 %v1386
  %1388 = vmatprep.subr.mxu0 0.0
  %v1389 = vand.u32 %v1205, 4294901760
  %1390 = vmatpush1.msra.mxu0 %v1389
  %1391 = vmatprep.subr.mxu0 0.0
  %v1392 = vand.u32 %v1206, 4294901760
  %1393 = vmatpush1.msra.mxu0 %v1392
  %1394 = vmatprep.subr.mxu0 0.0
  %v1395 = vand.u32 %v1207, 4294901760
  %1396 = vmatpush1.msra.mxu0 %v1395
  %1397 = vmatprep.subr.mxu0 0.0
  %v1398 = vand.u32 %v1208, 4294901760
  %1399 = vmatpush1.msra.mxu0 %v1398
  %1400 = vmatprep.subr.mxu0 0.0
  %v1401 = vand.u32 %v1209, 4294901760
  %1402 = vmatpush1.msra.mxu0 %v1401
  %1403 = vmatprep.subr.mxu0 0.0
  %v1404 = vand.u32 %v1210, 4294901760
  %1405 = vmatpush1.msra.mxu0 %v1404
  %1406 = vmatprep.subr.mxu0 0.0
  %v1407 = vand.u32 %v1211, 4294901760
  %1408 = vmatpush1.msra.mxu0 %v1407
  %1409 = vmatprep.subr.mxu0 0.0
  %v1410 = vand.u32 %v1212, 4294901760
  %1411 = vmatpush1.msra.mxu0 %v1410
  %v1412 = vand.u32 %v1093, 4294901760
  %v1413 = vsub.f32 %v1093, %v1412
  %v1414 = vand.u32 %v1413, 4294901760
  %v1415 = vsub.f32 %v1413, %v1414
  %v1416 = vand.u32 %v1415, 4294901760
  %1417 = vmatprep.mubr.f32.mxu0 %v1416
  %v1418 = vand.u32 %v1079, 4294901760
  %v1419 = vsub.f32 %v1079, %v1418
  %v1420 = vand.u32 %v1419, 4294901760
  %v1421 = vsub.f32 %v1419, %v1420
  %v1422 = vand.u32 %v1421, 4294901760
  %1423 = vmatmul.mubr.f32.gmra.mrb[0].mxu0 %v1422
  %v1424 = vpop.f32.mrb[0].mxu0
  %v1425 = vadd.f32 %v1314, %v1424
  %v1426 = vpop.f32.mrb[0].mxu0
  %1427 = vdwg.mxu0
  %1428 = vmatprep.subr.mxu0 0.0
  %v1429 = vand.u32 %v1181, 4294901760
  %v1430 = vsub.f32 %v1181, %v1429
  %v1431 = vand.u32 %v1430, 4294901760
  %v1432 = vsub.f32 %v1430, %v1431
  %v1433 = vand.u32 %v1432, 4294901760
  %1434 = vmatpush1.msra.mxu0 %v1433
  %1435 = vmatprep.subr.mxu0 0.0
  %v1436 = vand.u32 %v1182, 4294901760
  %v1437 = vsub.f32 %v1182, %v1436
  %v1438 = vand.u32 %v1437, 4294901760
  %v1439 = vsub.f32 %v1437, %v1438
  %v1440 = vand.u32 %v1439, 4294901760
  %1441 = vmatpush1.msra.mxu0 %v1440
  %1442 = vmatprep.subr.mxu0 0.0
  %v1443 = vand.u32 %v1183, 4294901760
  %v1444 = vsub.f32 %v1183, %v1443
  %v1445 = vand.u32 %v1444, 4294901760
  %v1446 = vsub.f32 %v1444, %v1445
  %v1447 = vand.u32 %v1446, 4294901760
  %1448 = vmatpush1.msra.mxu0 %v1447
  %1449 = vmatprep.subr.mxu0 0.0
  %v1450 = vand.u32 %v1184, 4294901760
  %v1451 = vsub.f32 %v1184, %v1450
  %v1452 = vand.u32 %v1451, 4294901760
  %v1453 = vsub.f32 %v1451, %v1452
  %v1454 = vand.u32 %v1453, 4294901760
  %1455 = vmatpush1.msra.mxu0 %v1454
  %1456 = vmatprep.subr.mxu0 0.0
  %v1457 = vand.u32 %v1185, 4294901760
  %v1458 = vsub.f32 %v1185, %v1457
  %v1459 = vand.u32 %v1458, 4294901760
  %v1460 = vsub.f32 %v1458, %v1459
  %v1461 = vand.u32 %v1460, 4294901760
  %1462 = vmatpush1.msra.mxu0 %v1461
  %1463 = vmatprep.subr.mxu0 0.0
  %v1464 = vand.u32 %v1186, 4294901760
  %v1465 = vsub.f32 %v1186, %v1464
  %v1466 = vand.u32 %v1465, 4294901760
  %v1467 = vsub.f32 %v1465, %v1466
  %v1468 = vand.u32 %v1467, 4294901760
  %1469 = vmatpush1.msra.mxu0 %v1468
  %1470 = vmatprep.subr.mxu0 0.0
  %v1471 = vand.u32 %v1187, 4294901760
  %v1472 = vsub.f32 %v1187, %v1471
  %v1473 = vand.u32 %v1472, 4294901760
  %v1474 = vsub.f32 %v1472, %v1473
  %v1475 = vand.u32 %v1474, 4294901760
  %1476 = vmatpush1.msra.mxu0 %v1475
  %1477 = vmatprep.subr.mxu0 0.0
  %v1478 = vand.u32 %v1188, 4294901760
  %v1479 = vsub.f32 %v1188, %v1478
  %v1480 = vand.u32 %v1479, 4294901760
  %v1481 = vsub.f32 %v1479, %v1480
  %v1482 = vand.u32 %v1481, 4294901760
  %1483 = vmatpush1.msra.mxu0 %v1482
  %1484 = vmatprep.subr.mxu0 0.0
  %v1485 = vand.u32 %v1189, 4294901760
  %v1486 = vsub.f32 %v1189, %v1485
  %v1487 = vand.u32 %v1486, 4294901760
  %v1488 = vsub.f32 %v1486, %v1487
  %v1489 = vand.u32 %v1488, 4294901760
  %1490 = vmatpush1.msra.mxu0 %v1489
  %1491 = vmatprep.subr.mxu0 0.0
  %v1492 = vand.u32 %v1190, 4294901760
  %v1493 = vsub.f32 %v1190, %v1492
  %v1494 = vand.u32 %v1493, 4294901760
  %v1495 = vsub.f32 %v1493, %v1494
  %v1496 = vand.u32 %v1495, 4294901760
  %1497 = vmatpush1.msra.mxu0 %v1496
  %1498 = vmatprep.subr.mxu0 0.0
  %v1499 = vand.u32 %v1191, 4294901760
  %v1500 = vsub.f32 %v1191, %v1499
  %v1501 = vand.u32 %v1500, 4294901760
  %v1502 = vsub.f32 %v1500, %v1501
  %v1503 = vand.u32 %v1502, 4294901760
  %1504 = vmatpush1.msra.mxu0 %v1503
  %1505 = vmatprep.subr.mxu0 0.0
  %v1506 = vand.u32 %v1192, 4294901760
  %v1507 = vsub.f32 %v1192, %v1506
  %v1508 = vand.u32 %v1507, 4294901760
  %v1509 = vsub.f32 %v1507, %v1508
  %v1510 = vand.u32 %v1509, 4294901760
  %1511 = vmatpush1.msra.mxu0 %v1510
  %1512 = vmatprep.subr.mxu0 0.0
  %v1513 = vand.u32 %v1193, 4294901760
  %v1514 = vsub.f32 %v1193, %v1513
  %v1515 = vand.u32 %v1514, 4294901760
  %v1516 = vsub.f32 %v1514, %v1515
  %v1517 = vand.u32 %v1516, 4294901760
  %1518 = vmatpush1.msra.mxu0 %v1517
  %1519 = vmatprep.subr.mxu0 0.0
  %v1520 = vand.u32 %v1194, 4294901760
  %v1521 = vsub.f32 %v1194, %v1520
  %v1522 = vand.u32 %v1521, 4294901760
  %v1523 = vsub.f32 %v1521, %v1522
  %v1524 = vand.u32 %v1523, 4294901760
  %1525 = vmatpush1.msra.mxu0 %v1524
  %1526 = vmatprep.subr.mxu0 0.0
  %v1527 = vand.u32 %v1195, 4294901760
  %v1528 = vsub.f32 %v1195, %v1527
  %v1529 = vand.u32 %v1528, 4294901760
  %v1530 = vsub.f32 %v1528, %v1529
  %v1531 = vand.u32 %v1530, 4294901760
  %1532 = vmatpush1.msra.mxu0 %v1531
  %1533 = vmatprep.subr.mxu0 0.0
  %v1534 = vand.u32 %v1196, 4294901760
  %v1535 = vsub.f32 %v1196, %v1534
  %v1536 = vand.u32 %v1535, 4294901760
  %v1537 = vsub.f32 %v1535, %v1536
  %v1538 = vand.u32 %v1537, 4294901760
  %1539 = vmatpush1.msra.mxu0 %v1538
  %1540 = vmatprep.subr.mxu0 0.0
  %v1541 = vand.u32 %v1197, 4294901760
  %v1542 = vsub.f32 %v1197, %v1541
  %v1543 = vand.u32 %v1542, 4294901760
  %v1544 = vsub.f32 %v1542, %v1543
  %v1545 = vand.u32 %v1544, 4294901760
  %1546 = vmatpush1.msra.mxu0 %v1545
  %1547 = vmatprep.subr.mxu0 0.0
  %v1548 = vand.u32 %v1198, 4294901760
  %v1549 = vsub.f32 %v1198, %v1548
  %v1550 = vand.u32 %v1549, 4294901760
  %v1551 = vsub.f32 %v1549, %v1550
  %v1552 = vand.u32 %v1551, 4294901760
  %1553 = vmatpush1.msra.mxu0 %v1552
  %1554 = vmatprep.subr.mxu0 0.0
  %v1555 = vand.u32 %v1199, 4294901760
  %v1556 = vsub.f32 %v1199, %v1555
  %v1557 = vand.u32 %v1556, 4294901760
  %v1558 = vsub.f32 %v1556, %v1557
  %v1559 = vand.u32 %v1558, 4294901760
  %1560 = vmatpush1.msra.mxu0 %v1559
  %1561 = vmatprep.subr.mxu0 0.0
  %v1562 = vand.u32 %v1200, 4294901760
  %v1563 = vsub.f32 %v1200, %v1562
  %v1564 = vand.u32 %v1563, 4294901760
  %v1565 = vsub.f32 %v1563, %v1564
  %v1566 = vand.u32 %v1565, 4294901760
  %1567 = vmatpush1.msra.mxu0 %v1566
  %1568 = vmatprep.subr.mxu0 0.0
  %v1569 = vand.u32 %v1201, 4294901760
  %v1570 = vsub.f32 %v1201, %v1569
  %v1571 = vand.u32 %v1570, 4294901760
  %v1572 = vsub.f32 %v1570, %v1571
  %v1573 = vand.u32 %v1572, 4294901760
  %1574 = vmatpush1.msra.mxu0 %v1573
  %1575 = vmatprep.subr.mxu0 0.0
  %v1576 = vand.u32 %v1202, 4294901760
  %v1577 = vsub.f32 %v1202, %v1576
  %v1578 = vand.u32 %v1577, 4294901760
  %v1579 = vsub.f32 %v1577, %v1578
  %v1580 = vand.u32 %v1579, 4294901760
  %1581 = vmatpush1.msra.mxu0 %v1580
  %1582 = vmatprep.subr.mxu0 0.0
  %v1583 = vand.u32 %v1203, 4294901760
  %v1584 = vsub.f32 %v1203, %v1583
  %v1585 = vand.u32 %v1584, 4294901760
  %v1586 = vsub.f32 %v1584, %v1585
  %v1587 = vand.u32 %v1586, 4294901760
  %1588 = vmatpush1.msra.mxu0 %v1587
  %1589 = vmatprep.subr.mxu0 0.0
  %v1590 = vand.u32 %v1204, 4294901760
  %v1591 = vsub.f32 %v1204, %v1590
  %v1592 = vand.u32 %v1591, 4294901760
  %v1593 = vsub.f32 %v1591, %v1592
  %v1594 = vand.u32 %v1593, 4294901760
  %1595 = vmatpush1.msra.mxu0 %v1594
  %1596 = vmatprep.subr.mxu0 0.0
  %v1597 = vand.u32 %v1205, 4294901760
  %v1598 = vsub.f32 %v1205, %v1597
  %v1599 = vand.u32 %v1598, 4294901760
  %v1600 = vsub.f32 %v1598, %v1599
  %v1601 = vand.u32 %v1600, 4294901760
  %1602 = vmatpush1.msra.mxu0 %v1601
  %1603 = vmatprep.subr.mxu0 0.0
  %v1604 = vand.u32 %v1206, 4294901760
  %v1605 = vsub.f32 %v1206, %v1604
  %v1606 = vand.u32 %v1605, 4294901760
  %v1607 = vsub.f32 %v1605, %v1606
  %v1608 = vand.u32 %v1607, 4294901760
  %1609 = vmatpush1.msra.mxu0 %v1608
  %1610 = vmatprep.subr.mxu0 0.0
  %v1611 = vand.u32 %v1207, 4294901760
  %v1612 = vsub.f32 %v1207, %v1611
  %v1613 = vand.u32 %v1612, 4294901760
  %v1614 = vsub.f32 %v1612, %v1613
  %v1615 = vand.u32 %v1614, 4294901760
  %1616 = vmatpush1.msra.mxu0 %v1615
  %1617 = vmatprep.subr.mxu0 0.0
  %v1618 = vand.u32 %v1208, 4294901760
  %v1619 = vsub.f32 %v1208, %v1618
  %v1620 = vand.u32 %v1619, 4294901760
  %v1621 = vsub.f32 %v1619, %v1620
  %v1622 = vand.u32 %v1621, 4294901760
  %1623 = vmatpush1.msra.mxu0 %v1622
  %1624 = vmatprep.subr.mxu0 0.0
  %v1625 = vand.u32 %v1209, 4294901760
  %v1626 = vsub.f32 %v1209, %v1625
  %v1627 = vand.u32 %v1626, 4294901760
  %v1628 = vsub.f32 %v1626, %v1627
  %v1629 = vand.u32 %v1628, 4294901760
  %1630 = vmatpush1.msra.mxu0 %v1629
  %1631 = vmatprep.subr.mxu0 0.0
  %v1632 = vand.u32 %v1210, 4294901760
  %v1633 = vsub.f32 %v1210, %v1632
  %v1634 = vand.u32 %v1633, 4294901760
  %v1635 = vsub.f32 %v1633, %v1634
  %v1636 = vand.u32 %v1635, 4294901760
  %1637 = vmatpush1.msra.mxu0 %v1636
  %1638 = vmatprep.subr.mxu0 0.0
  %v1639 = vand.u32 %v1211, 4294901760
  %v1640 = vsub.f32 %v1211, %v1639
  %v1641 = vand.u32 %v1640, 4294901760
  %v1642 = vsub.f32 %v1640, %v1641
  %v1643 = vand.u32 %v1642, 4294901760
  %1644 = vmatpush1.msra.mxu0 %v1643
  %1645 = vmatprep.subr.mxu0 0.0
  %v1646 = vand.u32 %v1212, 4294901760
  %v1647 = vsub.f32 %v1212, %v1646
  %v1648 = vand.u32 %v1647, 4294901760
  %v1649 = vsub.f32 %v1647, %v1648
  %v1650 = vand.u32 %v1649, 4294901760
  %1651 = vmatpush1.msra.mxu0 %v1650
  %v1652 = vand.u32 %v1093, 4294901760
  %1653 = vmatprep.mubr.f32.mxu0 %v1652
  %v1654 = vand.u32 %v1079, 4294901760
  %1655 = vmatmul.mubr.f32.gmra.mrb[0].mxu0 %v1654
  %v1656 = vpop.f32.mrb[0].mxu0
  %v1657 = vadd.f32 %v1425, %v1656
  %v1658 = vpop.f32.mrb[0].mxu0
  %1659 = vdwg.mxu0
  %1660 = vmatprep.subr.mxu0 0.0
  %v1661 = vand.u32 %v1181, 4294901760
  %v1662 = vsub.f32 %v1181, %v1661
  %1663 = vmatpush1.msra.mxu0 %v1662
  %1664 = vmatprep.subr.mxu0 0.0
  %v1665 = vand.u32 %v1182, 4294901760
  %v1666 = vsub.f32 %v1182, %v1665
  %1667 = vmatpush1.msra.mxu0 %v1666
  %1668 = vmatprep.subr.mxu0 0.0
  %v1669 = vand.u32 %v1183, 4294901760
  %v1670 = vsub.f32 %v1183, %v1669
  %1671 = vmatpush1.msra.mxu0 %v1670
  %1672 = vmatprep.subr.mxu0 0.0
  %v1673 = vand.u32 %v1184, 4294901760
  %v1674 = vsub.f32 %v1184, %v1673
  %1675 = vmatpush1.msra.mxu0 %v1674
  %1676 = vmatprep.subr.mxu0 0.0
  %v1677 = vand.u32 %v1185, 4294901760
  %v1678 = vsub.f32 %v1185, %v1677
  %1679 = vmatpush1.msra.mxu0 %v1678
  %1680 = vmatprep.subr.mxu0 0.0
  %v1681 = vand.u32 %v1186, 4294901760
  %v1682 = vsub.f32 %v1186, %v1681
  %1683 = vmatpush1.msra.mxu0 %v1682
  %1684 = vmatprep.subr.mxu0 0.0
  %v1685 = vand.u32 %v1187, 4294901760
  %v1686 = vsub.f32 %v1187, %v1685
  %1687 = vmatpush1.msra.mxu0 %v1686
  %1688 = vmatprep.subr.mxu0 0.0
  %v1689 = vand.u32 %v1188, 4294901760
  %v1690 = vsub.f32 %v1188, %v1689
  %1691 = vmatpush1.msra.mxu0 %v1690
  %1692 = vmatprep.subr.mxu0 0.0
  %v1693 = vand.u32 %v1189, 4294901760
  %v1694 = vsub.f32 %v1189, %v1693
  %1695 = vmatpush1.msra.mxu0 %v1694
  %1696 = vmatprep.subr.mxu0 0.0
  %v1697 = vand.u32 %v1190, 4294901760
  %v1698 = vsub.f32 %v1190, %v1697
  %1699 = vmatpush1.msra.mxu0 %v1698
  %1700 = vmatprep.subr.mxu0 0.0
  %v1701 = vand.u32 %v1191, 4294901760
  %v1702 = vsub.f32 %v1191, %v1701
  %1703 = vmatpush1.msra.mxu0 %v1702
  %1704 = vmatprep.subr.mxu0 0.0
  %v1705 = vand.u32 %v1192, 4294901760
  %v1706 = vsub.f32 %v1192, %v1705
  %1707 = vmatpush1.msra.mxu0 %v1706
  %1708 = vmatprep.subr.mxu0 0.0
  %v1709 = vand.u32 %v1193, 4294901760
  %v1710 = vsub.f32 %v1193, %v1709
  %1711 = vmatpush1.msra.mxu0 %v1710
  %1712 = vmatprep.subr.mxu0 0.0
  %v1713 = vand.u32 %v1194, 4294901760
  %v1714 = vsub.f32 %v1194, %v1713
  %1715 = vmatpush1.msra.mxu0 %v1714
  %1716 = vmatprep.subr.mxu0 0.0
  %v1717 = vand.u32 %v1195, 4294901760
  %v1718 = vsub.f32 %v1195, %v1717
  %1719 = vmatpush1.msra.mxu0 %v1718
  %1720 = vmatprep.subr.mxu0 0.0
  %v1721 = vand.u32 %v1196, 4294901760
  %v1722 = vsub.f32 %v1196, %v1721
  %1723 = vmatpush1.msra.mxu0 %v1722
  %1724 = vmatprep.subr.mxu0 0.0
  %v1725 = vand.u32 %v1197, 4294901760
  %v1726 = vsub.f32 %v1197, %v1725
  %1727 = vmatpush1.msra.mxu0 %v1726
  %1728 = vmatprep.subr.mxu0 0.0
  %v1729 = vand.u32 %v1198, 4294901760
  %v1730 = vsub.f32 %v1198, %v1729
  %1731 = vmatpush1.msra.mxu0 %v1730
  %1732 = vmatprep.subr.mxu0 0.0
  %v1733 = vand.u32 %v1199, 4294901760
  %v1734 = vsub.f32 %v1199, %v1733
  %1735 = vmatpush1.msra.mxu0 %v1734
  %1736 = vmatprep.subr.mxu0 0.0
  %v1737 = vand.u32 %v1200, 4294901760
  %v1738 = vsub.f32 %v1200, %v1737
  %1739 = vmatpush1.msra.mxu0 %v1738
  %1740 = vmatprep.subr.mxu0 0.0
  %v1741 = vand.u32 %v1201, 4294901760
  %v1742 = vsub.f32 %v1201, %v1741
  %1743 = vmatpush1.msra.mxu0 %v1742
  %1744 = vmatprep.subr.mxu0 0.0
  %v1745 = vand.u32 %v1202, 4294901760
  %v1746 = vsub.f32 %v1202, %v1745
  %1747 = vmatpush1.msra.mxu0 %v1746
  %1748 = vmatprep.subr.mxu0 0.0
  %v1749 = vand.u32 %v1203, 4294901760
  %v1750 = vsub.f32 %v1203, %v1749
  %1751 = vmatpush1.msra.mxu0 %v1750
  %1752 = vmatprep.subr.mxu0 0.0
  %v1753 = vand.u32 %v1204, 4294901760
  %v1754 = vsub.f32 %v1204, %v1753
  %1755 = vmatpush1.msra.mxu0 %v1754
  %1756 = vmatprep.subr.mxu0 0.0
  %v1757 = vand.u32 %v1205, 4294901760
  %v1758 = vsub.f32 %v1205, %v1757
  %1759 = vmatpush1.msra.mxu0 %v1758
  %1760 = vmatprep.subr.mxu0 0.0
  %v1761 = vand.u32 %v1206, 4294901760
  %v1762 = vsub.f32 %v1206, %v1761
  %1763 = vmatpush1.msra.mxu0 %v1762
  %1764 = vmatprep.subr.mxu0 0.0
  %v1765 = vand.u32 %v1207, 4294901760
  %v1766 = vsub.f32 %v1207, %v1765
  %1767 = vmatpush1.msra.mxu0 %v1766
  %1768 = vmatprep.subr.mxu0 0.0
  %v1769 = vand.u32 %v1208, 4294901760
  %v1770 = vsub.f32 %v1208, %v1769
  %1771 = vmatpush1.msra.mxu0 %v1770
  %1772 = vmatprep.subr.mxu0 0.0
  %v1773 = vand.u32 %v1209, 4294901760
  %v1774 = vsub.f32 %v1209, %v1773
  %1775 = vmatpush1.msra.mxu0 %v1774
  %1776 = vmatprep.subr.mxu0 0.0
  %v1777 = vand.u32 %v1210, 4294901760
  %v1778 = vsub.f32 %v1210, %v1777
  %1779 = vmatpush1.msra.mxu0 %v1778
  %1780 = vmatprep.subr.mxu0 0.0
  %v1781 = vand.u32 %v1211, 4294901760
  %v1782 = vsub.f32 %v1211, %v1781
  %1783 = vmatpush1.msra.mxu0 %v1782
  %1784 = vmatprep.subr.mxu0 0.0
  %v1785 = vand.u32 %v1212, 4294901760
  %v1786 = vsub.f32 %v1212, %v1785
  %1787 = vmatpush1.msra.mxu0 %v1786
  %v1788 = vand.u32 %v1093, 4294901760
  %v1789 = vsub.f32 %v1093, %v1788
  %1790 = vmatprep.mubr.f32.mxu0 %v1789
  %v1791 = vand.u32 %v1079, 4294901760
  %v1792 = vsub.f32 %v1079, %v1791
  %1793 = vmatmul.mubr.f32.gmra.mrb[0].mxu0 %v1792
  %v1794 = vpop.f32.mrb[0].mxu0
  %v1795 = vadd.f32 %v1657, %v1794
  %v1796 = vpop.f32.mrb[0].mxu0
  %1797 = vdwg.mxu0
  %1798 = vmatprep.subr.mxu0 0.0
  %v1799 = vand.u32 %v1181, 4294901760
  %1800 = vmatpush1.msra.mxu0 %v1799
  %1801 = vmatprep.subr.mxu0 0.0
  %v1802 = vand.u32 %v1182, 4294901760
  %1803 = vmatpush1.msra.mxu0 %v1802
  %1804 = vmatprep.subr.mxu0 0.0
  %v1805 = vand.u32 %v1183, 4294901760
  %1806 = vmatpush1.msra.mxu0 %v1805
  %1807 = vmatprep.subr.mxu0 0.0
  %v1808 = vand.u32 %v1184, 4294901760
  %1809 = vmatpush1.msra.mxu0 %v1808
  %1810 = vmatprep.subr.mxu0 0.0
  %v1811 = vand.u32 %v1185, 4294901760
  %1812 = vmatpush1.msra.mxu0 %v1811
  %1813 = vmatprep.subr.mxu0 0.0
  %v1814 = vand.u32 %v1186, 4294901760
  %1815 = vmatpush1.msra.mxu0 %v1814
  %1816 = vmatprep.subr.mxu0 0.0
  %v1817 = vand.u32 %v1187, 4294901760
  %1818 = vmatpush1.msra.mxu0 %v1817
  %1819 = vmatprep.subr.mxu0 0.0
  %v1820 = vand.u32 %v1188, 4294901760
  %1821 = vmatpush1.msra.mxu0 %v1820
  %1822 = vmatprep.subr.mxu0 0.0
  %v1823 = vand.u32 %v1189, 4294901760
  %1824 = vmatpush1.msra.mxu0 %v1823
  %1825 = vmatprep.subr.mxu0 0.0
  %v1826 = vand.u32 %v1190, 4294901760
  %1827 = vmatpush1.msra.mxu0 %v1826
  %1828 = vmatprep.subr.mxu0 0.0
  %v1829 = vand.u32 %v1191, 4294901760
  %1830 = vmatpush1.msra.mxu0 %v1829
  %1831 = vmatprep.subr.mxu0 0.0
  %v1832 = vand.u32 %v1192, 4294901760
  %1833 = vmatpush1.msra.mxu0 %v1832
  %1834 = vmatprep.subr.mxu0 0.0
  %v1835 = vand.u32 %v1193, 4294901760
  %1836 = vmatpush1.msra.mxu0 %v1835
  %1837 = vmatprep.subr.mxu0 0.0
  %v1838 = vand.u32 %v1194, 4294901760
  %1839 = vmatpush1.msra.mxu0 %v1838
  %1840 = vmatprep.subr.mxu0 0.0
  %v1841 = vand.u32 %v1195, 4294901760
  %1842 = vmatpush1.msra.mxu0 %v1841
  %1843 = vmatprep.subr.mxu0 0.0
  %v1844 = vand.u32 %v1196, 4294901760
  %1845 = vmatpush1.msra.mxu0 %v1844
  %1846 = vmatprep.subr.mxu0 0.0
  %v1847 = vand.u32 %v1197, 4294901760
  %1848 = vmatpush1.msra.mxu0 %v1847
  %1849 = vmatprep.subr.mxu0 0.0
  %v1850 = vand.u32 %v1198, 4294901760
  %1851 = vmatpush1.msra.mxu0 %v1850
  %1852 = vmatprep.subr.mxu0 0.0
  %v1853 = vand.u32 %v1199, 4294901760
  %1854 = vmatpush1.msra.mxu0 %v1853
  %1855 = vmatprep.subr.mxu0 0.0
  %v1856 = vand.u32 %v1200, 4294901760
  %1857 = vmatpush1.msra.mxu0 %v1856
  %1858 = vmatprep.subr.mxu0 0.0
  %v1859 = vand.u32 %v1201, 4294901760
  %1860 = vmatpush1.msra.mxu0 %v1859
  %1861 = vmatprep.subr.mxu0 0.0
  %v1862 = vand.u32 %v1202, 4294901760
  %1863 = vmatpush1.msra.mxu0 %v1862
  %1864 = vmatprep.subr.mxu0 0.0
  %v1865 = vand.u32 %v1203, 4294901760
  %1866 = vmatpush1.msra.mxu0 %v1865
  %1867 = vmatprep.subr.mxu0 0.0
  %v1868 = vand.u32 %v1204, 4294901760
  %1869 = vmatpush1.msra.mxu0 %v1868
  %1870 = vmatprep.subr.mxu0 0.0
  %v1871 = vand.u32 %v1205, 4294901760
  %1872 = vmatpush1.msra.mxu0 %v1871
  %1873 = vmatprep.subr.mxu0 0.0
  %v1874 = vand.u32 %v1206, 4294901760
  %1875 = vmatpush1.msra.mxu0 %v1874
  %1876 = vmatprep.subr.mxu0 0.0
  %v1877 = vand.u32 %v1207, 4294901760
  %1878 = vmatpush1.msra.mxu0 %v1877
  %1879 = vmatprep.subr.mxu0 0.0
  %v1880 = vand.u32 %v1208, 4294901760
  %1881 = vmatpush1.msra.mxu0 %v1880
  %1882 = vmatprep.subr.mxu0 0.0
  %v1883 = vand.u32 %v1209, 4294901760
  %1884 = vmatpush1.msra.mxu0 %v1883
  %1885 = vmatprep.subr.mxu0 0.0
  %v1886 = vand.u32 %v1210, 4294901760
  %1887 = vmatpush1.msra.mxu0 %v1886
  %1888 = vmatprep.subr.mxu0 0.0
  %v1889 = vand.u32 %v1211, 4294901760
  %1890 = vmatpush1.msra.mxu0 %v1889
  %1891 = vmatprep.subr.mxu0 0.0
  %v1892 = vand.u32 %v1212, 4294901760
  %1893 = vmatpush1.msra.mxu0 %v1892
  %v1894 = vand.u32 %v1093, 4294901760
  %v1895 = vsub.f32 %v1093, %v1894
  %v1896 = vand.u32 %v1895, 4294901760
  %1897 = vmatprep.mubr.f32.mxu0 %v1896
  %v1898 = vand.u32 %v1079, 4294901760
  %v1899 = vsub.f32 %v1079, %v1898
  %v1900 = vand.u32 %v1899, 4294901760
  %1901 = vmatmul.mubr.f32.gmra.mrb[0].mxu0 %v1900
  %v1902 = vpop.f32.mrb[0].mxu0
  %v1903 = vadd.f32 %v1795, %v1902
  %v1904 = vpop.f32.mrb[0].mxu0
  %1905 = vdwg.mxu0
  %1906 = vmatprep.subr.mxu0 0.0
  %v1907 = vand.u32 %v1181, 4294901760
  %v1908 = vsub.f32 %v1181, %v1907
  %v1909 = vand.u32 %v1908, 4294901760
  %1910 = vmatpush1.msra.mxu0 %v1909
  %1911 = vmatprep.subr.mxu0 0.0
  %v1912 = vand.u32 %v1182, 4294901760
  %v1913 = vsub.f32 %v1182, %v1912
  %v1914 = vand.u32 %v1913, 4294901760
  %1915 = vmatpush1.msra.mxu0 %v1914
  %1916 = vmatprep.subr.mxu0 0.0
  %v1917 = vand.u32 %v1183, 4294901760
  %v1918 = vsub.f32 %v1183, %v1917
  %v1919 = vand.u32 %v1918, 4294901760
  %1920 = vmatpush1.msra.mxu0 %v1919
  %1921 = vmatprep.subr.mxu0 0.0
  %v1922 = vand.u32 %v1184, 4294901760
  %v1923 = vsub.f32 %v1184, %v1922
  %v1924 = vand.u32 %v1923, 4294901760
  %1925 = vmatpush1.msra.mxu0 %v1924
  %1926 = vmatprep.subr.mxu0 0.0
  %v1927 = vand.u32 %v1185, 4294901760
  %v1928 = vsub.f32 %v1185, %v1927
  %v1929 = vand.u32 %v1928, 4294901760
  %1930 = vmatpush1.msra.mxu0 %v1929
  %1931 = vmatprep.subr.mxu0 0.0
  %v1932 = vand.u32 %v1186, 4294901760
  %v1933 = vsub.f32 %v1186, %v1932
  %v1934 = vand.u32 %v1933, 4294901760
  %1935 = vmatpush1.msra.mxu0 %v1934
  %1936 = vmatprep.subr.mxu0 0.0
  %v1937 = vand.u32 %v1187, 4294901760
  %v1938 = vsub.f32 %v1187, %v1937
  %v1939 = vand.u32 %v1938, 4294901760
  %1940 = vmatpush1.msra.mxu0 %v1939
  %1941 = vmatprep.subr.mxu0 0.0
  %v1942 = vand.u32 %v1188, 4294901760
  %v1943 = vsub.f32 %v1188, %v1942
  %v1944 = vand.u32 %v1943, 4294901760
  %1945 = vmatpush1.msra.mxu0 %v1944
  %1946 = vmatprep.subr.mxu0 0.0
  %v1947 = vand.u32 %v1189, 4294901760
  %v1948 = vsub.f32 %v1189, %v1947
  %v1949 = vand.u32 %v1948, 4294901760
  %1950 = vmatpush1.msra.mxu0 %v1949
  %1951 = vmatprep.subr.mxu0 0.0
  %v1952 = vand.u32 %v1190, 4294901760
  %v1953 = vsub.f32 %v1190, %v1952
  %v1954 = vand.u32 %v1953, 4294901760
  %1955 = vmatpush1.msra.mxu0 %v1954
  %1956 = vmatprep.subr.mxu0 0.0
  %v1957 = vand.u32 %v1191, 4294901760
  %v1958 = vsub.f32 %v1191, %v1957
  %v1959 = vand.u32 %v1958, 4294901760
  %1960 = vmatpush1.msra.mxu0 %v1959
  %1961 = vmatprep.subr.mxu0 0.0
  %v1962 = vand.u32 %v1192, 4294901760
  %v1963 = vsub.f32 %v1192, %v1962
  %v1964 = vand.u32 %v1963, 4294901760
  %1965 = vmatpush1.msra.mxu0 %v1964
  %1966 = vmatprep.subr.mxu0 0.0
  %v1967 = vand.u32 %v1193, 4294901760
  %v1968 = vsub.f32 %v1193, %v1967
  %v1969 = vand.u32 %v1968, 4294901760
  %1970 = vmatpush1.msra.mxu0 %v1969
  %1971 = vmatprep.subr.mxu0 0.0
  %v1972 = vand.u32 %v1194, 4294901760
  %v1973 = vsub.f32 %v1194, %v1972
  %v1974 = vand.u32 %v1973, 4294901760
  %1975 = vmatpush1.msra.mxu0 %v1974
  %1976 = vmatprep.subr.mxu0 0.0
  %v1977 = vand.u32 %v1195, 4294901760
  %v1978 = vsub.f32 %v1195, %v1977
  %v1979 = vand.u32 %v1978, 4294901760
  %1980 = vmatpush1.msra.mxu0 %v1979
  %1981 = vmatprep.subr.mxu0 0.0
  %v1982 = vand.u32 %v1196, 4294901760
  %v1983 = vsub.f32 %v1196, %v1982
  %v1984 = vand.u32 %v1983, 4294901760
  %1985 = vmatpush1.msra.mxu0 %v1984
  %1986 = vmatprep.subr.mxu0 0.0
  %v1987 = vand.u32 %v1197, 4294901760
  %v1988 = vsub.f32 %v1197, %v1987
  %v1989 = vand.u32 %v1988, 4294901760
  %1990 = vmatpush1.msra.mxu0 %v1989
  %1991 = vmatprep.subr.mxu0 0.0
  %v1992 = vand.u32 %v1198, 4294901760
  %v1993 = vsub.f32 %v1198, %v1992
  %v1994 = vand.u32 %v1993, 4294901760
  %1995 = vmatpush1.msra.mxu0 %v1994
  %1996 = vmatprep.subr.mxu0 0.0
  %v1997 = vand.u32 %v1199, 4294901760
  %v1998 = vsub.f32 %v1199, %v1997
  %v1999 = vand.u32 %v1998, 4294901760
  %2000 = vmatpush1.msra.mxu0 %v1999
  %2001 = vmatprep.subr.mxu0 0.0
  %v2002 = vand.u32 %v1200, 4294901760
  %v2003 = vsub.f32 %v1200, %v2002
  %v2004 = vand.u32 %v2003, 4294901760
  %2005 = vmatpush1.msra.mxu0 %v2004
  %2006 = vmatprep.subr.mxu0 0.0
  %v2007 = vand.u32 %v1201, 4294901760
  %v2008 = vsub.f32 %v1201, %v2007
  %v2009 = vand.u32 %v2008, 4294901760
  %2010 = vmatpush1.msra.mxu0 %v2009
  %2011 = vmatprep.subr.mxu0 0.0
  %v2012 = vand.u32 %v1202, 4294901760
  %v2013 = vsub.f32 %v1202, %v2012
  %v2014 = vand.u32 %v2013, 4294901760
  %2015 = vmatpush1.msra.mxu0 %v2014
  %2016 = vmatprep.subr.mxu0 0.0
  %v2017 = vand.u32 %v1203, 4294901760
  %v2018 = vsub.f32 %v1203, %v2017
  %v2019 = vand.u32 %v2018, 4294901760
  %2020 = vmatpush1.msra.mxu0 %v2019
  %2021 = vmatprep.subr.mxu0 0.0
  %v2022 = vand.u32 %v1204, 4294901760
  %v2023 = vsub.f32 %v1204, %v2022
  %v2024 = vand.u32 %v2023, 4294901760
  %2025 = vmatpush1.msra.mxu0 %v2024
  %2026 = vmatprep.subr.mxu0 0.0
  %v2027 = vand.u32 %v1205, 4294901760
  %v2028 = vsub.f32 %v1205, %v2027
  %v2029 = vand.u32 %v2028, 4294901760
  %2030 = vmatpush1.msra.mxu0 %v2029
  %2031 = vmatprep.subr.mxu0 0.0
  %v2032 = vand.u32 %v1206, 4294901760
  %v2033 = vsub.f32 %v1206, %v2032
  %v2034 = vand.u32 %v2033, 4294901760
  %2035 = vmatpush1.msra.mxu0 %v2034
  %2036 = vmatprep.subr.mxu0 0.0
  %v2037 = vand.u32 %v1207, 4294901760
  %v2038 = vsub.f32 %v1207, %v2037
  %v2039 = vand.u32 %v2038, 4294901760
  %2040 = vmatpush1.msra.mxu0 %v2039
  %2041 = vmatprep.subr.mxu0 0.0
  %v2042 = vand.u32 %v1208, 4294901760
  %v2043 = vsub.f32 %v1208, %v2042
  %v2044 = vand.u32 %v2043, 4294901760
  %2045 = vmatpush1.msra.mxu0 %v2044
  %2046 = vmatprep.subr.mxu0 0.0
  %v2047 = vand.u32 %v1209, 4294901760
  %v2048 = vsub.f32 %v1209, %v2047
  %v2049 = vand.u32 %v2048, 4294901760
  %2050 = vmatpush1.msra.mxu0 %v2049
  %2051 = vmatprep.subr.mxu0 0.0
  %v2052 = vand.u32 %v1210, 4294901760
  %v2053 = vsub.f32 %v1210, %v2052
  %v2054 = vand.u32 %v2053, 4294901760
  %2055 = vmatpush1.msra.mxu0 %v2054
  %2056 = vmatprep.subr.mxu0 0.0
  %v2057 = vand.u32 %v1211, 4294901760
  %v2058 = vsub.f32 %v1211, %v2057
  %v2059 = vand.u32 %v2058, 4294901760
  %2060 = vmatpush1.msra.mxu0 %v2059
  %2061 = vmatprep.subr.mxu0 0.0
  %v2062 = vand.u32 %v1212, 4294901760
  %v2063 = vsub.f32 %v1212, %v2062
  %v2064 = vand.u32 %v2063, 4294901760
  %2065 = vmatpush1.msra.mxu0 %v2064
  %v2066 = vand.u32 %v1093, 4294901760
  %2067 = vmatprep.mubr.f32.mxu0 %v2066
  %v2068 = vand.u32 %v1079, 4294901760
  %2069 = vmatmul.mubr.f32.gmra.mrb[0].mxu0 %v2068
  %v2070 = vpop.f32.mrb[0].mxu0
  %v2071 = vadd.f32 %v1903, %v2070
  %v2072 = vpop.f32.mrb[0].mxu0
  %2073 = vdwg.mxu0
  %2074 = vmatprep.subr.mxu0 0.0
  %v2075 = vand.u32 %v1181, 4294901760
  %2076 = vmatpush1.msra.mxu0 %v2075
  %2077 = vmatprep.subr.mxu0 0.0
  %v2078 = vand.u32 %v1182, 4294901760
  %2079 = vmatpush1.msra.mxu0 %v2078
  %2080 = vmatprep.subr.mxu0 0.0
  %v2081 = vand.u32 %v1183, 4294901760
  %2082 = vmatpush1.msra.mxu0 %v2081
  %2083 = vmatprep.subr.mxu0 0.0
  %v2084 = vand.u32 %v1184, 4294901760
  %2085 = vmatpush1.msra.mxu0 %v2084
  %2086 = vmatprep.subr.mxu0 0.0
  %v2087 = vand.u32 %v1185, 4294901760
  %2088 = vmatpush1.msra.mxu0 %v2087
  %2089 = vmatprep.subr.mxu0 0.0
  %v2090 = vand.u32 %v1186, 4294901760
  %2091 = vmatpush1.msra.mxu0 %v2090
  %2092 = vmatprep.subr.mxu0 0.0
  %v2093 = vand.u32 %v1187, 4294901760
  %2094 = vmatpush1.msra.mxu0 %v2093
  %2095 = vmatprep.subr.mxu0 0.0
  %v2096 = vand.u32 %v1188, 4294901760
  %2097 = vmatpush1.msra.mxu0 %v2096
  %2098 = vmatprep.subr.mxu0 0.0
  %v2099 = vand.u32 %v1189, 4294901760
  %2100 = vmatpush1.msra.mxu0 %v2099
  %2101 = vmatprep.subr.mxu0 0.0
  %v2102 = vand.u32 %v1190, 4294901760
  %2103 = vmatpush1.msra.mxu0 %v2102
  %2104 = vmatprep.subr.mxu0 0.0
  %v2105 = vand.u32 %v1191, 4294901760
  %2106 = vmatpush1.msra.mxu0 %v2105
  %2107 = vmatprep.subr.mxu0 0.0
  %v2108 = vand.u32 %v1192, 4294901760
  %2109 = vmatpush1.msra.mxu0 %v2108
  %2110 = vmatprep.subr.mxu0 0.0
  %v2111 = vand.u32 %v1193, 4294901760
  %2112 = vmatpush1.msra.mxu0 %v2111
  %2113 = vmatprep.subr.mxu0 0.0
  %v2114 = vand.u32 %v1194, 4294901760
  %2115 = vmatpush1.msra.mxu0 %v2114
  %2116 = vmatprep.subr.mxu0 0.0
  %v2117 = vand.u32 %v1195, 4294901760
  %2118 = vmatpush1.msra.mxu0 %v2117
  %2119 = vmatprep.subr.mxu0 0.0
  %v2120 = vand.u32 %v1196, 4294901760
  %2121 = vmatpush1.msra.mxu0 %v2120
  %2122 = vmatprep.subr.mxu0 0.0
  %v2123 = vand.u32 %v1197, 4294901760
  %2124 = vmatpush1.msra.mxu0 %v2123
  %2125 = vmatprep.subr.mxu0 0.0
  %v2126 = vand.u32 %v1198, 4294901760
  %2127 = vmatpush1.msra.mxu0 %v2126
  %2128 = vmatprep.subr.mxu0 0.0
  %v2129 = vand.u32 %v1199, 4294901760
  %2130 = vmatpush1.msra.mxu0 %v2129
  %2131 = vmatprep.subr.mxu0 0.0
  %v2132 = vand.u32 %v1200, 4294901760
  %2133 = vmatpush1.msra.mxu0 %v2132
  %2134 = vmatprep.subr.mxu0 0.0
  %v2135 = vand.u32 %v1201, 4294901760
  %2136 = vmatpush1.msra.mxu0 %v2135
  %2137 = vmatprep.subr.mxu0 0.0
  %v2138 = vand.u32 %v1202, 4294901760
  %2139 = vmatpush1.msra.mxu0 %v2138
  %2140 = vmatprep.subr.mxu0 0.0
  %v2141 = vand.u32 %v1203, 4294901760
  %2142 = vmatpush1.msra.mxu0 %v2141
  %2143 = vmatprep.subr.mxu0 0.0
  %v2144 = vand.u32 %v1204, 4294901760
  %2145 = vmatpush1.msra.mxu0 %v2144
  %2146 = vmatprep.subr.mxu0 0.0
  %v2147 = vand.u32 %v1205, 4294901760
  %2148 = vmatpush1.msra.mxu0 %v2147
  %2149 = vmatprep.subr.mxu0 0.0
  %v2150 = vand.u32 %v1206, 4294901760
  %2151 = vmatpush1.msra.mxu0 %v2150
  %2152 = vmatprep.subr.mxu0 0.0
  %v2153 = vand.u32 %v1207, 4294901760
  %2154 = vmatpush1.msra.mxu0 %v2153
  %2155 = vmatprep.subr.mxu0 0.0
  %v2156 = vand.u32 %v1208, 4294901760
  %2157 = vmatpush1.msra.mxu0 %v2156
  %2158 = vmatprep.subr.mxu0 0.0
  %v2159 = vand.u32 %v1209, 4294901760
  %2160 = vmatpush1.msra.mxu0 %v2159
  %2161 = vmatprep.subr.mxu0 0.0
  %v2162 = vand.u32 %v1210, 4294901760
  %2163 = vmatpush1.msra.mxu0 %v2162
  %2164 = vmatprep.subr.mxu0 0.0
  %v2165 = vand.u32 %v1211, 4294901760
  %2166 = vmatpush1.msra.mxu0 %v2165
  %2167 = vmatprep.subr.mxu0 0.0
  %v2168 = vand.u32 %v1212, 4294901760
  %2169 = vmatpush1.msra.mxu0 %v2168
  %v2170 = vand.u32 %v1093, 4294901760
  %2171 = vmatprep.mubr.f32.mxu0 %v2170
  %v2172 = vand.u32 %v1079, 4294901760
  %2173 = vmatmul.mubr.f32.gmra.mrb[0].mxu0 %v2172
  %v2174 = vpop.f32.mrb[0].mxu0
  %v2175 = vadd.f32 %v2071, %v2174
  %v2176 = vpop.f32.mrb[0].mxu0
  %2177 = vdwg.mxu0
  %2178 = vmatprep.subr.mxu0 0.0
  %v2179 = vand.u32 %v1213, 4294901760
  %2180 = vmatpush1.msra.mxu0 %v2179
  %2181 = vmatprep.subr.mxu0 0.0
  %v2182 = vand.u32 %v1214, 4294901760
  %2183 = vmatpush1.msra.mxu0 %v2182
  %2184 = vmatprep.subr.mxu0 0.0
  %v2185 = vand.u32 %v1215, 4294901760
  %2186 = vmatpush1.msra.mxu0 %v2185
  %2187 = vmatprep.subr.mxu0 0.0
  %v2188 = vand.u32 %v1216, 4294901760
  %2189 = vmatpush1.msra.mxu0 %v2188
  %2190 = vmatprep.subr.mxu0 0.0
  %v2191 = vand.u32 %v1217, 4294901760
  %2192 = vmatpush1.msra.mxu0 %v2191
  %2193 = vmatprep.subr.mxu0 0.0
  %v2194 = vand.u32 %v1218, 4294901760
  %2195 = vmatpush1.msra.mxu0 %v2194
  %2196 = vmatprep.subr.mxu0 0.0
  %v2197 = vand.u32 %v1219, 4294901760
  %2198 = vmatpush1.msra.mxu0 %v2197
  %2199 = vmatprep.subr.mxu0 0.0
  %v2200 = vand.u32 %v1220, 4294901760
  %2201 = vmatpush1.msra.mxu0 %v2200
  %2202 = vmatprep.subr.mxu0 0.0
  %v2203 = vand.u32 %v1221, 4294901760
  %2204 = vmatpush1.msra.mxu0 %v2203
  %2205 = vmatprep.subr.mxu0 0.0
  %v2206 = vand.u32 %v1222, 4294901760
  %2207 = vmatpush1.msra.mxu0 %v2206
  %2208 = vmatprep.subr.mxu0 0.0
  %v2209 = vand.u32 %v1223, 4294901760
  %2210 = vmatpush1.msra.mxu0 %v2209
  %2211 = vmatprep.subr.mxu0 0.0
  %v2212 = vand.u32 %v1224, 4294901760
  %2213 = vmatpush1.msra.mxu0 %v2212
  %2214 = vmatprep.subr.mxu0 0.0
  %v2215 = vand.u32 %v1225, 4294901760
  %2216 = vmatpush1.msra.mxu0 %v2215
  %2217 = vmatprep.subr.mxu0 0.0
  %v2218 = vand.u32 %v1226, 4294901760
  %2219 = vmatpush1.msra.mxu0 %v2218
  %2220 = vmatprep.subr.mxu0 0.0
  %v2221 = vand.u32 %v1227, 4294901760
  %2222 = vmatpush1.msra.mxu0 %v2221
  %2223 = vmatprep.subr.mxu0 0.0
  %v2224 = vand.u32 %v1228, 4294901760
  %2225 = vmatpush1.msra.mxu0 %v2224
  %2226 = vmatprep.subr.mxu0 0.0
  %v2227 = vand.u32 %v1229, 4294901760
  %2228 = vmatpush1.msra.mxu0 %v2227
  %2229 = vmatprep.subr.mxu0 0.0
  %v2230 = vand.u32 %v1230, 4294901760
  %2231 = vmatpush1.msra.mxu0 %v2230
  %2232 = vmatprep.subr.mxu0 0.0
  %v2233 = vand.u32 %v1231, 4294901760
  %2234 = vmatpush1.msra.mxu0 %v2233
  %2235 = vmatprep.subr.mxu0 0.0
  %v2236 = vand.u32 %v1232, 4294901760
  %2237 = vmatpush1.msra.mxu0 %v2236
  %2238 = vmatprep.subr.mxu0 0.0
  %v2239 = vand.u32 %v1233, 4294901760
  %2240 = vmatpush1.msra.mxu0 %v2239
  %2241 = vmatprep.subr.mxu0 0.0
  %v2242 = vand.u32 %v1234, 4294901760
  %2243 = vmatpush1.msra.mxu0 %v2242
  %2244 = vmatprep.subr.mxu0 0.0
  %v2245 = vand.u32 %v1235, 4294901760
  %2246 = vmatpush1.msra.mxu0 %v2245
  %2247 = vmatprep.subr.mxu0 0.0
  %v2248 = vand.u32 %v1236, 4294901760
  %2249 = vmatpush1.msra.mxu0 %v2248
  %2250 = vmatprep.subr.mxu0 0.0
  %v2251 = vand.u32 %v1237, 4294901760
  %2252 = vmatpush1.msra.mxu0 %v2251
  %2253 = vmatprep.subr.mxu0 0.0
  %v2254 = vand.u32 %v1238, 4294901760
  %2255 = vmatpush1.msra.mxu0 %v2254
  %2256 = vmatprep.subr.mxu0 0.0
  %v2257 = vand.u32 %v1239, 4294901760
  %2258 = vmatpush1.msra.mxu0 %v2257
  %2259 = vmatprep.subr.mxu0 0.0
  %v2260 = vand.u32 %v1240, 4294901760
  %2261 = vmatpush1.msra.mxu0 %v2260
  %2262 = vmatprep.subr.mxu0 0.0
  %v2263 = vand.u32 %v1241, 4294901760
  %2264 = vmatpush1.msra.mxu0 %v2263
  %2265 = vmatprep.subr.mxu0 0.0
  %v2266 = vand.u32 %v1242, 4294901760
  %2267 = vmatpush1.msra.mxu0 %v2266
  %2268 = vmatprep.subr.mxu0 0.0
  %v2269 = vand.u32 %v1243, 4294901760
  %2270 = vmatpush1.msra.mxu0 %v2269
  %2271 = vmatprep.subr.mxu0 0.0
  %v2272 = vand.u32 %v1244, 4294901760
  %2273 = vmatpush1.msra.mxu0 %v2272
  %v2274 = vand.u32 %v1121, 4294901760
  %v2275 = vsub.f32 %v1121, %v2274
  %v2276 = vand.u32 %v2275, 4294901760
  %v2277 = vsub.f32 %v2275, %v2276
  %v2278 = vand.u32 %v2277, 4294901760
  %2279 = vmatprep.mubr.f32.mxu0 %v2278
  %v2280 = vand.u32 %v1107, 4294901760
  %v2281 = vsub.f32 %v1107, %v2280
  %v2282 = vand.u32 %v2281, 4294901760
  %v2283 = vsub.f32 %v2281, %v2282
  %v2284 = vand.u32 %v2283, 4294901760
  %2285 = vmatmul.mubr.f32.gmra.mrb[0].mxu0 %v2284
  %v2286 = vpop.f32.mrb[0].mxu0
  %v2287 = vadd.f32 %v2175, %v2286
  %v2288 = vpop.f32.mrb[0].mxu0
  %2289 = vdwg.mxu0
  %2290 = vmatprep.subr.mxu0 0.0
  %v2291 = vand.u32 %v1213, 4294901760
  %v2292 = vsub.f32 %v1213, %v2291
  %v2293 = vand.u32 %v2292, 4294901760
  %v2294 = vsub.f32 %v2292, %v2293
  %v2295 = vand.u32 %v2294, 4294901760
  %2296 = vmatpush1.msra.mxu0 %v2295
  %2297 = vmatprep.subr.mxu0 0.0
  %v2298 = vand.u32 %v1214, 4294901760
  %v2299 = vsub.f32 %v1214, %v2298
  %v2300 = vand.u32 %v2299, 4294901760
  %v2301 = vsub.f32 %v2299, %v2300
  %v2302 = vand.u32 %v2301, 4294901760
  %2303 = vmatpush1.msra.mxu0 %v2302
  %2304 = vmatprep.subr.mxu0 0.0
  %v2305 = vand.u32 %v1215, 4294901760
  %v2306 = vsub.f32 %v1215, %v2305
  %v2307 = vand.u32 %v2306, 4294901760
  %v2308 = vsub.f32 %v2306, %v2307
  %v2309 = vand.u32 %v2308, 4294901760
  %2310 = vmatpush1.msra.mxu0 %v2309
  %2311 = vmatprep.subr.mxu0 0.0
  %v2312 = vand.u32 %v1216, 4294901760
  %v2313 = vsub.f32 %v1216, %v2312
  %v2314 = vand.u32 %v2313, 4294901760
  %v2315 = vsub.f32 %v2313, %v2314
  %v2316 = vand.u32 %v2315, 4294901760
  %2317 = vmatpush1.msra.mxu0 %v2316
  %2318 = vmatprep.subr.mxu0 0.0
  %v2319 = vand.u32 %v1217, 4294901760
  %v2320 = vsub.f32 %v1217, %v2319
  %v2321 = vand.u32 %v2320, 4294901760
  %v2322 = vsub.f32 %v2320, %v2321
  %v2323 = vand.u32 %v2322, 4294901760
  %2324 = vmatpush1.msra.mxu0 %v2323
  %2325 = vmatprep.subr.mxu0 0.0
  %v2326 = vand.u32 %v1218, 4294901760
  %v2327 = vsub.f32 %v1218, %v2326
  %v2328 = vand.u32 %v2327, 4294901760
  %v2329 = vsub.f32 %v2327, %v2328
  %v2330 = vand.u32 %v2329, 4294901760
  %2331 = vmatpush1.msra.mxu0 %v2330
  %2332 = vmatprep.subr.mxu0 0.0
  %v2333 = vand.u32 %v1219, 4294901760
  %v2334 = vsub.f32 %v1219, %v2333
  %v2335 = vand.u32 %v2334, 4294901760
  %v2336 = vsub.f32 %v2334, %v2335
  %v2337 = vand.u32 %v2336, 4294901760
  %2338 = vmatpush1.msra.mxu0 %v2337
  %2339 = vmatprep.subr.mxu0 0.0
  %v2340 = vand.u32 %v1220, 4294901760
  %v2341 = vsub.f32 %v1220, %v2340
  %v2342 = vand.u32 %v2341, 4294901760
  %v2343 = vsub.f32 %v2341, %v2342
  %v2344 = vand.u32 %v2343, 4294901760
  %2345 = vmatpush1.msra.mxu0 %v2344
  %2346 = vmatprep.subr.mxu0 0.0
  %v2347 = vand.u32 %v1221, 4294901760
  %v2348 = vsub.f32 %v1221, %v2347
  %v2349 = vand.u32 %v2348, 4294901760
  %v2350 = vsub.f32 %v2348, %v2349
  %v2351 = vand.u32 %v2350, 4294901760
  %2352 = vmatpush1.msra.mxu0 %v2351
  %2353 = vmatprep.subr.mxu0 0.0
  %v2354 = vand.u32 %v1222, 4294901760
  %v2355 = vsub.f32 %v1222, %v2354
  %v2356 = vand.u32 %v2355, 4294901760
  %v2357 = vsub.f32 %v2355, %v2356
  %v2358 = vand.u32 %v2357, 4294901760
  %2359 = vmatpush1.msra.mxu0 %v2358
  %2360 = vmatprep.subr.mxu0 0.0
  %v2361 = vand.u32 %v1223, 4294901760
  %v2362 = vsub.f32 %v1223, %v2361
  %v2363 = vand.u32 %v2362, 4294901760
  %v2364 = vsub.f32 %v2362, %v2363
  %v2365 = vand.u32 %v2364, 4294901760
  %2366 = vmatpush1.msra.mxu0 %v2365
  %2367 = vmatprep.subr.mxu0 0.0
  %v2368 = vand.u32 %v1224, 4294901760
  %v2369 = vsub.f32 %v1224, %v2368
  %v2370 = vand.u32 %v2369, 4294901760
  %v2371 = vsub.f32 %v2369, %v2370
  %v2372 = vand.u32 %v2371, 4294901760
  %2373 = vmatpush1.msra.mxu0 %v2372
  %2374 = vmatprep.subr.mxu0 0.0
  %v2375 = vand.u32 %v1225, 4294901760
  %v2376 = vsub.f32 %v1225, %v2375
  %v2377 = vand.u32 %v2376, 4294901760
  %v2378 = vsub.f32 %v2376, %v2377
  %v2379 = vand.u32 %v2378, 4294901760
  %2380 = vmatpush1.msra.mxu0 %v2379
  %2381 = vmatprep.subr.mxu0 0.0
  %v2382 = vand.u32 %v1226, 4294901760
  %v2383 = vsub.f32 %v1226, %v2382
  %v2384 = vand.u32 %v2383, 4294901760
  %v2385 = vsub.f32 %v2383, %v2384
  %v2386 = vand.u32 %v2385, 4294901760
  %2387 = vmatpush1.msra.mxu0 %v2386
  %2388 = vmatprep.subr.mxu0 0.0
  %v2389 = vand.u32 %v1227, 4294901760
  %v2390 = vsub.f32 %v1227, %v2389
  %v2391 = vand.u32 %v2390, 4294901760
  %v2392 = vsub.f32 %v2390, %v2391
  %v2393 = vand.u32 %v2392, 4294901760
  %2394 = vmatpush1.msra.mxu0 %v2393
  %2395 = vmatprep.subr.mxu0 0.0
  %v2396 = vand.u32 %v1228, 4294901760
  %v2397 = vsub.f32 %v1228, %v2396
  %v2398 = vand.u32 %v2397, 4294901760
  %v2399 = vsub.f32 %v2397, %v2398
  %v2400 = vand.u32 %v2399, 4294901760
  %2401 = vmatpush1.msra.mxu0 %v2400
  %2402 = vmatprep.subr.mxu0 0.0
  %v2403 = vand.u32 %v1229, 4294901760
  %v2404 = vsub.f32 %v1229, %v2403
  %v2405 = vand.u32 %v2404, 4294901760
  %v2406 = vsub.f32 %v2404, %v2405
  %v2407 = vand.u32 %v2406, 4294901760
  %2408 = vmatpush1.msra.mxu0 %v2407
  %2409 = vmatprep.subr.mxu0 0.0
  %v2410 = vand.u32 %v1230, 4294901760
  %v2411 = vsub.f32 %v1230, %v2410
  %v2412 = vand.u32 %v2411, 4294901760
  %v2413 = vsub.f32 %v2411, %v2412
  %v2414 = vand.u32 %v2413, 4294901760
  %2415 = vmatpush1.msra.mxu0 %v2414
  %2416 = vmatprep.subr.mxu0 0.0
  %v2417 = vand.u32 %v1231, 4294901760
  %v2418 = vsub.f32 %v1231, %v2417
  %v2419 = vand.u32 %v2418, 4294901760
  %v2420 = vsub.f32 %v2418, %v2419
  %v2421 = vand.u32 %v2420, 4294901760
  %2422 = vmatpush1.msra.mxu0 %v2421
  %2423 = vmatprep.subr.mxu0 0.0
  %v2424 = vand.u32 %v1232, 4294901760
  %v2425 = vsub.f32 %v1232, %v2424
  %v2426 = vand.u32 %v2425, 4294901760
  %v2427 = vsub.f32 %v2425, %v2426
  %v2428 = vand.u32 %v2427, 4294901760
  %2429 = vmatpush1.msra.mxu0 %v2428
  %2430 = vmatprep.subr.mxu0 0.0
  %v2431 = vand.u32 %v1233, 4294901760
  %v2432 = vsub.f32 %v1233, %v2431
  %v2433 = vand.u32 %v2432, 4294901760
  %v2434 = vsub.f32 %v2432, %v2433
  %v2435 = vand.u32 %v2434, 4294901760
  %2436 = vmatpush1.msra.mxu0 %v2435
  %2437 = vmatprep.subr.mxu0 0.0
  %v2438 = vand.u32 %v1234, 4294901760
  %v2439 = vsub.f32 %v1234, %v2438
  %v2440 = vand.u32 %v2439, 4294901760
  %v2441 = vsub.f32 %v2439, %v2440
  %v2442 = vand.u32 %v2441, 4294901760
  %2443 = vmatpush1.msra.mxu0 %v2442
  %2444 = vmatprep.subr.mxu0 0.0
  %v2445 = vand.u32 %v1235, 4294901760
  %v2446 = vsub.f32 %v1235, %v2445
  %v2447 = vand.u32 %v2446, 4294901760
  %v2448 = vsub.f32 %v2446, %v2447
  %v2449 = vand.u32 %v2448, 4294901760
  %2450 = vmatpush1.msra.mxu0 %v2449
  %2451 = vmatprep.subr.mxu0 0.0
  %v2452 = vand.u32 %v1236, 4294901760
  %v2453 = vsub.f32 %v1236, %v2452
  %v2454 = vand.u32 %v2453, 4294901760
  %v2455 = vsub.f32 %v2453, %v2454
  %v2456 = vand.u32 %v2455, 4294901760
  %2457 = vmatpush1.msra.mxu0 %v2456
  %2458 = vmatprep.subr.mxu0 0.0
  %v2459 = vand.u32 %v1237, 4294901760
  %v2460 = vsub.f32 %v1237, %v2459
  %v2461 = vand.u32 %v2460, 4294901760
  %v2462 = vsub.f32 %v2460, %v2461
  %v2463 = vand.u32 %v2462, 4294901760
  %2464 = vmatpush1.msra.mxu0 %v2463
  %2465 = vmatprep.subr.mxu0 0.0
  %v2466 = vand.u32 %v1238, 4294901760
  %v2467 = vsub.f32 %v1238, %v2466
  %v2468 = vand.u32 %v2467, 4294901760
  %v2469 = vsub.f32 %v2467, %v2468
  %v2470 = vand.u32 %v2469, 4294901760
  %2471 = vmatpush1.msra.mxu0 %v2470
  %2472 = vmatprep.subr.mxu0 0.0
  %v2473 = vand.u32 %v1239, 4294901760
  %v2474 = vsub.f32 %v1239, %v2473
  %v2475 = vand.u32 %v2474, 4294901760
  %v2476 = vsub.f32 %v2474, %v2475
  %v2477 = vand.u32 %v2476, 4294901760
  %2478 = vmatpush1.msra.mxu0 %v2477
  %2479 = vmatprep.subr.mxu0 0.0
  %v2480 = vand.u32 %v1240, 4294901760
  %v2481 = vsub.f32 %v1240, %v2480
  %v2482 = vand.u32 %v2481, 4294901760
  %v2483 = vsub.f32 %v2481, %v2482
  %v2484 = vand.u32 %v2483, 4294901760
  %2485 = vmatpush1.msra.mxu0 %v2484
  %2486 = vmatprep.subr.mxu0 0.0
  %v2487 = vand.u32 %v1241, 4294901760
  %v2488 = vsub.f32 %v1241, %v2487
  %v2489 = vand.u32 %v2488, 4294901760
  %v2490 = vsub.f32 %v2488, %v2489
  %v2491 = vand.u32 %v2490, 4294901760
  %2492 = vmatpush1.msra.mxu0 %v2491
  %2493 = vmatprep.subr.mxu0 0.0
  %v2494 = vand.u32 %v1242, 4294901760
  %v2495 = vsub.f32 %v1242, %v2494
  %v2496 = vand.u32 %v2495, 4294901760
  %v2497 = vsub.f32 %v2495, %v2496
  %v2498 = vand.u32 %v2497, 4294901760
  %2499 = vmatpush1.msra.mxu0 %v2498
  %2500 = vmatprep.subr.mxu0 0.0
  %v2501 = vand.u32 %v1243, 4294901760
  %v2502 = vsub.f32 %v1243, %v2501
  %v2503 = vand.u32 %v2502, 4294901760
  %v2504 = vsub.f32 %v2502, %v2503
  %v2505 = vand.u32 %v2504, 4294901760
  %2506 = vmatpush1.msra.mxu0 %v2505
  %2507 = vmatprep.subr.mxu0 0.0
  %v2508 = vand.u32 %v1244, 4294901760
  %v2509 = vsub.f32 %v1244, %v2508
  %v2510 = vand.u32 %v2509, 4294901760
  %v2511 = vsub.f32 %v2509, %v2510
  %v2512 = vand.u32 %v2511, 4294901760
  %2513 = vmatpush1.msra.mxu0 %v2512
  %v2514 = vand.u32 %v1121, 4294901760
  %2515 = vmatprep.mubr.f32.mxu0 %v2514
  %v2516 = vand.u32 %v1107, 4294901760
  %2517 = vmatmul.mubr.f32.gmra.mrb[0].mxu0 %v2516
  %v2518 = vpop.f32.mrb[0].mxu0
  %v2519 = vadd.f32 %v2287, %v2518
  %v2520 = vpop.f32.mrb[0].mxu0
  %2521 = vdwg.mxu0
  %2522 = vmatprep.subr.mxu0 0.0
  %v2523 = vand.u32 %v1213, 4294901760
  %v2524 = vsub.f32 %v1213, %v2523
  %2525 = vmatpush1.msra.mxu0 %v2524
  %2526 = vmatprep.subr.mxu0 0.0
  %v2527 = vand.u32 %v1214, 4294901760
  %v2528 = vsub.f32 %v1214, %v2527
  %2529 = vmatpush1.msra.mxu0 %v2528
  %2530 = vmatprep.subr.mxu0 0.0
  %v2531 = vand.u32 %v1215, 4294901760
  %v2532 = vsub.f32 %v1215, %v2531
  %2533 = vmatpush1.msra.mxu0 %v2532
  %2534 = vmatprep.subr.mxu0 0.0
  %v2535 = vand.u32 %v1216, 4294901760
  %v2536 = vsub.f32 %v1216, %v2535
  %2537 = vmatpush1.msra.mxu0 %v2536
  %2538 = vmatprep.subr.mxu0 0.0
  %v2539 = vand.u32 %v1217, 4294901760
  %v2540 = vsub.f32 %v1217, %v2539
  %2541 = vmatpush1.msra.mxu0 %v2540
  %2542 = vmatprep.subr.mxu0 0.0
  %v2543 = vand.u32 %v1218, 4294901760
  %v2544 = vsub.f32 %v1218, %v2543
  %2545 = vmatpush1.msra.mxu0 %v2544
  %2546 = vmatprep.subr.mxu0 0.0
  %v2547 = vand.u32 %v1219, 4294901760
  %v2548 = vsub.f32 %v1219, %v2547
  %2549 = vmatpush1.msra.mxu0 %v2548
  %2550 = vmatprep.subr.mxu0 0.0
  %v2551 = vand.u32 %v1220, 4294901760
  %v2552 = vsub.f32 %v1220, %v2551
  %2553 = vmatpush1.msra.mxu0 %v2552
  %2554 = vmatprep.subr.mxu0 0.0
  %v2555 = vand.u32 %v1221, 4294901760
  %v2556 = vsub.f32 %v1221, %v2555
  %2557 = vmatpush1.msra.mxu0 %v2556
  %2558 = vmatprep.subr.mxu0 0.0
  %v2559 = vand.u32 %v1222, 4294901760
  %v2560 = vsub.f32 %v1222, %v2559
  %2561 = vmatpush1.msra.mxu0 %v2560
  %2562 = vmatprep.subr.mxu0 0.0
  %v2563 = vand.u32 %v1223, 4294901760
  %v2564 = vsub.f32 %v1223, %v2563
  %2565 = vmatpush1.msra.mxu0 %v2564
  %2566 = vmatprep.subr.mxu0 0.0
  %v2567 = vand.u32 %v1224, 4294901760
  %v2568 = vsub.f32 %v1224, %v2567
  %2569 = vmatpush1.msra.mxu0 %v2568
  %2570 = vmatprep.subr.mxu0 0.0
  %v2571 = vand.u32 %v1225, 4294901760
  %v2572 = vsub.f32 %v1225, %v2571
  %2573 = vmatpush1.msra.mxu0 %v2572
  %2574 = vmatprep.subr.mxu0 0.0
  %v2575 = vand.u32 %v1226, 4294901760
  %v2576 = vsub.f32 %v1226, %v2575
  %2577 = vmatpush1.msra.mxu0 %v2576
  %2578 = vmatprep.subr.mxu0 0.0
  %v2579 = vand.u32 %v1227, 4294901760
  %v2580 = vsub.f32 %v1227, %v2579
  %2581 = vmatpush1.msra.mxu0 %v2580
  %2582 = vmatprep.subr.mxu0 0.0
  %v2583 = vand.u32 %v1228, 4294901760
  %v2584 = vsub.f32 %v1228, %v2583
  %2585 = vmatpush1.msra.mxu0 %v2584
  %2586 = vmatprep.subr.mxu0 0.0
  %v2587 = vand.u32 %v1229, 4294901760
  %v2588 = vsub.f32 %v1229, %v2587
  %2589 = vmatpush1.msra.mxu0 %v2588
  %2590 = vmatprep.subr.mxu0 0.0
  %v2591 = vand.u32 %v1230, 4294901760
  %v2592 = vsub.f32 %v1230, %v2591
  %2593 = vmatpush1.msra.mxu0 %v2592
  %2594 = vmatprep.subr.mxu0 0.0
  %v2595 = vand.u32 %v1231, 4294901760
  %v2596 = vsub.f32 %v1231, %v2595
  %2597 = vmatpush1.msra.mxu0 %v2596
  %2598 = vmatprep.subr.mxu0 0.0
  %v2599 = vand.u32 %v1232, 4294901760
  %v2600 = vsub.f32 %v1232, %v2599
  %2601 = vmatpush1.msra.mxu0 %v2600
  %2602 = vmatprep.subr.mxu0 0.0
  %v2603 = vand.u32 %v1233, 4294901760
  %v2604 = vsub.f32 %v1233, %v2603
  %2605 = vmatpush1.msra.mxu0 %v2604
  %2606 = vmatprep.subr.mxu0 0.0
  %v2607 = vand.u32 %v1234, 4294901760
  %v2608 = vsub.f32 %v1234, %v2607
  %2609 = vmatpush1.msra.mxu0 %v2608
  %2610 = vmatprep.subr.mxu0 0.0
  %v2611 = vand.u32 %v1235, 4294901760
  %v2612 = vsub.f32 %v1235, %v2611
  %2613 = vmatpush1.msra.mxu0 %v2612
  %2614 = vmatprep.subr.mxu0 0.0
  %v2615 = vand.u32 %v1236, 4294901760
  %v2616 = vsub.f32 %v1236, %v2615
  %2617 = vmatpush1.msra.mxu0 %v2616
  %2618 = vmatprep.subr.mxu0 0.0
  %v2619 = vand.u32 %v1237, 4294901760
  %v2620 = vsub.f32 %v1237, %v2619
  %2621 = vmatpush1.msra.mxu0 %v2620
  %2622 = vmatprep.subr.mxu0 0.0
  %v2623 = vand.u32 %v1238, 4294901760
  %v2624 = vsub.f32 %v1238, %v2623
  %2625 = vmatpush1.msra.mxu0 %v2624
  %2626 = vmatprep.subr.mxu0 0.0
  %v2627 = vand.u32 %v1239, 4294901760
  %v2628 = vsub.f32 %v1239, %v2627
  %2629 = vmatpush1.msra.mxu0 %v2628
  %2630 = vmatprep.subr.mxu0 0.0
  %v2631 = vand.u32 %v1240, 4294901760
  %v2632 = vsub.f32 %v1240, %v2631
  %2633 = vmatpush1.msra.mxu0 %v2632
  %2634 = vmatprep.subr.mxu0 0.0
  %v2635 = vand.u32 %v1241, 4294901760
  %v2636 = vsub.f32 %v1241, %v2635
  %2637 = vmatpush1.msra.mxu0 %v2636
  %2638 = vmatprep.subr.mxu0 0.0
  %v2639 = vand.u32 %v1242, 4294901760
  %v2640 = vsub.f32 %v1242, %v2639
  %2641 = vmatpush1.msra.mxu0 %v2640
  %2642 = vmatprep.subr.mxu0 0.0
  %v2643 = vand.u32 %v1243, 4294901760
  %v2644 = vsub.f32 %v1243, %v2643
  %2645 = vmatpush1.msra.mxu0 %v2644
  %2646 = vmatprep.subr.mxu0 0.0
  %v2647 = vand.u32 %v1244, 4294901760
  %v2648 = vsub.f32 %v1244, %v2647
  %2649 = vmatpush1.msra.mxu0 %v2648
  %v2650 = vand.u32 %v1121, 4294901760
  %v2651 = vsub.f32 %v1121, %v2650
  %2652 = vmatprep.mubr.f32.mxu0 %v2651
  %v2653 = vand.u32 %v1107, 4294901760
  %v2654 = vsub.f32 %v1107, %v2653
  %2655 = vmatmul.mubr.f32.gmra.mrb[0].mxu0 %v2654
  %v2656 = vpop.f32.mrb[0].mxu0
  %v2657 = vadd.f32 %v2519, %v2656
  %v2658 = vpop.f32.mrb[0].mxu0
  %2659 = vdwg.mxu0
  %2660 = vmatprep.subr.mxu0 0.0
  %v2661 = vand.u32 %v1213, 4294901760
  %2662 = vmatpush1.msra.mxu0 %v2661
  %2663 = vmatprep.subr.mxu0 0.0
  %v2664 = vand.u32 %v1214, 4294901760
  %2665 = vmatpush1.msra.mxu0 %v2664
  %2666 = vmatprep.subr.mxu0 0.0
  %v2667 = vand.u32 %v1215, 4294901760
  %2668 = vmatpush1.msra.mxu0 %v2667
  %2669 = vmatprep.subr.mxu0 0.0
  %v2670 = vand.u32 %v1216, 4294901760
  %2671 = vmatpush1.msra.mxu0 %v2670
  %2672 = vmatprep.subr.mxu0 0.0
  %v2673 = vand.u32 %v1217, 4294901760
  %2674 = vmatpush1.msra.mxu0 %v2673
  %2675 = vmatprep.subr.mxu0 0.0
  %v2676 = vand.u32 %v1218, 4294901760
  %2677 = vmatpush1.msra.mxu0 %v2676
  %2678 = vmatprep.subr.mxu0 0.0
  %v2679 = vand.u32 %v1219, 4294901760
  %2680 = vmatpush1.msra.mxu0 %v2679
  %2681 = vmatprep.subr.mxu0 0.0
  %v2682 = vand.u32 %v1220, 4294901760
  %2683 = vmatpush1.msra.mxu0 %v2682
  %2684 = vmatprep.subr.mxu0 0.0
  %v2685 = vand.u32 %v1221, 4294901760
  %2686 = vmatpush1.msra.mxu0 %v2685
  %2687 = vmatprep.subr.mxu0 0.0
  %v2688 = vand.u32 %v1222, 4294901760
  %2689 = vmatpush1.msra.mxu0 %v2688
  %2690 = vmatprep.subr.mxu0 0.0
  %v2691 = vand.u32 %v1223, 4294901760
  %2692 = vmatpush1.msra.mxu0 %v2691
  %2693 = vmatprep.subr.mxu0 0.0
  %v2694 = vand.u32 %v1224, 4294901760
  %2695 = vmatpush1.msra.mxu0 %v2694
  %2696 = vmatprep.subr.mxu0 0.0
  %v2697 = vand.u32 %v1225, 4294901760
  %2698 = vmatpush1.msra.mxu0 %v2697
  %2699 = vmatprep.subr.mxu0 0.0
  %v2700 = vand.u32 %v1226, 4294901760
  %2701 = vmatpush1.msra.mxu0 %v2700
  %2702 = vmatprep.subr.mxu0 0.0
  %v2703 = vand.u32 %v1227, 4294901760
  %2704 = vmatpush1.msra.mxu0 %v2703
  %2705 = vmatprep.subr.mxu0 0.0
  %v2706 = vand.u32 %v1228, 4294901760
  %2707 = vmatpush1.msra.mxu0 %v2706
  %2708 = vmatprep.subr.mxu0 0.0
  %v2709 = vand.u32 %v1229, 4294901760
  %2710 = vmatpush1.msra.mxu0 %v2709
  %2711 = vmatprep.subr.mxu0 0.0
  %v2712 = vand.u32 %v1230, 4294901760
  %2713 = vmatpush1.msra.mxu0 %v2712
  %2714 = vmatprep.subr.mxu0 0.0
  %v2715 = vand.u32 %v1231, 4294901760
  %2716 = vmatpush1.msra.mxu0 %v2715
  %2717 = vmatprep.subr.mxu0 0.0
  %v2718 = vand.u32 %v1232, 4294901760
  %2719 = vmatpush1.msra.mxu0 %v2718
  %2720 = vmatprep.subr.mxu0 0.0
  %v2721 = vand.u32 %v1233, 4294901760
  %2722 = vmatpush1.msra.mxu0 %v2721
  %2723 = vmatprep.subr.mxu0 0.0
  %v2724 = vand.u32 %v1234, 4294901760
  %2725 = vmatpush1.msra.mxu0 %v2724
  %2726 = vmatprep.subr.mxu0 0.0
  %v2727 = vand.u32 %v1235, 4294901760
  %2728 = vmatpush1.msra.mxu0 %v2727
  %2729 = vmatprep.subr.mxu0 0.0
  %v2730 = vand.u32 %v1236, 4294901760
  %2731 = vmatpush1.msra.mxu0 %v2730
  %2732 = vmatprep.subr.mxu0 0.0
  %v2733 = vand.u32 %v1237, 4294901760
  %2734 = vmatpush1.msra.mxu0 %v2733
  %2735 = vmatprep.subr.mxu0 0.0
  %v2736 = vand.u32 %v1238, 4294901760
  %2737 = vmatpush1.msra.mxu0 %v2736
  %2738 = vmatprep.subr.mxu0 0.0
  %v2739 = vand.u32 %v1239, 4294901760
  %2740 = vmatpush1.msra.mxu0 %v2739
  %2741 = vmatprep.subr.mxu0 0.0
  %v2742 = vand.u32 %v1240, 4294901760
  %2743 = vmatpush1.msra.mxu0 %v2742
  %2744 = vmatprep.subr.mxu0 0.0
  %v2745 = vand.u32 %v1241, 4294901760
  %2746 = vmatpush1.msra.mxu0 %v2745
  %2747 = vmatprep.subr.mxu0 0.0
  %v2748 = vand.u32 %v1242, 4294901760
  %2749 = vmatpush1.msra.mxu0 %v2748
  %2750 = vmatprep.subr.mxu0 0.0
  %v2751 = vand.u32 %v1243, 4294901760
  %2752 = vmatpush1.msra.mxu0 %v2751
  %2753 = vmatprep.subr.mxu0 0.0
  %v2754 = vand.u32 %v1244, 4294901760
  %2755 = vmatpush1.msra.mxu0 %v2754
  %v2756 = vand.u32 %v1121, 4294901760
  %v2757 = vsub.f32 %v1121, %v2756
  %v2758 = vand.u32 %v2757, 4294901760
  %2759 = vmatprep.mubr.f32.mxu0 %v2758
  %v2760 = vand.u32 %v1107, 4294901760
  %v2761 = vsub.f32 %v1107, %v2760
  %v2762 = vand.u32 %v2761, 4294901760
  %2763 = vmatmul.mubr.f32.gmra.mrb[0].mxu0 %v2762
  %v2764 = vpop.f32.mrb[0].mxu0
  %v2765 = vadd.f32 %v2657, %v2764
  %v2766 = vpop.f32.mrb[0].mxu0
  %2767 = vdwg.mxu0
  %2768 = vmatprep.subr.mxu0 0.0
  %v2769 = vand.u32 %v1213, 4294901760
  %v2770 = vsub.f32 %v1213, %v2769
  %v2771 = vand.u32 %v2770, 4294901760
  %2772 = vmatpush1.msra.mxu0 %v2771
  %2773 = vmatprep.subr.mxu0 0.0
  %v2774 = vand.u32 %v1214, 4294901760
  %v2775 = vsub.f32 %v1214, %v2774
  %v2776 = vand.u32 %v2775, 4294901760
  %2777 = vmatpush1.msra.mxu0 %v2776
  %2778 = vmatprep.subr.mxu0 0.0
  %v2779 = vand.u32 %v1215, 4294901760
  %v2780 = vsub.f32 %v1215, %v2779
  %v2781 = vand.u32 %v2780, 4294901760
  %2782 = vmatpush1.msra.mxu0 %v2781
  %2783 = vmatprep.subr.mxu0 0.0
  %v2784 = vand.u32 %v1216, 4294901760
  %v2785 = vsub.f32 %v1216, %v2784
  %v2786 = vand.u32 %v2785, 4294901760
  %2787 = vmatpush1.msra.mxu0 %v2786
  %2788 = vmatprep.subr.mxu0 0.0
  %v2789 = vand.u32 %v1217, 4294901760
  %v2790 = vsub.f32 %v1217, %v2789
  %v2791 = vand.u32 %v2790, 4294901760
  %2792 = vmatpush1.msra.mxu0 %v2791
  %2793 = vmatprep.subr.mxu0 0.0
  %v2794 = vand.u32 %v1218, 4294901760
  %v2795 = vsub.f32 %v1218, %v2794
  %v2796 = vand.u32 %v2795, 4294901760
  %2797 = vmatpush1.msra.mxu0 %v2796
  %2798 = vmatprep.subr.mxu0 0.0
  %v2799 = vand.u32 %v1219, 4294901760
  %v2800 = vsub.f32 %v1219, %v2799
  %v2801 = vand.u32 %v2800, 4294901760
  %2802 = vmatpush1.msra.mxu0 %v2801
  %2803 = vmatprep.subr.mxu0 0.0
  %v2804 = vand.u32 %v1220, 4294901760
  %v2805 = vsub.f32 %v1220, %v2804
  %v2806 = vand.u32 %v2805, 4294901760
  %2807 = vmatpush1.msra.mxu0 %v2806
  %2808 = vmatprep.subr.mxu0 0.0
  %v2809 = vand.u32 %v1221, 4294901760
  %v2810 = vsub.f32 %v1221, %v2809
  %v2811 = vand.u32 %v2810, 4294901760
  %2812 = vmatpush1.msra.mxu0 %v2811
  %2813 = vmatprep.subr.mxu0 0.0
  %v2814 = vand.u32 %v1222, 4294901760
  %v2815 = vsub.f32 %v1222, %v2814
  %v2816 = vand.u32 %v2815, 4294901760
  %2817 = vmatpush1.msra.mxu0 %v2816
  %2818 = vmatprep.subr.mxu0 0.0
  %v2819 = vand.u32 %v1223, 4294901760
  %v2820 = vsub.f32 %v1223, %v2819
  %v2821 = vand.u32 %v2820, 4294901760
  %2822 = vmatpush1.msra.mxu0 %v2821
  %2823 = vmatprep.subr.mxu0 0.0
  %v2824 = vand.u32 %v1224, 4294901760
  %v2825 = vsub.f32 %v1224, %v2824
  %v2826 = vand.u32 %v2825, 4294901760
  %2827 = vmatpush1.msra.mxu0 %v2826
  %2828 = vmatprep.subr.mxu0 0.0
  %v2829 = vand.u32 %v1225, 4294901760
  %v2830 = vsub.f32 %v1225, %v2829
  %v2831 = vand.u32 %v2830, 4294901760
  %2832 = vmatpush1.msra.mxu0 %v2831
  %2833 = vmatprep.subr.mxu0 0.0
  %v2834 = vand.u32 %v1226, 4294901760
  %v2835 = vsub.f32 %v1226, %v2834
  %v2836 = vand.u32 %v2835, 4294901760
  %2837 = vmatpush1.msra.mxu0 %v2836
  %2838 = vmatprep.subr.mxu0 0.0
  %v2839 = vand.u32 %v1227, 4294901760
  %v2840 = vsub.f32 %v1227, %v2839
  %v2841 = vand.u32 %v2840, 4294901760
  %2842 = vmatpush1.msra.mxu0 %v2841
  %2843 = vmatprep.subr.mxu0 0.0
  %v2844 = vand.u32 %v1228, 4294901760
  %v2845 = vsub.f32 %v1228, %v2844
  %v2846 = vand.u32 %v2845, 4294901760
  %2847 = vmatpush1.msra.mxu0 %v2846
  %2848 = vmatprep.subr.mxu0 0.0
  %v2849 = vand.u32 %v1229, 4294901760
  %v2850 = vsub.f32 %v1229, %v2849
  %v2851 = vand.u32 %v2850, 4294901760
  %2852 = vmatpush1.msra.mxu0 %v2851
  %2853 = vmatprep.subr.mxu0 0.0
  %v2854 = vand.u32 %v1230, 4294901760
  %v2855 = vsub.f32 %v1230, %v2854
  %v2856 = vand.u32 %v2855, 4294901760
  %2857 = vmatpush1.msra.mxu0 %v2856
  %2858 = vmatprep.subr.mxu0 0.0
  %v2859 = vand.u32 %v1231, 4294901760
  %v2860 = vsub.f32 %v1231, %v2859
  %v2861 = vand.u32 %v2860, 4294901760
  %2862 = vmatpush1.msra.mxu0 %v2861
  %2863 = vmatprep.subr.mxu0 0.0
  %v2864 = vand.u32 %v1232, 4294901760
  %v2865 = vsub.f32 %v1232, %v2864
  %v2866 = vand.u32 %v2865, 4294901760
  %2867 = vmatpush1.msra.mxu0 %v2866
  %2868 = vmatprep.subr.mxu0 0.0
  %v2869 = vand.u32 %v1233, 4294901760
  %v2870 = vsub.f32 %v1233, %v2869
  %v2871 = vand.u32 %v2870, 4294901760
  %2872 = vmatpush1.msra.mxu0 %v2871
  %2873 = vmatprep.subr.mxu0 0.0
  %v2874 = vand.u32 %v1234, 4294901760
  %v2875 = vsub.f32 %v1234, %v2874
  %v2876 = vand.u32 %v2875, 4294901760
  %2877 = vmatpush1.msra.mxu0 %v2876
  %2878 = vmatprep.subr.mxu0 0.0
  %v2879 = vand.u32 %v1235, 4294901760
  %v2880 = vsub.f32 %v1235, %v2879
  %v2881 = vand.u32 %v2880, 4294901760
  %2882 = vmatpush1.msra.mxu0 %v2881
  %2883 = vmatprep.subr.mxu0 0.0
  %v2884 = vand.u32 %v1236, 4294901760
  %v2885 = vsub.f32 %v1236, %v2884
  %v2886 = vand.u32 %v2885, 4294901760
  %2887 = vmatpush1.msra.mxu0 %v2886
  %2888 = vmatprep.subr.mxu0 0.0
  %v2889 = vand.u32 %v1237, 4294901760
  %v2890 = vsub.f32 %v1237, %v2889
  %v2891 = vand.u32 %v2890, 4294901760
  %2892 = vmatpush1.msra.mxu0 %v2891
  %2893 = vmatprep.subr.mxu0 0.0
  %v2894 = vand.u32 %v1238, 4294901760
  %v2895 = vsub.f32 %v1238, %v2894
  %v2896 = vand.u32 %v2895, 4294901760
  %2897 = vmatpush1.msra.mxu0 %v2896
  %2898 = vmatprep.subr.mxu0 0.0
  %v2899 = vand.u32 %v1239, 4294901760
  %v2900 = vsub.f32 %v1239, %v2899
  %v2901 = vand.u32 %v2900, 4294901760
  %2902 = vmatpush1.msra.mxu0 %v2901
  %2903 = vmatprep.subr.mxu0 0.0
  %v2904 = vand.u32 %v1240, 4294901760
  %v2905 = vsub.f32 %v1240, %v2904
  %v2906 = vand.u32 %v2905, 4294901760
  %2907 = vmatpush1.msra.mxu0 %v2906
  %2908 = vmatprep.subr.mxu0 0.0
  %v2909 = vand.u32 %v1241, 4294901760
  %v2910 = vsub.f32 %v1241, %v2909
  %v2911 = vand.u32 %v2910, 4294901760
  %2912 = vmatpush1.msra.mxu0 %v2911
  %2913 = vmatprep.subr.mxu0 0.0
  %v2914 = vand.u32 %v1242, 4294901760
  %v2915 = vsub.f32 %v1242, %v2914
  %v2916 = vand.u32 %v2915, 4294901760
  %2917 = vmatpush1.msra.mxu0 %v2916
  %2918 = vmatprep.subr.mxu0 0.0
  %v2919 = vand.u32 %v1243, 4294901760
  %v2920 = vsub.f32 %v1243, %v2919
  %v2921 = vand.u32 %v2920, 4294901760
  %2922 = vmatpush1.msra.mxu0 %v2921
  %2923 = vmatprep.subr.mxu0 0.0
  %v2924 = vand.u32 %v1244, 4294901760
  %v2925 = vsub.f32 %v1244, %v2924
  %v2926 = vand.u32 %v2925, 4294901760
  %2927 = vmatpush1.msra.mxu0 %v2926
  %v2928 = vand.u32 %v1121, 4294901760
  %2929 = vmatprep.mubr.f32.mxu0 %v2928
  %v2930 = vand.u32 %v1107, 4294901760
  %2931 = vmatmul.mubr.f32.gmra.mrb[0].mxu0 %v2930
  %v2932 = vpop.f32.mrb[0].mxu0
  %v2933 = vadd.f32 %v2765, %v2932
  %v2934 = vpop.f32.mrb[0].mxu0
  %2935 = vdwg.mxu0
  %2936 = vmatprep.subr.mxu0 0.0
  %v2937 = vand.u32 %v1213, 4294901760
  %2938 = vmatpush1.msra.mxu0 %v2937
  %2939 = vmatprep.subr.mxu0 0.0
  %v2940 = vand.u32 %v1214, 4294901760
  %2941 = vmatpush1.msra.mxu0 %v2940
  %2942 = vmatprep.subr.mxu0 0.0
  %v2943 = vand.u32 %v1215, 4294901760
  %2944 = vmatpush1.msra.mxu0 %v2943
  %2945 = vmatprep.subr.mxu0 0.0
  %v2946 = vand.u32 %v1216, 4294901760
  %2947 = vmatpush1.msra.mxu0 %v2946
  %2948 = vmatprep.subr.mxu0 0.0
  %v2949 = vand.u32 %v1217, 4294901760
  %2950 = vmatpush1.msra.mxu0 %v2949
  %2951 = vmatprep.subr.mxu0 0.0
  %v2952 = vand.u32 %v1218, 4294901760
  %2953 = vmatpush1.msra.mxu0 %v2952
  %2954 = vmatprep.subr.mxu0 0.0
  %v2955 = vand.u32 %v1219, 4294901760
  %2956 = vmatpush1.msra.mxu0 %v2955
  %2957 = vmatprep.subr.mxu0 0.0
  %v2958 = vand.u32 %v1220, 4294901760
  %2959 = vmatpush1.msra.mxu0 %v2958
  %2960 = vmatprep.subr.mxu0 0.0
  %v2961 = vand.u32 %v1221, 4294901760
  %2962 = vmatpush1.msra.mxu0 %v2961
  %2963 = vmatprep.subr.mxu0 0.0
  %v2964 = vand.u32 %v1222, 4294901760
  %2965 = vmatpush1.msra.mxu0 %v2964
  %2966 = vmatprep.subr.mxu0 0.0
  %v2967 = vand.u32 %v1223, 4294901760
  %2968 = vmatpush1.msra.mxu0 %v2967
  %2969 = vmatprep.subr.mxu0 0.0
  %v2970 = vand.u32 %v1224, 4294901760
  %2971 = vmatpush1.msra.mxu0 %v2970
  %2972 = vmatprep.subr.mxu0 0.0
  %v2973 = vand.u32 %v1225, 4294901760
  %2974 = vmatpush1.msra.mxu0 %v2973
  %2975 = vmatprep.subr.mxu0 0.0
  %v2976 = vand.u32 %v1226, 4294901760
  %2977 = vmatpush1.msra.mxu0 %v2976
  %2978 = vmatprep.subr.mxu0 0.0
  %v2979 = vand.u32 %v1227, 4294901760
  %2980 = vmatpush1.msra.mxu0 %v2979
  %2981 = vmatprep.subr.mxu0 0.0
  %v2982 = vand.u32 %v1228, 4294901760
  %2983 = vmatpush1.msra.mxu0 %v2982
  %2984 = vmatprep.subr.mxu0 0.0
  %v2985 = vand.u32 %v1229, 4294901760
  %2986 = vmatpush1.msra.mxu0 %v2985
  %2987 = vmatprep.subr.mxu0 0.0
  %v2988 = vand.u32 %v1230, 4294901760
  %2989 = vmatpush1.msra.mxu0 %v2988
  %2990 = vmatprep.subr.mxu0 0.0
  %v2991 = vand.u32 %v1231, 4294901760
  %2992 = vmatpush1.msra.mxu0 %v2991
  %2993 = vmatprep.subr.mxu0 0.0
  %v2994 = vand.u32 %v1232, 4294901760
  %2995 = vmatpush1.msra.mxu0 %v2994
  %2996 = vmatprep.subr.mxu0 0.0
  %v2997 = vand.u32 %v1233, 4294901760
  %2998 = vmatpush1.msra.mxu0 %v2997
  %2999 = vmatprep.subr.mxu0 0.0
  %v3000 = vand.u32 %v1234, 4294901760
  %3001 = vmatpush1.msra.mxu0 %v3000
  %3002 = vmatprep.subr.mxu0 0.0
  %v3003 = vand.u32 %v1235, 4294901760
  %3004 = vmatpush1.msra.mxu0 %v3003
  %3005 = vmatprep.subr.mxu0 0.0
  %v3006 = vand.u32 %v1236, 4294901760
  %3007 = vmatpush1.msra.mxu0 %v3006
  %3008 = vmatprep.subr.mxu0 0.0
  %v3009 = vand.u32 %v1237, 4294901760
  %3010 = vmatpush1.msra.mxu0 %v3009
  %3011 = vmatprep.subr.mxu0 0.0
  %v3012 = vand.u32 %v1238, 4294901760
  %3013 = vmatpush1.msra.mxu0 %v3012
  %3014 = vmatprep.subr.mxu0 0.0
  %v3015 = vand.u32 %v1239, 4294901760
  %3016 = vmatpush1.msra.mxu0 %v3015
  %3017 = vmatprep.subr.mxu0 0.0
  %v3018 = vand.u32 %v1240, 4294901760
  %3019 = vmatpush1.msra.mxu0 %v3018
  %3020 = vmatprep.subr.mxu0 0.0
  %v3021 = vand.u32 %v1241, 4294901760
  %3022 = vmatpush1.msra.mxu0 %v3021
  %3023 = vmatprep.subr.mxu0 0.0
  %v3024 = vand.u32 %v1242, 4294901760
  %3025 = vmatpush1.msra.mxu0 %v3024
  %3026 = vmatprep.subr.mxu0 0.0
  %v3027 = vand.u32 %v1243, 4294901760
  %3028 = vmatpush1.msra.mxu0 %v3027
  %3029 = vmatprep.subr.mxu0 0.0
  %v3030 = vand.u32 %v1244, 4294901760
  %3031 = vmatpush1.msra.mxu0 %v3030
  %v3032 = vand.u32 %v1121, 4294901760
  %3033 = vmatprep.mubr.f32.mxu0 %v3032
  %v3034 = vand.u32 %v1107, 4294901760
  %3035 = vmatmul.mubr.f32.gmra.mrb[0].mxu0 %v3034
  %v3036 = vpop.f32.mrb[0].mxu0
  %v3037 = vadd.f32 %v2933, %v3036
  %v3038 = vpop.f32.mrb[0].mxu0
  %3039 = vdwg.mxu0
  %3040 = vmatprep.subr.mxu0 0.0
  %v3041 = vand.u32 %v1245, 4294901760
  %3042 = vmatpush1.msra.mxu0 %v3041
  %3043 = vmatprep.subr.mxu0 0.0
  %v3044 = vand.u32 %v1246, 4294901760
  %3045 = vmatpush1.msra.mxu0 %v3044
  %3046 = vmatprep.subr.mxu0 0.0
  %v3047 = vand.u32 %v1247, 4294901760
  %3048 = vmatpush1.msra.mxu0 %v3047
  %3049 = vmatprep.subr.mxu0 0.0
  %v3050 = vand.u32 %v1248, 4294901760
  %3051 = vmatpush1.msra.mxu0 %v3050
  %3052 = vmatprep.subr.mxu0 0.0
  %v3053 = vand.u32 %v1249, 4294901760
  %3054 = vmatpush1.msra.mxu0 %v3053
  %3055 = vmatprep.subr.mxu0 0.0
  %v3056 = vand.u32 %v1250, 4294901760
  %3057 = vmatpush1.msra.mxu0 %v3056
  %3058 = vmatprep.subr.mxu0 0.0
  %v3059 = vand.u32 %v1251, 4294901760
  %3060 = vmatpush1.msra.mxu0 %v3059
  %3061 = vmatprep.subr.mxu0 0.0
  %v3062 = vand.u32 %v1252, 4294901760
  %3063 = vmatpush1.msra.mxu0 %v3062
  %3064 = vmatprep.subr.mxu0 0.0
  %v3065 = vand.u32 %v1253, 4294901760
  %3066 = vmatpush1.msra.mxu0 %v3065
  %3067 = vmatprep.subr.mxu0 0.0
  %v3068 = vand.u32 %v1254, 4294901760
  %3069 = vmatpush1.msra.mxu0 %v3068
  %3070 = vmatprep.subr.mxu0 0.0
  %v3071 = vand.u32 %v1255, 4294901760
  %3072 = vmatpush1.msra.mxu0 %v3071
  %3073 = vmatprep.subr.mxu0 0.0
  %v3074 = vand.u32 %v1256, 4294901760
  %3075 = vmatpush1.msra.mxu0 %v3074
  %3076 = vmatprep.subr.mxu0 0.0
  %v3077 = vand.u32 %v1257, 4294901760
  %3078 = vmatpush1.msra.mxu0 %v3077
  %3079 = vmatprep.subr.mxu0 0.0
  %v3080 = vand.u32 %v1258, 4294901760
  %3081 = vmatpush1.msra.mxu0 %v3080
  %3082 = vmatprep.subr.mxu0 0.0
  %v3083 = vand.u32 %v1259, 4294901760
  %3084 = vmatpush1.msra.mxu0 %v3083
  %3085 = vmatprep.subr.mxu0 0.0
  %v3086 = vand.u32 %v1260, 4294901760
  %3087 = vmatpush1.msra.mxu0 %v3086
  %3088 = vmatprep.subr.mxu0 0.0
  %v3089 = vand.u32 %v1261, 4294901760
  %3090 = vmatpush1.msra.mxu0 %v3089
  %3091 = vmatprep.subr.mxu0 0.0
  %v3092 = vand.u32 %v1262, 4294901760
  %3093 = vmatpush1.msra.mxu0 %v3092
  %3094 = vmatprep.subr.mxu0 0.0
  %v3095 = vand.u32 %v1263, 4294901760
  %3096 = vmatpush1.msra.mxu0 %v3095
  %3097 = vmatprep.subr.mxu0 0.0
  %v3098 = vand.u32 %v1264, 4294901760
  %3099 = vmatpush1.msra.mxu0 %v3098
  %3100 = vmatprep.subr.mxu0 0.0
  %v3101 = vand.u32 %v1265, 4294901760
  %3102 = vmatpush1.msra.mxu0 %v3101
  %3103 = vmatprep.subr.mxu0 0.0
  %v3104 = vand.u32 %v1266, 4294901760
  %3105 = vmatpush1.msra.mxu0 %v3104
  %3106 = vmatprep.subr.mxu0 0.0
  %v3107 = vand.u32 %v1267, 4294901760
  %3108 = vmatpush1.msra.mxu0 %v3107
  %3109 = vmatprep.subr.mxu0 0.0
  %v3110 = vand.u32 %v1268, 4294901760
  %3111 = vmatpush1.msra.mxu0 %v3110
  %3112 = vmatprep.subr.mxu0 0.0
  %v3113 = vand.u32 %v1269, 4294901760
  %3114 = vmatpush1.msra.mxu0 %v3113
  %3115 = vmatprep.subr.mxu0 0.0
  %v3116 = vand.u32 %v1270, 4294901760
  %3117 = vmatpush1.msra.mxu0 %v3116
  %3118 = vmatprep.subr.mxu0 0.0
  %v3119 = vand.u32 %v1271, 4294901760
  %3120 = vmatpush1.msra.mxu0 %v3119
  %3121 = vmatprep.subr.mxu0 0.0
  %v3122 = vand.u32 %v1272, 4294901760
  %3123 = vmatpush1.msra.mxu0 %v3122
  %3124 = vmatprep.subr.mxu0 0.0
  %v3125 = vand.u32 %v1273, 4294901760
  %3126 = vmatpush1.msra.mxu0 %v3125
  %3127 = vmatprep.subr.mxu0 0.0
  %v3128 = vand.u32 %v1274, 4294901760
  %3129 = vmatpush1.msra.mxu0 %v3128
  %3130 = vmatprep.subr.mxu0 0.0
  %v3131 = vand.u32 %v1275, 4294901760
  %3132 = vmatpush1.msra.mxu0 %v3131
  %3133 = vmatprep.subr.mxu0 0.0
  %v3134 = vand.u32 %v1276, 4294901760
  %3135 = vmatpush1.msra.mxu0 %v3134
  %v3136 = vand.u32 %v1149, 4294901760
  %v3137 = vsub.f32 %v1149, %v3136
  %v3138 = vand.u32 %v3137, 4294901760
  %v3139 = vsub.f32 %v3137, %v3138
  %v3140 = vand.u32 %v3139, 4294901760
  %3141 = vmatprep.mubr.f32.mxu0 %v3140
  %v3142 = vand.u32 %v1135, 4294901760
  %v3143 = vsub.f32 %v1135, %v3142
  %v3144 = vand.u32 %v3143, 4294901760
  %v3145 = vsub.f32 %v3143, %v3144
  %v3146 = vand.u32 %v3145, 4294901760
  %3147 = vmatmul.mubr.f32.gmra.mrb[0].mxu0 %v3146
  %v3148 = vpop.f32.mrb[0].mxu0
  %v3149 = vadd.f32 %v3037, %v3148
  %v3150 = vpop.f32.mrb[0].mxu0
  %3151 = vdwg.mxu0
  %3152 = vmatprep.subr.mxu0 0.0
  %v3153 = vand.u32 %v1245, 4294901760
  %v3154 = vsub.f32 %v1245, %v3153
  %v3155 = vand.u32 %v3154, 4294901760
  %v3156 = vsub.f32 %v3154, %v3155
  %v3157 = vand.u32 %v3156, 4294901760
  %3158 = vmatpush1.msra.mxu0 %v3157
  %3159 = vmatprep.subr.mxu0 0.0
  %v3160 = vand.u32 %v1246, 4294901760
  %v3161 = vsub.f32 %v1246, %v3160
  %v3162 = vand.u32 %v3161, 4294901760
  %v3163 = vsub.f32 %v3161, %v3162
  %v3164 = vand.u32 %v3163, 4294901760
  %3165 = vmatpush1.msra.mxu0 %v3164
  %3166 = vmatprep.subr.mxu0 0.0
  %v3167 = vand.u32 %v1247, 4294901760
  %v3168 = vsub.f32 %v1247, %v3167
  %v3169 = vand.u32 %v3168, 4294901760
  %v3170 = vsub.f32 %v3168, %v3169
  %v3171 = vand.u32 %v3170, 4294901760
  %3172 = vmatpush1.msra.mxu0 %v3171
  %3173 = vmatprep.subr.mxu0 0.0
  %v3174 = vand.u32 %v1248, 4294901760
  %v3175 = vsub.f32 %v1248, %v3174
  %v3176 = vand.u32 %v3175, 4294901760
  %v3177 = vsub.f32 %v3175, %v3176
  %v3178 = vand.u32 %v3177, 4294901760
  %3179 = vmatpush1.msra.mxu0 %v3178
  %3180 = vmatprep.subr.mxu0 0.0
  %v3181 = vand.u32 %v1249, 4294901760
  %v3182 = vsub.f32 %v1249, %v3181
  %v3183 = vand.u32 %v3182, 4294901760
  %v3184 = vsub.f32 %v3182, %v3183
  %v3185 = vand.u32 %v3184, 4294901760
  %3186 = vmatpush1.msra.mxu0 %v3185
  %3187 = vmatprep.subr.mxu0 0.0
  %v3188 = vand.u32 %v1250, 4294901760
  %v3189 = vsub.f32 %v1250, %v3188
  %v3190 = vand.u32 %v3189, 4294901760
  %v3191 = vsub.f32 %v3189, %v3190
  %v3192 = vand.u32 %v3191, 4294901760
  %3193 = vmatpush1.msra.mxu0 %v3192
  %3194 = vmatprep.subr.mxu0 0.0
  %v3195 = vand.u32 %v1251, 4294901760
  %v3196 = vsub.f32 %v1251, %v3195
  %v3197 = vand.u32 %v3196, 4294901760
  %v3198 = vsub.f32 %v3196, %v3197
  %v3199 = vand.u32 %v3198, 4294901760
  %3200 = vmatpush1.msra.mxu0 %v3199
  %3201 = vmatprep.subr.mxu0 0.0
  %v3202 = vand.u32 %v1252, 4294901760
  %v3203 = vsub.f32 %v1252, %v3202
  %v3204 = vand.u32 %v3203, 4294901760
  %v3205 = vsub.f32 %v3203, %v3204
  %v3206 = vand.u32 %v3205, 4294901760
  %3207 = vmatpush1.msra.mxu0 %v3206
  %3208 = vmatprep.subr.mxu0 0.0
  %v3209 = vand.u32 %v1253, 4294901760
  %v3210 = vsub.f32 %v1253, %v3209
  %v3211 = vand.u32 %v3210, 4294901760
  %v3212 = vsub.f32 %v3210, %v3211
  %v3213 = vand.u32 %v3212, 4294901760
  %3214 = vmatpush1.msra.mxu0 %v3213
  %3215 = vmatprep.subr.mxu0 0.0
  %v3216 = vand.u32 %v1254, 4294901760
  %v3217 = vsub.f32 %v1254, %v3216
  %v3218 = vand.u32 %v3217, 4294901760
  %v3219 = vsub.f32 %v3217, %v3218
  %v3220 = vand.u32 %v3219, 4294901760
  %3221 = vmatpush1.msra.mxu0 %v3220
  %3222 = vmatprep.subr.mxu0 0.0
  %v3223 = vand.u32 %v1255, 4294901760
  %v3224 = vsub.f32 %v1255, %v3223
  %v3225 = vand.u32 %v3224, 4294901760
  %v3226 = vsub.f32 %v3224, %v3225
  %v3227 = vand.u32 %v3226, 4294901760
  %3228 = vmatpush1.msra.mxu0 %v3227
  %3229 = vmatprep.subr.mxu0 0.0
  %v3230 = vand.u32 %v1256, 4294901760
  %v3231 = vsub.f32 %v1256, %v3230
  %v3232 = vand.u32 %v3231, 4294901760
  %v3233 = vsub.f32 %v3231, %v3232
  %v3234 = vand.u32 %v3233, 4294901760
  %3235 = vmatpush1.msra.mxu0 %v3234
  %3236 = vmatprep.subr.mxu0 0.0
  %v3237 = vand.u32 %v1257, 4294901760
  %v3238 = vsub.f32 %v1257, %v3237
  %v3239 = vand.u32 %v3238, 4294901760
  %v3240 = vsub.f32 %v3238, %v3239
  %v3241 = vand.u32 %v3240, 4294901760
  %3242 = vmatpush1.msra.mxu0 %v3241
  %3243 = vmatprep.subr.mxu0 0.0
  %v3244 = vand.u32 %v1258, 4294901760
  %v3245 = vsub.f32 %v1258, %v3244
  %v3246 = vand.u32 %v3245, 4294901760
  %v3247 = vsub.f32 %v3245, %v3246
  %v3248 = vand.u32 %v3247, 4294901760
  %3249 = vmatpush1.msra.mxu0 %v3248
  %3250 = vmatprep.subr.mxu0 0.0
  %v3251 = vand.u32 %v1259, 4294901760
  %v3252 = vsub.f32 %v1259, %v3251
  %v3253 = vand.u32 %v3252, 4294901760
  %v3254 = vsub.f32 %v3252, %v3253
  %v3255 = vand.u32 %v3254, 4294901760
  %3256 = vmatpush1.msra.mxu0 %v3255
  %3257 = vmatprep.subr.mxu0 0.0
  %v3258 = vand.u32 %v1260, 4294901760
  %v3259 = vsub.f32 %v1260, %v3258
  %v3260 = vand.u32 %v3259, 4294901760
  %v3261 = vsub.f32 %v3259, %v3260
  %v3262 = vand.u32 %v3261, 4294901760
  %3263 = vmatpush1.msra.mxu0 %v3262
  %3264 = vmatprep.subr.mxu0 0.0
  %v3265 = vand.u32 %v1261, 4294901760
  %v3266 = vsub.f32 %v1261, %v3265
  %v3267 = vand.u32 %v3266, 4294901760
  %v3268 = vsub.f32 %v3266, %v3267
  %v3269 = vand.u32 %v3268, 4294901760
  %3270 = vmatpush1.msra.mxu0 %v3269
  %3271 = vmatprep.subr.mxu0 0.0
  %v3272 = vand.u32 %v1262, 4294901760
  %v3273 = vsub.f32 %v1262, %v3272
  %v3274 = vand.u32 %v3273, 4294901760
  %v3275 = vsub.f32 %v3273, %v3274
  %v3276 = vand.u32 %v3275, 4294901760
  %3277 = vmatpush1.msra.mxu0 %v3276
  %3278 = vmatprep.subr.mxu0 0.0
  %v3279 = vand.u32 %v1263, 4294901760
  %v3280 = vsub.f32 %v1263, %v3279
  %v3281 = vand.u32 %v3280, 4294901760
  %v3282 = vsub.f32 %v3280, %v3281
  %v3283 = vand.u32 %v3282, 4294901760
  %3284 = vmatpush1.msra.mxu0 %v3283
  %3285 = vmatprep.subr.mxu0 0.0
  %v3286 = vand.u32 %v1264, 4294901760
  %v3287 = vsub.f32 %v1264, %v3286
  %v3288 = vand.u32 %v3287, 4294901760
  %v3289 = vsub.f32 %v3287, %v3288
  %v3290 = vand.u32 %v3289, 4294901760
  %3291 = vmatpush1.msra.mxu0 %v3290
  %3292 = vmatprep.subr.mxu0 0.0
  %v3293 = vand.u32 %v1265, 4294901760
  %v3294 = vsub.f32 %v1265, %v3293
  %v3295 = vand.u32 %v3294, 4294901760
  %v3296 = vsub.f32 %v3294, %v3295
  %v3297 = vand.u32 %v3296, 4294901760
  %3298 = vmatpush1.msra.mxu0 %v3297
  %3299 = vmatprep.subr.mxu0 0.0
  %v3300 = vand.u32 %v1266, 4294901760
  %v3301 = vsub.f32 %v1266, %v3300
  %v3302 = vand.u32 %v3301, 4294901760
  %v3303 = vsub.f32 %v3301, %v3302
  %v3304 = vand.u32 %v3303, 4294901760
  %3305 = vmatpush1.msra.mxu0 %v3304
  %3306 = vmatprep.subr.mxu0 0.0
  %v3307 = vand.u32 %v1267, 4294901760
  %v3308 = vsub.f32 %v1267, %v3307
  %v3309 = vand.u32 %v3308, 4294901760
  %v3310 = vsub.f32 %v3308, %v3309
  %v3311 = vand.u32 %v3310, 4294901760
  %3312 = vmatpush1.msra.mxu0 %v3311
  %3313 = vmatprep.subr.mxu0 0.0
  %v3314 = vand.u32 %v1268, 4294901760
  %v3315 = vsub.f32 %v1268, %v3314
  %v3316 = vand.u32 %v3315, 4294901760
  %v3317 = vsub.f32 %v3315, %v3316
  %v3318 = vand.u32 %v3317, 4294901760
  %3319 = vmatpush1.msra.mxu0 %v3318
  %3320 = vmatprep.subr.mxu0 0.0
  %v3321 = vand.u32 %v1269, 4294901760
  %v3322 = vsub.f32 %v1269, %v3321
  %v3323 = vand.u32 %v3322, 4294901760
  %v3324 = vsub.f32 %v3322, %v3323
  %v3325 = vand.u32 %v3324, 4294901760
  %3326 = vmatpush1.msra.mxu0 %v3325
  %3327 = vmatprep.subr.mxu0 0.0
  %v3328 = vand.u32 %v1270, 4294901760
  %v3329 = vsub.f32 %v1270, %v3328
  %v3330 = vand.u32 %v3329, 4294901760
  %v3331 = vsub.f32 %v3329, %v3330
  %v3332 = vand.u32 %v3331, 4294901760
  %3333 = vmatpush1.msra.mxu0 %v3332
  %3334 = vmatprep.subr.mxu0 0.0
  %v3335 = vand.u32 %v1271, 4294901760
  %v3336 = vsub.f32 %v1271, %v3335
  %v3337 = vand.u32 %v3336, 4294901760
  %v3338 = vsub.f32 %v3336, %v3337
  %v3339 = vand.u32 %v3338, 4294901760
  %3340 = vmatpush1.msra.mxu0 %v3339
  %3341 = vmatprep.subr.mxu0 0.0
  %v3342 = vand.u32 %v1272, 4294901760
  %v3343 = vsub.f32 %v1272, %v3342
  %v3344 = vand.u32 %v3343, 4294901760
  %v3345 = vsub.f32 %v3343, %v3344
  %v3346 = vand.u32 %v3345, 4294901760
  %3347 = vmatpush1.msra.mxu0 %v3346
  %3348 = vmatprep.subr.mxu0 0.0
  %v3349 = vand.u32 %v1273, 4294901760
  %v3350 = vsub.f32 %v1273, %v3349
  %v3351 = vand.u32 %v3350, 4294901760
  %v3352 = vsub.f32 %v3350, %v3351
  %v3353 = vand.u32 %v3352, 4294901760
  %3354 = vmatpush1.msra.mxu0 %v3353
  %3355 = vmatprep.subr.mxu0 0.0
  %v3356 = vand.u32 %v1274, 4294901760
  %v3357 = vsub.f32 %v1274, %v3356
  %v3358 = vand.u32 %v3357, 4294901760
  %v3359 = vsub.f32 %v3357, %v3358
  %v3360 = vand.u32 %v3359, 4294901760
  %3361 = vmatpush1.msra.mxu0 %v3360
  %3362 = vmatprep.subr.mxu0 0.0
  %v3363 = vand.u32 %v1275, 4294901760
  %v3364 = vsub.f32 %v1275, %v3363
  %v3365 = vand.u32 %v3364, 4294901760
  %v3366 = vsub.f32 %v3364, %v3365
  %v3367 = vand.u32 %v3366, 4294901760
  %3368 = vmatpush1.msra.mxu0 %v3367
  %3369 = vmatprep.subr.mxu0 0.0
  %v3370 = vand.u32 %v1276, 4294901760
  %v3371 = vsub.f32 %v1276, %v3370
  %v3372 = vand.u32 %v3371, 4294901760
  %v3373 = vsub.f32 %v3371, %v3372
  %v3374 = vand.u32 %v3373, 4294901760
  %3375 = vmatpush1.msra.mxu0 %v3374
  %v3376 = vand.u32 %v1149, 4294901760
  %3377 = vmatprep.mubr.f32.mxu0 %v3376
  %v3378 = vand.u32 %v1135, 4294901760
  %3379 = vmatmul.mubr.f32.gmra.mrb[0].mxu0 %v3378
  %v3380 = vpop.f32.mrb[0].mxu0
  %v3381 = vadd.f32 %v3149, %v3380
  %v3382 = vpop.f32.mrb[0].mxu0
  %3383 = vdwg.mxu0
  %3384 = vmatprep.subr.mxu0 0.0
  %v3385 = vand.u32 %v1245, 4294901760
  %v3386 = vsub.f32 %v1245, %v3385
  %3387 = vmatpush1.msra.mxu0 %v3386
  %3388 = vmatprep.subr.mxu0 0.0
  %v3389 = vand.u32 %v1246, 4294901760
  %v3390 = vsub.f32 %v1246, %v3389
  %3391 = vmatpush1.msra.mxu0 %v3390
  %3392 = vmatprep.subr.mxu0 0.0
  %v3393 = vand.u32 %v1247, 4294901760
  %v3394 = vsub.f32 %v1247, %v3393
  %3395 = vmatpush1.msra.mxu0 %v3394
  %3396 = vmatprep.subr.mxu0 0.0
  %v3397 = vand.u32 %v1248, 4294901760
  %v3398 = vsub.f32 %v1248, %v3397
  %3399 = vmatpush1.msra.mxu0 %v3398
  %3400 = vmatprep.subr.mxu0 0.0
  %v3401 = vand.u32 %v1249, 4294901760
  %v3402 = vsub.f32 %v1249, %v3401
  %3403 = vmatpush1.msra.mxu0 %v3402
  %3404 = vmatprep.subr.mxu0 0.0
  %v3405 = vand.u32 %v1250, 4294901760
  %v3406 = vsub.f32 %v1250, %v3405
  %3407 = vmatpush1.msra.mxu0 %v3406
  %3408 = vmatprep.subr.mxu0 0.0
  %v3409 = vand.u32 %v1251, 4294901760
  %v3410 = vsub.f32 %v1251, %v3409
  %3411 = vmatpush1.msra.mxu0 %v3410
  %3412 = vmatprep.subr.mxu0 0.0
  %v3413 = vand.u32 %v1252, 4294901760
  %v3414 = vsub.f32 %v1252, %v3413
  %3415 = vmatpush1.msra.mxu0 %v3414
  %3416 = vmatprep.subr.mxu0 0.0
  %v3417 = vand.u32 %v1253, 4294901760
  %v3418 = vsub.f32 %v1253, %v3417
  %3419 = vmatpush1.msra.mxu0 %v3418
  %3420 = vmatprep.subr.mxu0 0.0
  %v3421 = vand.u32 %v1254, 4294901760
  %v3422 = vsub.f32 %v1254, %v3421
  %3423 = vmatpush1.msra.mxu0 %v3422
  %3424 = vmatprep.subr.mxu0 0.0
  %v3425 = vand.u32 %v1255, 4294901760
  %v3426 = vsub.f32 %v1255, %v3425
  %3427 = vmatpush1.msra.mxu0 %v3426
  %3428 = vmatprep.subr.mxu0 0.0
  %v3429 = vand.u32 %v1256, 4294901760
  %v3430 = vsub.f32 %v1256, %v3429
  %3431 = vmatpush1.msra.mxu0 %v3430
  %3432 = vmatprep.subr.mxu0 0.0
  %v3433 = vand.u32 %v1257, 4294901760
  %v3434 = vsub.f32 %v1257, %v3433
  %3435 = vmatpush1.msra.mxu0 %v3434
  %3436 = vmatprep.subr.mxu0 0.0
  %v3437 = vand.u32 %v1258, 4294901760
  %v3438 = vsub.f32 %v1258, %v3437
  %3439 = vmatpush1.msra.mxu0 %v3438
  %3440 = vmatprep.subr.mxu0 0.0
  %v3441 = vand.u32 %v1259, 4294901760
  %v3442 = vsub.f32 %v1259, %v3441
  %3443 = vmatpush1.msra.mxu0 %v3442
  %3444 = vmatprep.subr.mxu0 0.0
  %v3445 = vand.u32 %v1260, 4294901760
  %v3446 = vsub.f32 %v1260, %v3445
  %3447 = vmatpush1.msra.mxu0 %v3446
  %3448 = vmatprep.subr.mxu0 0.0
  %v3449 = vand.u32 %v1261, 4294901760
  %v3450 = vsub.f32 %v1261, %v3449
  %3451 = vmatpush1.msra.mxu0 %v3450
  %3452 = vmatprep.subr.mxu0 0.0
  %v3453 = vand.u32 %v1262, 4294901760
  %v3454 = vsub.f32 %v1262, %v3453
  %3455 = vmatpush1.msra.mxu0 %v3454
  %3456 = vmatprep.subr.mxu0 0.0
  %v3457 = vand.u32 %v1263, 4294901760
  %v3458 = vsub.f32 %v1263, %v3457
  %3459 = vmatpush1.msra.mxu0 %v3458
  %3460 = vmatprep.subr.mxu0 0.0
  %v3461 = vand.u32 %v1264, 4294901760
  %v3462 = vsub.f32 %v1264, %v3461
  %3463 = vmatpush1.msra.mxu0 %v3462
  %3464 = vmatprep.subr.mxu0 0.0
  %v3465 = vand.u32 %v1265, 4294901760
  %v3466 = vsub.f32 %v1265, %v3465
  %3467 = vmatpush1.msra.mxu0 %v3466
  %3468 = vmatprep.subr.mxu0 0.0
  %v3469 = vand.u32 %v1266, 4294901760
  %v3470 = vsub.f32 %v1266, %v3469
  %3471 = vmatpush1.msra.mxu0 %v3470
  %3472 = vmatprep.subr.mxu0 0.0
  %v3473 = vand.u32 %v1267, 4294901760
  %v3474 = vsub.f32 %v1267, %v3473
  %3475 = vmatpush1.msra.mxu0 %v3474
  %3476 = vmatprep.subr.mxu0 0.0
  %v3477 = vand.u32 %v1268, 4294901760
  %v3478 = vsub.f32 %v1268, %v3477
  %3479 = vmatpush1.msra.mxu0 %v3478
  %3480 = vmatprep.subr.mxu0 0.0
  %v3481 = vand.u32 %v1269, 4294901760
  %v3482 = vsub.f32 %v1269, %v3481
  %3483 = vmatpush1.msra.mxu0 %v3482
  %3484 = vmatprep.subr.mxu0 0.0
  %v3485 = vand.u32 %v1270, 4294901760
  %v3486 = vsub.f32 %v1270, %v3485
  %3487 = vmatpush1.msra.mxu0 %v3486
  %3488 = vmatprep.subr.mxu0 0.0
  %v3489 = vand.u32 %v1271, 4294901760
  %v3490 = vsub.f32 %v1271, %v3489
  %3491 = vmatpush1.msra.mxu0 %v3490
  %3492 = vmatprep.subr.mxu0 0.0
  %v3493 = vand.u32 %v1272, 4294901760
  %v3494 = vsub.f32 %v1272, %v3493
  %3495 = vmatpush1.msra.mxu0 %v3494
  %3496 = vmatprep.subr.mxu0 0.0
  %v3497 = vand.u32 %v1273, 4294901760
  %v3498 = vsub.f32 %v1273, %v3497
  %3499 = vmatpush1.msra.mxu0 %v3498
  %3500 = vmatprep.subr.mxu0 0.0
  %v3501 = vand.u32 %v1274, 4294901760
  %v3502 = vsub.f32 %v1274, %v3501
  %3503 = vmatpush1.msra.mxu0 %v3502
  %3504 = vmatprep.subr.mxu0 0.0
  %v3505 = vand.u32 %v1275, 4294901760
  %v3506 = vsub.f32 %v1275, %v3505
  %3507 = vmatpush1.msra.mxu0 %v3506
  %3508 = vmatprep.subr.mxu0 0.0
  %v3509 = vand.u32 %v1276, 4294901760
  %v3510 = vsub.f32 %v1276, %v3509
  %3511 = vmatpush1.msra.mxu0 %v3510
  %v3512 = vand.u32 %v1149, 4294901760
  %v3513 = vsub.f32 %v1149, %v3512
  %3514 = vmatprep.mubr.f32.mxu0 %v3513
  %v3515 = vand.u32 %v1135, 4294901760
  %v3516 = vsub.f32 %v1135, %v3515
  %3517 = vmatmul.mubr.f32.gmra.mrb[0].mxu0 %v3516
  %v3518 = vpop.f32.mrb[0].mxu0
  %v3519 = vadd.f32 %v3381, %v3518
  %v3520 = vpop.f32.mrb[0].mxu0
  %3521 = vdwg.mxu0
  %3522 = vmatprep.subr.mxu0 0.0
  %v3523 = vand.u32 %v1245, 4294901760
  %3524 = vmatpush1.msra.mxu0 %v3523
  %3525 = vmatprep.subr.mxu0 0.0
  %v3526 = vand.u32 %v1246, 4294901760
  %3527 = vmatpush1.msra.mxu0 %v3526
  %3528 = vmatprep.subr.mxu0 0.0
  %v3529 = vand.u32 %v1247, 4294901760
  %3530 = vmatpush1.msra.mxu0 %v3529
  %3531 = vmatprep.subr.mxu0 0.0
  %v3532 = vand.u32 %v1248, 4294901760
  %3533 = vmatpush1.msra.mxu0 %v3532
  %3534 = vmatprep.subr.mxu0 0.0
  %v3535 = vand.u32 %v1249, 4294901760
  %3536 = vmatpush1.msra.mxu0 %v3535
  %3537 = vmatprep.subr.mxu0 0.0
  %v3538 = vand.u32 %v1250, 4294901760
  %3539 = vmatpush1.msra.mxu0 %v3538
  %3540 = vmatprep.subr.mxu0 0.0
  %v3541 = vand.u32 %v1251, 4294901760
  %3542 = vmatpush1.msra.mxu0 %v3541
  %3543 = vmatprep.subr.mxu0 0.0
  %v3544 = vand.u32 %v1252, 4294901760
  %3545 = vmatpush1.msra.mxu0 %v3544
  %3546 = vmatprep.subr.mxu0 0.0
  %v3547 = vand.u32 %v1253, 4294901760
  %3548 = vmatpush1.msra.mxu0 %v3547
  %3549 = vmatprep.subr.mxu0 0.0
  %v3550 = vand.u32 %v1254, 4294901760
  %3551 = vmatpush1.msra.mxu0 %v3550
  %3552 = vmatprep.subr.mxu0 0.0
  %v3553 = vand.u32 %v1255, 4294901760
  %3554 = vmatpush1.msra.mxu0 %v3553
  %3555 = vmatprep.subr.mxu0 0.0
  %v3556 = vand.u32 %v1256, 4294901760
  %3557 = vmatpush1.msra.mxu0 %v3556
  %3558 = vmatprep.subr.mxu0 0.0
  %v3559 = vand.u32 %v1257, 4294901760
  %3560 = vmatpush1.msra.mxu0 %v3559
  %3561 = vmatprep.subr.mxu0 0.0
  %v3562 = vand.u32 %v1258, 4294901760
  %3563 = vmatpush1.msra.mxu0 %v3562
  %3564 = vmatprep.subr.mxu0 0.0
  %v3565 = vand.u32 %v1259, 4294901760
  %3566 = vmatpush1.msra.mxu0 %v3565
  %3567 = vmatprep.subr.mxu0 0.0
  %v3568 = vand.u32 %v1260, 4294901760
  %3569 = vmatpush1.msra.mxu0 %v3568
  %3570 = vmatprep.subr.mxu0 0.0
  %v3571 = vand.u32 %v1261, 4294901760
  %3572 = vmatpush1.msra.mxu0 %v3571
  %3573 = vmatprep.subr.mxu0 0.0
  %v3574 = vand.u32 %v1262, 4294901760
  %3575 = vmatpush1.msra.mxu0 %v3574
  %3576 = vmatprep.subr.mxu0 0.0
  %v3577 = vand.u32 %v1263, 4294901760
  %3578 = vmatpush1.msra.mxu0 %v3577
  %3579 = vmatprep.subr.mxu0 0.0
  %v3580 = vand.u32 %v1264, 4294901760
  %3581 = vmatpush1.msra.mxu0 %v3580
  %3582 = vmatprep.subr.mxu0 0.0
  %v3583 = vand.u32 %v1265, 4294901760
  %3584 = vmatpush1.msra.mxu0 %v3583
  %3585 = vmatprep.subr.mxu0 0.0
  %v3586 = vand.u32 %v1266, 4294901760
  %3587 = vmatpush1.msra.mxu0 %v3586
  %3588 = vmatprep.subr.mxu0 0.0
  %v3589 = vand.u32 %v1267, 4294901760
  %3590 = vmatpush1.msra.mxu0 %v3589
  %3591 = vmatprep.subr.mxu0 0.0
  %v3592 = vand.u32 %v1268, 4294901760
  %3593 = vmatpush1.msra.mxu0 %v3592
  %3594 = vmatprep.subr.mxu0 0.0
  %v3595 = vand.u32 %v1269, 4294901760
  %3596 = vmatpush1.msra.mxu0 %v3595
  %3597 = vmatprep.subr.mxu0 0.0
  %v3598 = vand.u32 %v1270, 4294901760
  %3599 = vmatpush1.msra.mxu0 %v3598
  %3600 = vmatprep.subr.mxu0 0.0
  %v3601 = vand.u32 %v1271, 4294901760
  %3602 = vmatpush1.msra.mxu0 %v3601
  %3603 = vmatprep.subr.mxu0 0.0
  %v3604 = vand.u32 %v1272, 4294901760
  %3605 = vmatpush1.msra.mxu0 %v3604
  %3606 = vmatprep.subr.mxu0 0.0
  %v3607 = vand.u32 %v1273, 4294901760
  %3608 = vmatpush1.msra.mxu0 %v3607
  %3609 = vmatprep.subr.mxu0 0.0
  %v3610 = vand.u32 %v1274, 4294901760
  %3611 = vmatpush1.msra.mxu0 %v3610
  %3612 = vmatprep.subr.mxu0 0.0
  %v3613 = vand.u32 %v1275, 4294901760
  %3614 = vmatpush1.msra.mxu0 %v3613
  %3615 = vmatprep.subr.mxu0 0.0
  %v3616 = vand.u32 %v1276, 4294901760
  %3617 = vmatpush1.msra.mxu0 %v3616
  %v3618 = vand.u32 %v1149, 4294901760
  %v3619 = vsub.f32 %v1149, %v3618
  %v3620 = vand.u32 %v3619, 4294901760
  %3621 = vmatprep.mubr.f32.mxu0 %v3620
  %v3622 = vand.u32 %v1135, 4294901760
  %v3623 = vsub.f32 %v1135, %v3622
  %v3624 = vand.u32 %v3623, 4294901760
  %3625 = vmatmul.mubr.f32.gmra.mrb[0].mxu0 %v3624
  %v3626 = vpop.f32.mrb[0].mxu0
  %v3627 = vadd.f32 %v3519, %v3626
  %v3628 = vpop.f32.mrb[0].mxu0
  %3629 = vdwg.mxu0
  %3630 = vmatprep.subr.mxu0 0.0
  %v3631 = vand.u32 %v1245, 4294901760
  %v3632 = vsub.f32 %v1245, %v3631
  %v3633 = vand.u32 %v3632, 4294901760
  %3634 = vmatpush1.msra.mxu0 %v3633
  %3635 = vmatprep.subr.mxu0 0.0
  %v3636 = vand.u32 %v1246, 4294901760
  %v3637 = vsub.f32 %v1246, %v3636
  %v3638 = vand.u32 %v3637, 4294901760
  %3639 = vmatpush1.msra.mxu0 %v3638
  %3640 = vmatprep.subr.mxu0 0.0
  %v3641 = vand.u32 %v1247, 4294901760
  %v3642 = vsub.f32 %v1247, %v3641
  %v3643 = vand.u32 %v3642, 4294901760
  %3644 = vmatpush1.msra.mxu0 %v3643
  %3645 = vmatprep.subr.mxu0 0.0
  %v3646 = vand.u32 %v1248, 4294901760
  %v3647 = vsub.f32 %v1248, %v3646
  %v3648 = vand.u32 %v3647, 4294901760
  %3649 = vmatpush1.msra.mxu0 %v3648
  %3650 = vmatprep.subr.mxu0 0.0
  %v3651 = vand.u32 %v1249, 4294901760
  %v3652 = vsub.f32 %v1249, %v3651
  %v3653 = vand.u32 %v3652, 4294901760
  %3654 = vmatpush1.msra.mxu0 %v3653
  %3655 = vmatprep.subr.mxu0 0.0
  %v3656 = vand.u32 %v1250, 4294901760
  %v3657 = vsub.f32 %v1250, %v3656
  %v3658 = vand.u32 %v3657, 4294901760
  %3659 = vmatpush1.msra.mxu0 %v3658
  %3660 = vmatprep.subr.mxu0 0.0
  %v3661 = vand.u32 %v1251, 4294901760
  %v3662 = vsub.f32 %v1251, %v3661
  %v3663 = vand.u32 %v3662, 4294901760
  %3664 = vmatpush1.msra.mxu0 %v3663
  %3665 = vmatprep.subr.mxu0 0.0
  %v3666 = vand.u32 %v1252, 4294901760
  %v3667 = vsub.f32 %v1252, %v3666
  %v3668 = vand.u32 %v3667, 4294901760
  %3669 = vmatpush1.msra.mxu0 %v3668
  %3670 = vmatprep.subr.mxu0 0.0
  %v3671 = vand.u32 %v1253, 4294901760
  %v3672 = vsub.f32 %v1253, %v3671
  %v3673 = vand.u32 %v3672, 4294901760
  %3674 = vmatpush1.msra.mxu0 %v3673
  %3675 = vmatprep.subr.mxu0 0.0
  %v3676 = vand.u32 %v1254, 4294901760
  %v3677 = vsub.f32 %v1254, %v3676
  %v3678 = vand.u32 %v3677, 4294901760
  %3679 = vmatpush1.msra.mxu0 %v3678
  %3680 = vmatprep.subr.mxu0 0.0
  %v3681 = vand.u32 %v1255, 4294901760
  %v3682 = vsub.f32 %v1255, %v3681
  %v3683 = vand.u32 %v3682, 4294901760
  %3684 = vmatpush1.msra.mxu0 %v3683
  %3685 = vmatprep.subr.mxu0 0.0
  %v3686 = vand.u32 %v1256, 4294901760
  %v3687 = vsub.f32 %v1256, %v3686
  %v3688 = vand.u32 %v3687, 4294901760
  %3689 = vmatpush1.msra.mxu0 %v3688
  %3690 = vmatprep.subr.mxu0 0.0
  %v3691 = vand.u32 %v1257, 4294901760
  %v3692 = vsub.f32 %v1257, %v3691
  %v3693 = vand.u32 %v3692, 4294901760
  %3694 = vmatpush1.msra.mxu0 %v3693
  %3695 = vmatprep.subr.mxu0 0.0
  %v3696 = vand.u32 %v1258, 4294901760
  %v3697 = vsub.f32 %v1258, %v3696
  %v3698 = vand.u32 %v3697, 4294901760
  %3699 = vmatpush1.msra.mxu0 %v3698
  %3700 = vmatprep.subr.mxu0 0.0
  %v3701 = vand.u32 %v1259, 4294901760
  %v3702 = vsub.f32 %v1259, %v3701
  %v3703 = vand.u32 %v3702, 4294901760
  %3704 = vmatpush1.msra.mxu0 %v3703
  %3705 = vmatprep.subr.mxu0 0.0
  %v3706 = vand.u32 %v1260, 4294901760
  %v3707 = vsub.f32 %v1260, %v3706
  %v3708 = vand.u32 %v3707, 4294901760
  %3709 = vmatpush1.msra.mxu0 %v3708
  %3710 = vmatprep.subr.mxu0 0.0
  %v3711 = vand.u32 %v1261, 4294901760
  %v3712 = vsub.f32 %v1261, %v3711
  %v3713 = vand.u32 %v3712, 4294901760
  %3714 = vmatpush1.msra.mxu0 %v3713
  %3715 = vmatprep.subr.mxu0 0.0
  %v3716 = vand.u32 %v1262, 4294901760
  %v3717 = vsub.f32 %v1262, %v3716
  %v3718 = vand.u32 %v3717, 4294901760
  %3719 = vmatpush1.msra.mxu0 %v3718
  %3720 = vmatprep.subr.mxu0 0.0
  %v3721 = vand.u32 %v1263, 4294901760
  %v3722 = vsub.f32 %v1263, %v3721
  %v3723 = vand.u32 %v3722, 4294901760
  %3724 = vmatpush1.msra.mxu0 %v3723
  %3725 = vmatprep.subr.mxu0 0.0
  %v3726 = vand.u32 %v1264, 4294901760
  %v3727 = vsub.f32 %v1264, %v3726
  %v3728 = vand.u32 %v3727, 4294901760
  %3729 = vmatpush1.msra.mxu0 %v3728
  %3730 = vmatprep.subr.mxu0 0.0
  %v3731 = vand.u32 %v1265, 4294901760
  %v3732 = vsub.f32 %v1265, %v3731
  %v3733 = vand.u32 %v3732, 4294901760
  %3734 = vmatpush1.msra.mxu0 %v3733
  %3735 = vmatprep.subr.mxu0 0.0
  %v3736 = vand.u32 %v1266, 4294901760
  %v3737 = vsub.f32 %v1266, %v3736
  %v3738 = vand.u32 %v3737, 4294901760
  %3739 = vmatpush1.msra.mxu0 %v3738
  %3740 = vmatprep.subr.mxu0 0.0
  %v3741 = vand.u32 %v1267, 4294901760
  %v3742 = vsub.f32 %v1267, %v3741
  %v3743 = vand.u32 %v3742, 4294901760
  %3744 = vmatpush1.msra.mxu0 %v3743
  %3745 = vmatprep.subr.mxu0 0.0
  %v3746 = vand.u32 %v1268, 4294901760
  %v3747 = vsub.f32 %v1268, %v3746
  %v3748 = vand.u32 %v3747, 4294901760
  %3749 = vmatpush1.msra.mxu0 %v3748
  %3750 = vmatprep.subr.mxu0 0.0
  %v3751 = vand.u32 %v1269, 4294901760
  %v3752 = vsub.f32 %v1269, %v3751
  %v3753 = vand.u32 %v3752, 4294901760
  %3754 = vmatpush1.msra.mxu0 %v3753
  %3755 = vmatprep.subr.mxu0 0.0
  %v3756 = vand.u32 %v1270, 4294901760
  %v3757 = vsub.f32 %v1270, %v3756
  %v3758 = vand.u32 %v3757, 4294901760
  %3759 = vmatpush1.msra.mxu0 %v3758
  %3760 = vmatprep.subr.mxu0 0.0
  %v3761 = vand.u32 %v1271, 4294901760
  %v3762 = vsub.f32 %v1271, %v3761
  %v3763 = vand.u32 %v3762, 4294901760
  %3764 = vmatpush1.msra.mxu0 %v3763
  %3765 = vmatprep.subr.mxu0 0.0
  %v3766 = vand.u32 %v1272, 4294901760
  %v3767 = vsub.f32 %v1272, %v3766
  %v3768 = vand.u32 %v3767, 4294901760
  %3769 = vmatpush1.msra.mxu0 %v3768
  %3770 = vmatprep.subr.mxu0 0.0
  %v3771 = vand.u32 %v1273, 4294901760
  %v3772 = vsub.f32 %v1273, %v3771
  %v3773 = vand.u32 %v3772, 4294901760
  %3774 = vmatpush1.msra.mxu0 %v3773
  %3775 = vmatprep.subr.mxu0 0.0
  %v3776 = vand.u32 %v1274, 4294901760
  %v3777 = vsub.f32 %v1274, %v3776
  %v3778 = vand.u32 %v3777, 4294901760
  %3779 = vmatpush1.msra.mxu0 %v3778
  %3780 = vmatprep.subr.mxu0 0.0
  %v3781 = vand.u32 %v1275, 4294901760
  %v3782 = vsub.f32 %v1275, %v3781
  %v3783 = vand.u32 %v3782, 4294901760
  %3784 = vmatpush1.msra.mxu0 %v3783
  %3785 = vmatprep.subr.mxu0 0.0
  %v3786 = vand.u32 %v1276, 4294901760
  %v3787 = vsub.f32 %v1276, %v3786
  %v3788 = vand.u32 %v3787, 4294901760
  %3789 = vmatpush1.msra.mxu0 %v3788
  %v3790 = vand.u32 %v1149, 4294901760
  %3791 = vmatprep.mubr.f32.mxu0 %v3790
  %v3792 = vand.u32 %v1135, 4294901760
  %3793 = vmatmul.mubr.f32.gmra.mrb[0].mxu0 %v3792
  %v3794 = vpop.f32.mrb[0].mxu0
  %v3795 = vadd.f32 %v3627, %v3794
  %v3796 = vpop.f32.mrb[0].mxu0
  %3797 = vdwg.mxu0
  %3798 = vmatprep.subr.mxu0 0.0
  %v3799 = vand.u32 %v1245, 4294901760
  %3800 = vmatpush1.msra.mxu0 %v3799
  %3801 = vmatprep.subr.mxu0 0.0
  %v3802 = vand.u32 %v1246, 4294901760
  %3803 = vmatpush1.msra.mxu0 %v3802
  %3804 = vmatprep.subr.mxu0 0.0
  %v3805 = vand.u32 %v1247, 4294901760
  %3806 = vmatpush1.msra.mxu0 %v3805
  %3807 = vmatprep.subr.mxu0 0.0
  %v3808 = vand.u32 %v1248, 4294901760
  %3809 = vmatpush1.msra.mxu0 %v3808
  %3810 = vmatprep.subr.mxu0 0.0
  %v3811 = vand.u32 %v1249, 4294901760
  %3812 = vmatpush1.msra.mxu0 %v3811
  %3813 = vmatprep.subr.mxu0 0.0
  %v3814 = vand.u32 %v1250, 4294901760
  %3815 = vmatpush1.msra.mxu0 %v3814
  %3816 = vmatprep.subr.mxu0 0.0
  %v3817 = vand.u32 %v1251, 4294901760
  %3818 = vmatpush1.msra.mxu0 %v3817
  %3819 = vmatprep.subr.mxu0 0.0
  %v3820 = vand.u32 %v1252, 4294901760
  %3821 = vmatpush1.msra.mxu0 %v3820
  %3822 = vmatprep.subr.mxu0 0.0
  %v3823 = vand.u32 %v1253, 4294901760
  %3824 = vmatpush1.msra.mxu0 %v3823
  %3825 = vmatprep.subr.mxu0 0.0
  %v3826 = vand.u32 %v1254, 4294901760
  %3827 = vmatpush1.msra.mxu0 %v3826
  %3828 = vmatprep.subr.mxu0 0.0
  %v3829 = vand.u32 %v1255, 4294901760
  %3830 = vmatpush1.msra.mxu0 %v3829
  %3831 = vmatprep.subr.mxu0 0.0
  %v3832 = vand.u32 %v1256, 4294901760
  %3833 = vmatpush1.msra.mxu0 %v3832
  %3834 = vmatprep.subr.mxu0 0.0
  %v3835 = vand.u32 %v1257, 4294901760
  %3836 = vmatpush1.msra.mxu0 %v3835
  %3837 = vmatprep.subr.mxu0 0.0
  %v3838 = vand.u32 %v1258, 4294901760
  %3839 = vmatpush1.msra.mxu0 %v3838
  %3840 = vmatprep.subr.mxu0 0.0
  %v3841 = vand.u32 %v1259, 4294901760
  %3842 = vmatpush1.msra.mxu0 %v3841
  %3843 = vmatprep.subr.mxu0 0.0
  %v3844 = vand.u32 %v1260, 4294901760
  %3845 = vmatpush1.msra.mxu0 %v3844
  %3846 = vmatprep.subr.mxu0 0.0
  %v3847 = vand.u32 %v1261, 4294901760
  %3848 = vmatpush1.msra.mxu0 %v3847
  %3849 = vmatprep.subr.mxu0 0.0
  %v3850 = vand.u32 %v1262, 4294901760
  %3851 = vmatpush1.msra.mxu0 %v3850
  %3852 = vmatprep.subr.mxu0 0.0
  %v3853 = vand.u32 %v1263, 4294901760
  %3854 = vmatpush1.msra.mxu0 %v3853
  %3855 = vmatprep.subr.mxu0 0.0
  %v3856 = vand.u32 %v1264, 4294901760
  %3857 = vmatpush1.msra.mxu0 %v3856
  %3858 = vmatprep.subr.mxu0 0.0
  %v3859 = vand.u32 %v1265, 4294901760
  %3860 = vmatpush1.msra.mxu0 %v3859
  %3861 = vmatprep.subr.mxu0 0.0
  %v3862 = vand.u32 %v1266, 4294901760
  %3863 = vmatpush1.msra.mxu0 %v3862
  %3864 = vmatprep.subr.mxu0 0.0
  %v3865 = vand.u32 %v1267, 4294901760
  %3866 = vmatpush1.msra.mxu0 %v3865
  %3867 = vmatprep.subr.mxu0 0.0
  %v3868 = vand.u32 %v1268, 4294901760
  %3869 = vmatpush1.msra.mxu0 %v3868
  %3870 = vmatprep.subr.mxu0 0.0
  %v3871 = vand.u32 %v1269, 4294901760
  %3872 = vmatpush1.msra.mxu0 %v3871
  %3873 = vmatprep.subr.mxu0 0.0
  %v3874 = vand.u32 %v1270, 4294901760
  %3875 = vmatpush1.msra.mxu0 %v3874
  %3876 = vmatprep.subr.mxu0 0.0
  %v3877 = vand.u32 %v1271, 4294901760
  %3878 = vmatpush1.msra.mxu0 %v3877
  %3879 = vmatprep.subr.mxu0 0.0
  %v3880 = vand.u32 %v1272, 4294901760
  %3881 = vmatpush1.msra.mxu0 %v3880
  %3882 = vmatprep.subr.mxu0 0.0
  %v3883 = vand.u32 %v1273, 4294901760
  %3884 = vmatpush1.msra.mxu0 %v3883
  %3885 = vmatprep.subr.mxu0 0.0
  %v3886 = vand.u32 %v1274, 4294901760
  %3887 = vmatpush1.msra.mxu0 %v3886
  %3888 = vmatprep.subr.mxu0 0.0
  %v3889 = vand.u32 %v1275, 4294901760
  %3890 = vmatpush1.msra.mxu0 %v3889
  %3891 = vmatprep.subr.mxu0 0.0
  %v3892 = vand.u32 %v1276, 4294901760
  %3893 = vmatpush1.msra.mxu0 %v3892
  %v3894 = vand.u32 %v1149, 4294901760
  %3895 = vmatprep.mubr.f32.mxu0 %v3894
  %v3896 = vand.u32 %v1135, 4294901760
  %3897 = vmatmul.mubr.f32.gmra.mrb[0].mxu0 %v3896
  %v3898 = vpop.f32.mrb[0].mxu0
  %v3899 = vadd.f32 %v3795, %v3898
  %v3900 = vpop.f32.mrb[0].mxu0
  %3901 = vdwg.mxu0
  %3902 = vmatprep.subr.mxu0 0.0
  %v3903 = vand.u32 %v1277, 4294901760
  %3904 = vmatpush1.msra.mxu0 %v3903
  %3905 = vmatprep.subr.mxu0 0.0
  %v3906 = vand.u32 %v1278, 4294901760
  %3907 = vmatpush1.msra.mxu0 %v3906
  %3908 = vmatprep.subr.mxu0 0.0
  %v3909 = vand.u32 %v1279, 4294901760
  %3910 = vmatpush1.msra.mxu0 %v3909
  %3911 = vmatprep.subr.mxu0 0.0
  %v3912 = vand.u32 %v1280, 4294901760
  %3913 = vmatpush1.msra.mxu0 %v3912
  %3914 = vmatprep.subr.mxu0 0.0
  %v3915 = vand.u32 %v1281, 4294901760
  %3916 = vmatpush1.msra.mxu0 %v3915
  %3917 = vmatprep.subr.mxu0 0.0
  %v3918 = vand.u32 %v1282, 4294901760
  %3919 = vmatpush1.msra.mxu0 %v3918
  %3920 = vmatprep.subr.mxu0 0.0
  %v3921 = vand.u32 %v1283, 4294901760
  %3922 = vmatpush1.msra.mxu0 %v3921
  %3923 = vmatprep.subr.mxu0 0.0
  %v3924 = vand.u32 %v1284, 4294901760
  %3925 = vmatpush1.msra.mxu0 %v3924
  %3926 = vmatprep.subr.mxu0 0.0
  %v3927 = vand.u32 %v1285, 4294901760
  %3928 = vmatpush1.msra.mxu0 %v3927
  %3929 = vmatprep.subr.mxu0 0.0
  %v3930 = vand.u32 %v1286, 4294901760
  %3931 = vmatpush1.msra.mxu0 %v3930
  %3932 = vmatprep.subr.mxu0 0.0
  %v3933 = vand.u32 %v1287, 4294901760
  %3934 = vmatpush1.msra.mxu0 %v3933
  %3935 = vmatprep.subr.mxu0 0.0
  %v3936 = vand.u32 %v1288, 4294901760
  %3937 = vmatpush1.msra.mxu0 %v3936
  %3938 = vmatprep.subr.mxu0 0.0
  %v3939 = vand.u32 %v1289, 4294901760
  %3940 = vmatpush1.msra.mxu0 %v3939
  %3941 = vmatprep.subr.mxu0 0.0
  %v3942 = vand.u32 %v1290, 4294901760
  %3943 = vmatpush1.msra.mxu0 %v3942
  %3944 = vmatprep.subr.mxu0 0.0
  %v3945 = vand.u32 %v1291, 4294901760
  %3946 = vmatpush1.msra.mxu0 %v3945
  %3947 = vmatprep.subr.mxu0 0.0
  %v3948 = vand.u32 %v1292, 4294901760
  %3949 = vmatpush1.msra.mxu0 %v3948
  %3950 = vmatprep.subr.mxu0 0.0
  %v3951 = vand.u32 %v1293, 4294901760
  %3952 = vmatpush1.msra.mxu0 %v3951
  %3953 = vmatprep.subr.mxu0 0.0
  %v3954 = vand.u32 %v1294, 4294901760
  %3955 = vmatpush1.msra.mxu0 %v3954
  %3956 = vmatprep.subr.mxu0 0.0
  %v3957 = vand.u32 %v1295, 4294901760
  %3958 = vmatpush1.msra.mxu0 %v3957
  %3959 = vmatprep.subr.mxu0 0.0
  %v3960 = vand.u32 %v1296, 4294901760
  %3961 = vmatpush1.msra.mxu0 %v3960
  %3962 = vmatprep.subr.mxu0 0.0
  %v3963 = vand.u32 %v1297, 4294901760
  %3964 = vmatpush1.msra.mxu0 %v3963
  %3965 = vmatprep.subr.mxu0 0.0
  %v3966 = vand.u32 %v1298, 4294901760
  %3967 = vmatpush1.msra.mxu0 %v3966
  %3968 = vmatprep.subr.mxu0 0.0
  %v3969 = vand.u32 %v1299, 4294901760
  %3970 = vmatpush1.msra.mxu0 %v3969
  %3971 = vmatprep.subr.mxu0 0.0
  %v3972 = vand.u32 %v1300, 4294901760
  %3973 = vmatpush1.msra.mxu0 %v3972
  %3974 = vmatprep.subr.mxu0 0.0
  %v3975 = vand.u32 %v1301, 4294901760
  %3976 = vmatpush1.msra.mxu0 %v3975
  %3977 = vmatprep.subr.mxu0 0.0
  %v3978 = vand.u32 %v1302, 4294901760
  %3979 = vmatpush1.msra.mxu0 %v3978
  %3980 = vmatprep.subr.mxu0 0.0
  %v3981 = vand.u32 %v1303, 4294901760
  %3982 = vmatpush1.msra.mxu0 %v3981
  %3983 = vmatprep.subr.mxu0 0.0
  %v3984 = vand.u32 %v1304, 4294901760
  %3985 = vmatpush1.msra.mxu0 %v3984
  %3986 = vmatprep.subr.mxu0 0.0
  %v3987 = vand.u32 %v1305, 4294901760
  %3988 = vmatpush1.msra.mxu0 %v3987
  %3989 = vmatprep.subr.mxu0 0.0
  %v3990 = vand.u32 %v1306, 4294901760
  %3991 = vmatpush1.msra.mxu0 %v3990
  %3992 = vmatprep.subr.mxu0 0.0
  %v3993 = vand.u32 %v1307, 4294901760
  %3994 = vmatpush1.msra.mxu0 %v3993
  %3995 = vmatprep.subr.mxu0 0.0
  %v3996 = vand.u32 %v1308, 4294901760
  %3997 = vmatpush1.msra.mxu0 %v3996
  %v3998 = vand.u32 %v1177, 4294901760
  %v3999 = vsub.f32 %v1177, %v3998
  %v4000 = vand.u32 %v3999, 4294901760
  %v4001 = vsub.f32 %v3999, %v4000
  %v4002 = vand.u32 %v4001, 4294901760
  %4003 = vmatprep.mubr.f32.mxu0 %v4002
  %v4004 = vand.u32 %v1163, 4294901760
  %v4005 = vsub.f32 %v1163, %v4004
  %v4006 = vand.u32 %v4005, 4294901760
  %v4007 = vsub.f32 %v4005, %v4006
  %v4008 = vand.u32 %v4007, 4294901760
  %4009 = vmatmul.mubr.f32.gmra.mrb[0].mxu0 %v4008
  %v4010 = vpop.f32.mrb[0].mxu0
  %v4011 = vadd.f32 %v3899, %v4010
  %v4012 = vpop.f32.mrb[0].mxu0
  %4013 = vdwg.mxu0
  %4014 = vmatprep.subr.mxu0 0.0
  %v4015 = vand.u32 %v1277, 4294901760
  %v4016 = vsub.f32 %v1277, %v4015
  %v4017 = vand.u32 %v4016, 4294901760
  %v4018 = vsub.f32 %v4016, %v4017
  %v4019 = vand.u32 %v4018, 4294901760
  %4020 = vmatpush1.msra.mxu0 %v4019
  %4021 = vmatprep.subr.mxu0 0.0
  %v4022 = vand.u32 %v1278, 4294901760
  %v4023 = vsub.f32 %v1278, %v4022
  %v4024 = vand.u32 %v4023, 4294901760
  %v4025 = vsub.f32 %v4023, %v4024
  %v4026 = vand.u32 %v4025, 4294901760
  %4027 = vmatpush1.msra.mxu0 %v4026
  %4028 = vmatprep.subr.mxu0 0.0
  %v4029 = vand.u32 %v1279, 4294901760
  %v4030 = vsub.f32 %v1279, %v4029
  %v4031 = vand.u32 %v4030, 4294901760
  %v4032 = vsub.f32 %v4030, %v4031
  %v4033 = vand.u32 %v4032, 4294901760
  %4034 = vmatpush1.msra.mxu0 %v4033
  %4035 = vmatprep.subr.mxu0 0.0
  %v4036 = vand.u32 %v1280, 4294901760
  %v4037 = vsub.f32 %v1280, %v4036
  %v4038 = vand.u32 %v4037, 4294901760
  %v4039 = vsub.f32 %v4037, %v4038
  %v4040 = vand.u32 %v4039, 4294901760
  %4041 = vmatpush1.msra.mxu0 %v4040
  %4042 = vmatprep.subr.mxu0 0.0
  %v4043 = vand.u32 %v1281, 4294901760
  %v4044 = vsub.f32 %v1281, %v4043
  %v4045 = vand.u32 %v4044, 4294901760
  %v4046 = vsub.f32 %v4044, %v4045
  %v4047 = vand.u32 %v4046, 4294901760
  %4048 = vmatpush1.msra.mxu0 %v4047
  %4049 = vmatprep.subr.mxu0 0.0
  %v4050 = vand.u32 %v1282, 4294901760
  %v4051 = vsub.f32 %v1282, %v4050
  %v4052 = vand.u32 %v4051, 4294901760
  %v4053 = vsub.f32 %v4051, %v4052
  %v4054 = vand.u32 %v4053, 4294901760
  %4055 = vmatpush1.msra.mxu0 %v4054
  %4056 = vmatprep.subr.mxu0 0.0
  %v4057 = vand.u32 %v1283, 4294901760
  %v4058 = vsub.f32 %v1283, %v4057
  %v4059 = vand.u32 %v4058, 4294901760
  %v4060 = vsub.f32 %v4058, %v4059
  %v4061 = vand.u32 %v4060, 4294901760
  %4062 = vmatpush1.msra.mxu0 %v4061
  %4063 = vmatprep.subr.mxu0 0.0
  %v4064 = vand.u32 %v1284, 4294901760
  %v4065 = vsub.f32 %v1284, %v4064
  %v4066 = vand.u32 %v4065, 4294901760
  %v4067 = vsub.f32 %v4065, %v4066
  %v4068 = vand.u32 %v4067, 4294901760
  %4069 = vmatpush1.msra.mxu0 %v4068
  %4070 = vmatprep.subr.mxu0 0.0
  %v4071 = vand.u32 %v1285, 4294901760
  %v4072 = vsub.f32 %v1285, %v4071
  %v4073 = vand.u32 %v4072, 4294901760
  %v4074 = vsub.f32 %v4072, %v4073
  %v4075 = vand.u32 %v4074, 4294901760
  %4076 = vmatpush1.msra.mxu0 %v4075
  %4077 = vmatprep.subr.mxu0 0.0
  %v4078 = vand.u32 %v1286, 4294901760
  %v4079 = vsub.f32 %v1286, %v4078
  %v4080 = vand.u32 %v4079, 4294901760
  %v4081 = vsub.f32 %v4079, %v4080
  %v4082 = vand.u32 %v4081, 4294901760
  %4083 = vmatpush1.msra.mxu0 %v4082
  %4084 = vmatprep.subr.mxu0 0.0
  %v4085 = vand.u32 %v1287, 4294901760
  %v4086 = vsub.f32 %v1287, %v4085
  %v4087 = vand.u32 %v4086, 4294901760
  %v4088 = vsub.f32 %v4086, %v4087
  %v4089 = vand.u32 %v4088, 4294901760
  %4090 = vmatpush1.msra.mxu0 %v4089
  %4091 = vmatprep.subr.mxu0 0.0
  %v4092 = vand.u32 %v1288, 4294901760
  %v4093 = vsub.f32 %v1288, %v4092
  %v4094 = vand.u32 %v4093, 4294901760
  %v4095 = vsub.f32 %v4093, %v4094
  %v4096 = vand.u32 %v4095, 4294901760
  %4097 = vmatpush1.msra.mxu0 %v4096
  %4098 = vmatprep.subr.mxu0 0.0
  %v4099 = vand.u32 %v1289, 4294901760
  %v4100 = vsub.f32 %v1289, %v4099
  %v4101 = vand.u32 %v4100, 4294901760
  %v4102 = vsub.f32 %v4100, %v4101
  %v4103 = vand.u32 %v4102, 4294901760
  %4104 = vmatpush1.msra.mxu0 %v4103
  %4105 = vmatprep.subr.mxu0 0.0
  %v4106 = vand.u32 %v1290, 4294901760
  %v4107 = vsub.f32 %v1290, %v4106
  %v4108 = vand.u32 %v4107, 4294901760
  %v4109 = vsub.f32 %v4107, %v4108
  %v4110 = vand.u32 %v4109, 4294901760
  %4111 = vmatpush1.msra.mxu0 %v4110
  %4112 = vmatprep.subr.mxu0 0.0
  %v4113 = vand.u32 %v1291, 4294901760
  %v4114 = vsub.f32 %v1291, %v4113
  %v4115 = vand.u32 %v4114, 4294901760
  %v4116 = vsub.f32 %v4114, %v4115
  %v4117 = vand.u32 %v4116, 4294901760
  %4118 = vmatpush1.msra.mxu0 %v4117
  %4119 = vmatprep.subr.mxu0 0.0
  %v4120 = vand.u32 %v1292, 4294901760
  %v4121 = vsub.f32 %v1292, %v4120
  %v4122 = vand.u32 %v4121, 4294901760
  %v4123 = vsub.f32 %v4121, %v4122
  %v4124 = vand.u32 %v4123, 4294901760
  %4125 = vmatpush1.msra.mxu0 %v4124
  %4126 = vmatprep.subr.mxu0 0.0
  %v4127 = vand.u32 %v1293, 4294901760
  %v4128 = vsub.f32 %v1293, %v4127
  %v4129 = vand.u32 %v4128, 4294901760
  %v4130 = vsub.f32 %v4128, %v4129
  %v4131 = vand.u32 %v4130, 4294901760
  %4132 = vmatpush1.msra.mxu0 %v4131
  %4133 = vmatprep.subr.mxu0 0.0
  %v4134 = vand.u32 %v1294, 4294901760
  %v4135 = vsub.f32 %v1294, %v4134
  %v4136 = vand.u32 %v4135, 4294901760
  %v4137 = vsub.f32 %v4135, %v4136
  %v4138 = vand.u32 %v4137, 4294901760
  %4139 = vmatpush1.msra.mxu0 %v4138
  %4140 = vmatprep.subr.mxu0 0.0
  %v4141 = vand.u32 %v1295, 4294901760
  %v4142 = vsub.f32 %v1295, %v4141
  %v4143 = vand.u32 %v4142, 4294901760
  %v4144 = vsub.f32 %v4142, %v4143
  %v4145 = vand.u32 %v4144, 4294901760
  %4146 = vmatpush1.msra.mxu0 %v4145
  %4147 = vmatprep.subr.mxu0 0.0
  %v4148 = vand.u32 %v1296, 4294901760
  %v4149 = vsub.f32 %v1296, %v4148
  %v4150 = vand.u32 %v4149, 4294901760
  %v4151 = vsub.f32 %v4149, %v4150
  %v4152 = vand.u32 %v4151, 4294901760
  %4153 = vmatpush1.msra.mxu0 %v4152
  %4154 = vmatprep.subr.mxu0 0.0
  %v4155 = vand.u32 %v1297, 4294901760
  %v4156 = vsub.f32 %v1297, %v4155
  %v4157 = vand.u32 %v4156, 4294901760
  %v4158 = vsub.f32 %v4156, %v4157
  %v4159 = vand.u32 %v4158, 4294901760
  %4160 = vmatpush1.msra.mxu0 %v4159
  %4161 = vmatprep.subr.mxu0 0.0
  %v4162 = vand.u32 %v1298, 4294901760
  %v4163 = vsub.f32 %v1298, %v4162
  %v4164 = vand.u32 %v4163, 4294901760
  %v4165 = vsub.f32 %v4163, %v4164
  %v4166 = vand.u32 %v4165, 4294901760
  %4167 = vmatpush1.msra.mxu0 %v4166
  %4168 = vmatprep.subr.mxu0 0.0
  %v4169 = vand.u32 %v1299, 4294901760
  %v4170 = vsub.f32 %v1299, %v4169
  %v4171 = vand.u32 %v4170, 4294901760
  %v4172 = vsub.f32 %v4170, %v4171
  %v4173 = vand.u32 %v4172, 4294901760
  %4174 = vmatpush1.msra.mxu0 %v4173
  %4175 = vmatprep.subr.mxu0 0.0
  %v4176 = vand.u32 %v1300, 4294901760
  %v4177 = vsub.f32 %v1300, %v4176
  %v4178 = vand.u32 %v4177, 4294901760
  %v4179 = vsub.f32 %v4177, %v4178
  %v4180 = vand.u32 %v4179, 4294901760
  %4181 = vmatpush1.msra.mxu0 %v4180
  %4182 = vmatprep.subr.mxu0 0.0
  %v4183 = vand.u32 %v1301, 4294901760
  %v4184 = vsub.f32 %v1301, %v4183
  %v4185 = vand.u32 %v4184, 4294901760
  %v4186 = vsub.f32 %v4184, %v4185
  %v4187 = vand.u32 %v4186, 4294901760
  %4188 = vmatpush1.msra.mxu0 %v4187
  %4189 = vmatprep.subr.mxu0 0.0
  %v4190 = vand.u32 %v1302, 4294901760
  %v4191 = vsub.f32 %v1302, %v4190
  %v4192 = vand.u32 %v4191, 4294901760
  %v4193 = vsub.f32 %v4191, %v4192
  %v4194 = vand.u32 %v4193, 4294901760
  %4195 = vmatpush1.msra.mxu0 %v4194
  %4196 = vmatprep.subr.mxu0 0.0
  %v4197 = vand.u32 %v1303, 4294901760
  %v4198 = vsub.f32 %v1303, %v4197
  %v4199 = vand.u32 %v4198, 4294901760
  %v4200 = vsub.f32 %v4198, %v4199
  %v4201 = vand.u32 %v4200, 4294901760
  %4202 = vmatpush1.msra.mxu0 %v4201
  %4203 = vmatprep.subr.mxu0 0.0
  %v4204 = vand.u32 %v1304, 4294901760
  %v4205 = vsub.f32 %v1304, %v4204
  %v4206 = vand.u32 %v4205, 4294901760
  %v4207 = vsub.f32 %v4205, %v4206
  %v4208 = vand.u32 %v4207, 4294901760
  %4209 = vmatpush1.msra.mxu0 %v4208
  %4210 = vmatprep.subr.mxu0 0.0
  %v4211 = vand.u32 %v1305, 4294901760
  %v4212 = vsub.f32 %v1305, %v4211
  %v4213 = vand.u32 %v4212, 4294901760
  %v4214 = vsub.f32 %v4212, %v4213
  %v4215 = vand.u32 %v4214, 4294901760
  %4216 = vmatpush1.msra.mxu0 %v4215
  %4217 = vmatprep.subr.mxu0 0.0
  %v4218 = vand.u32 %v1306, 4294901760
  %v4219 = vsub.f32 %v1306, %v4218
  %v4220 = vand.u32 %v4219, 4294901760
  %v4221 = vsub.f32 %v4219, %v4220
  %v4222 = vand.u32 %v4221, 4294901760
  %4223 = vmatpush1.msra.mxu0 %v4222
  %4224 = vmatprep.subr.mxu0 0.0
  %v4225 = vand.u32 %v1307, 4294901760
  %v4226 = vsub.f32 %v1307, %v4225
  %v4227 = vand.u32 %v4226, 4294901760
  %v4228 = vsub.f32 %v4226, %v4227
  %v4229 = vand.u32 %v4228, 4294901760
  %4230 = vmatpush1.msra.mxu0 %v4229
  %4231 = vmatprep.subr.mxu0 0.0
  %v4232 = vand.u32 %v1308, 4294901760
  %v4233 = vsub.f32 %v1308, %v4232
  %v4234 = vand.u32 %v4233, 4294901760
  %v4235 = vsub.f32 %v4233, %v4234
  %v4236 = vand.u32 %v4235, 4294901760
  %4237 = vmatpush1.msra.mxu0 %v4236
  %v4238 = vand.u32 %v1177, 4294901760
  %4239 = vmatprep.mubr.f32.mxu0 %v4238
  %v4240 = vand.u32 %v1163, 4294901760
  %4241 = vmatmul.mubr.f32.gmra.mrb[0].mxu0 %v4240
  %v4242 = vpop.f32.mrb[0].mxu0
  %v4243 = vadd.f32 %v4011, %v4242
  %v4244 = vpop.f32.mrb[0].mxu0
  %4245 = vdwg.mxu0
  %4246 = vmatprep.subr.mxu0 0.0
  %v4247 = vand.u32 %v1277, 4294901760
  %v4248 = vsub.f32 %v1277, %v4247
  %4249 = vmatpush1.msra.mxu0 %v4248
  %4250 = vmatprep.subr.mxu0 0.0
  %v4251 = vand.u32 %v1278, 4294901760
  %v4252 = vsub.f32 %v1278, %v4251
  %4253 = vmatpush1.msra.mxu0 %v4252
  %4254 = vmatprep.subr.mxu0 0.0
  %v4255 = vand.u32 %v1279, 4294901760
  %v4256 = vsub.f32 %v1279, %v4255
  %4257 = vmatpush1.msra.mxu0 %v4256
  %4258 = vmatprep.subr.mxu0 0.0
  %v4259 = vand.u32 %v1280, 4294901760
  %v4260 = vsub.f32 %v1280, %v4259
  %4261 = vmatpush1.msra.mxu0 %v4260
  %4262 = vmatprep.subr.mxu0 0.0
  %v4263 = vand.u32 %v1281, 4294901760
  %v4264 = vsub.f32 %v1281, %v4263
  %4265 = vmatpush1.msra.mxu0 %v4264
  %4266 = vmatprep.subr.mxu0 0.0
  %v4267 = vand.u32 %v1282, 4294901760
  %v4268 = vsub.f32 %v1282, %v4267
  %4269 = vmatpush1.msra.mxu0 %v4268
  %4270 = vmatprep.subr.mxu0 0.0
  %v4271 = vand.u32 %v1283, 4294901760
  %v4272 = vsub.f32 %v1283, %v4271
  %4273 = vmatpush1.msra.mxu0 %v4272
  %4274 = vmatprep.subr.mxu0 0.0
  %v4275 = vand.u32 %v1284, 4294901760
  %v4276 = vsub.f32 %v1284, %v4275
  %4277 = vmatpush1.msra.mxu0 %v4276
  %4278 = vmatprep.subr.mxu0 0.0
  %v4279 = vand.u32 %v1285, 4294901760
  %v4280 = vsub.f32 %v1285, %v4279
  %4281 = vmatpush1.msra.mxu0 %v4280
  %4282 = vmatprep.subr.mxu0 0.0
  %v4283 = vand.u32 %v1286, 4294901760
  %v4284 = vsub.f32 %v1286, %v4283
  %4285 = vmatpush1.msra.mxu0 %v4284
  %4286 = vmatprep.subr.mxu0 0.0
  %v4287 = vand.u32 %v1287, 4294901760
  %v4288 = vsub.f32 %v1287, %v4287
  %4289 = vmatpush1.msra.mxu0 %v4288
  %4290 = vmatprep.subr.mxu0 0.0
  %v4291 = vand.u32 %v1288, 4294901760
  %v4292 = vsub.f32 %v1288, %v4291
  %4293 = vmatpush1.msra.mxu0 %v4292
  %4294 = vmatprep.subr.mxu0 0.0
  %v4295 = vand.u32 %v1289, 4294901760
  %v4296 = vsub.f32 %v1289, %v4295
  %4297 = vmatpush1.msra.mxu0 %v4296
  %4298 = vmatprep.subr.mxu0 0.0
  %v4299 = vand.u32 %v1290, 4294901760
  %v4300 = vsub.f32 %v1290, %v4299
  %4301 = vmatpush1.msra.mxu0 %v4300
  %4302 = vmatprep.subr.mxu0 0.0
  %v4303 = vand.u32 %v1291, 4294901760
  %v4304 = vsub.f32 %v1291, %v4303
  %4305 = vmatpush1.msra.mxu0 %v4304
  %4306 = vmatprep.subr.mxu0 0.0
  %v4307 = vand.u32 %v1292, 4294901760
  %v4308 = vsub.f32 %v1292, %v4307
  %4309 = vmatpush1.msra.mxu0 %v4308
  %4310 = vmatprep.subr.mxu0 0.0
  %v4311 = vand.u32 %v1293, 4294901760
  %v4312 = vsub.f32 %v1293, %v4311
  %4313 = vmatpush1.msra.mxu0 %v4312
  %4314 = vmatprep.subr.mxu0 0.0
  %v4315 = vand.u32 %v1294, 4294901760
  %v4316 = vsub.f32 %v1294, %v4315
  %4317 = vmatpush1.msra.mxu0 %v4316
  %4318 = vmatprep.subr.mxu0 0.0
  %v4319 = vand.u32 %v1295, 4294901760
  %v4320 = vsub.f32 %v1295, %v4319
  %4321 = vmatpush1.msra.mxu0 %v4320
  %4322 = vmatprep.subr.mxu0 0.0
  %v4323 = vand.u32 %v1296, 4294901760
  %v4324 = vsub.f32 %v1296, %v4323
  %4325 = vmatpush1.msra.mxu0 %v4324
  %4326 = vmatprep.subr.mxu0 0.0
  %v4327 = vand.u32 %v1297, 4294901760
  %v4328 = vsub.f32 %v1297, %v4327
  %4329 = vmatpush1.msra.mxu0 %v4328
  %4330 = vmatprep.subr.mxu0 0.0
  %v4331 = vand.u32 %v1298, 4294901760
  %v4332 = vsub.f32 %v1298, %v4331
  %4333 = vmatpush1.msra.mxu0 %v4332
  %4334 = vmatprep.subr.mxu0 0.0
  %v4335 = vand.u32 %v1299, 4294901760
  %v4336 = vsub.f32 %v1299, %v4335
  %4337 = vmatpush1.msra.mxu0 %v4336
  %4338 = vmatprep.subr.mxu0 0.0
  %v4339 = vand.u32 %v1300, 4294901760
  %v4340 = vsub.f32 %v1300, %v4339
  %4341 = vmatpush1.msra.mxu0 %v4340
  %4342 = vmatprep.subr.mxu0 0.0
  %v4343 = vand.u32 %v1301, 4294901760
  %v4344 = vsub.f32 %v1301, %v4343
  %4345 = vmatpush1.msra.mxu0 %v4344
  %4346 = vmatprep.subr.mxu0 0.0
  %v4347 = vand.u32 %v1302, 4294901760
  %v4348 = vsub.f32 %v1302, %v4347
  %4349 = vmatpush1.msra.mxu0 %v4348
  %4350 = vmatprep.subr.mxu0 0.0
  %v4351 = vand.u32 %v1303, 4294901760
  %v4352 = vsub.f32 %v1303, %v4351
  %4353 = vmatpush1.msra.mxu0 %v4352
  %4354 = vmatprep.subr.mxu0 0.0
  %v4355 = vand.u32 %v1304, 4294901760
  %v4356 = vsub.f32 %v1304, %v4355
  %4357 = vmatpush1.msra.mxu0 %v4356
  %4358 = vmatprep.subr.mxu0 0.0
  %v4359 = vand.u32 %v1305, 4294901760
  %v4360 = vsub.f32 %v1305, %v4359
  %4361 = vmatpush1.msra.mxu0 %v4360
  %4362 = vmatprep.subr.mxu0 0.0
  %v4363 = vand.u32 %v1306, 4294901760
  %v4364 = vsub.f32 %v1306, %v4363
  %4365 = vmatpush1.msra.mxu0 %v4364
  %4366 = vmatprep.subr.mxu0 0.0
  %v4367 = vand.u32 %v1307, 4294901760
  %v4368 = vsub.f32 %v1307, %v4367
  %4369 = vmatpush1.msra.mxu0 %v4368
  %4370 = vmatprep.subr.mxu0 0.0
  %v4371 = vand.u32 %v1308, 4294901760
  %v4372 = vsub.f32 %v1308, %v4371
  %4373 = vmatpush1.msra.mxu0 %v4372
  %v4374 = vand.u32 %v1177, 4294901760
  %v4375 = vsub.f32 %v1177, %v4374
  %4376 = vmatprep.mubr.f32.mxu0 %v4375
  %v4377 = vand.u32 %v1163, 4294901760
  %v4378 = vsub.f32 %v1163, %v4377
  %4379 = vmatmul.mubr.f32.gmra.mrb[0].mxu0 %v4378
  %v4380 = vpop.f32.mrb[0].mxu0
  %v4381 = vadd.f32 %v4243, %v4380
  %v4382 = vpop.f32.mrb[0].mxu0
  %4383 = vdwg.mxu0
  %4384 = vmatprep.subr.mxu0 0.0
  %v4385 = vand.u32 %v1277, 4294901760
  %4386 = vmatpush1.msra.mxu0 %v4385
  %4387 = vmatprep.subr.mxu0 0.0
  %v4388 = vand.u32 %v1278, 4294901760
  %4389 = vmatpush1.msra.mxu0 %v4388
  %4390 = vmatprep.subr.mxu0 0.0
  %v4391 = vand.u32 %v1279, 4294901760
  %4392 = vmatpush1.msra.mxu0 %v4391
  %4393 = vmatprep.subr.mxu0 0.0
  %v4394 = vand.u32 %v1280, 4294901760
  %4395 = vmatpush1.msra.mxu0 %v4394
  %4396 = vmatprep.subr.mxu0 0.0
  %v4397 = vand.u32 %v1281, 4294901760
  %4398 = vmatpush1.msra.mxu0 %v4397
  %4399 = vmatprep.subr.mxu0 0.0
  %v4400 = vand.u32 %v1282, 4294901760
  %4401 = vmatpush1.msra.mxu0 %v4400
  %4402 = vmatprep.subr.mxu0 0.0
  %v4403 = vand.u32 %v1283, 4294901760
  %4404 = vmatpush1.msra.mxu0 %v4403
  %4405 = vmatprep.subr.mxu0 0.0
  %v4406 = vand.u32 %v1284, 4294901760
  %4407 = vmatpush1.msra.mxu0 %v4406
  %4408 = vmatprep.subr.mxu0 0.0
  %v4409 = vand.u32 %v1285, 4294901760
  %4410 = vmatpush1.msra.mxu0 %v4409
  %4411 = vmatprep.subr.mxu0 0.0
  %v4412 = vand.u32 %v1286, 4294901760
  %4413 = vmatpush1.msra.mxu0 %v4412
  %4414 = vmatprep.subr.mxu0 0.0
  %v4415 = vand.u32 %v1287, 4294901760
  %4416 = vmatpush1.msra.mxu0 %v4415
  %4417 = vmatprep.subr.mxu0 0.0
  %v4418 = vand.u32 %v1288, 4294901760
  %4419 = vmatpush1.msra.mxu0 %v4418
  %4420 = vmatprep.subr.mxu0 0.0
  %v4421 = vand.u32 %v1289, 4294901760
  %4422 = vmatpush1.msra.mxu0 %v4421
  %4423 = vmatprep.subr.mxu0 0.0
  %v4424 = vand.u32 %v1290, 4294901760
  %4425 = vmatpush1.msra.mxu0 %v4424
  %4426 = vmatprep.subr.mxu0 0.0
  %v4427 = vand.u32 %v1291, 4294901760
  %4428 = vmatpush1.msra.mxu0 %v4427
  %4429 = vmatprep.subr.mxu0 0.0
  %v4430 = vand.u32 %v1292, 4294901760
  %4431 = vmatpush1.msra.mxu0 %v4430
  %4432 = vmatprep.subr.mxu0 0.0
  %v4433 = vand.u32 %v1293, 4294901760
  %4434 = vmatpush1.msra.mxu0 %v4433
  %4435 = vmatprep.subr.mxu0 0.0
  %v4436 = vand.u32 %v1294, 4294901760
  %4437 = vmatpush1.msra.mxu0 %v4436
  %4438 = vmatprep.subr.mxu0 0.0
  %v4439 = vand.u32 %v1295, 4294901760
  %4440 = vmatpush1.msra.mxu0 %v4439
  %4441 = vmatprep.subr.mxu0 0.0
  %v4442 = vand.u32 %v1296, 4294901760
  %4443 = vmatpush1.msra.mxu0 %v4442
  %4444 = vmatprep.subr.mxu0 0.0
  %v4445 = vand.u32 %v1297, 4294901760
  %4446 = vmatpush1.msra.mxu0 %v4445
  %4447 = vmatprep.subr.mxu0 0.0
  %v4448 = vand.u32 %v1298, 4294901760
  %4449 = vmatpush1.msra.mxu0 %v4448
  %4450 = vmatprep.subr.mxu0 0.0
  %v4451 = vand.u32 %v1299, 4294901760
  %4452 = vmatpush1.msra.mxu0 %v4451
  %4453 = vmatprep.subr.mxu0 0.0
  %v4454 = vand.u32 %v1300, 4294901760
  %4455 = vmatpush1.msra.mxu0 %v4454
  %4456 = vmatprep.subr.mxu0 0.0
  %v4457 = vand.u32 %v1301, 4294901760
  %4458 = vmatpush1.msra.mxu0 %v4457
  %4459 = vmatprep.subr.mxu0 0.0
  %v4460 = vand.u32 %v1302, 4294901760
  %4461 = vmatpush1.msra.mxu0 %v4460
  %4462 = vmatprep.subr.mxu0 0.0
  %v4463 = vand.u32 %v1303, 4294901760
  %4464 = vmatpush1.msra.mxu0 %v4463
  %4465 = vmatprep.subr.mxu0 0.0
  %v4466 = vand.u32 %v1304, 4294901760
  %4467 = vmatpush1.msra.mxu0 %v4466
  %4468 = vmatprep.subr.mxu0 0.0
  %v4469 = vand.u32 %v1305, 4294901760
  %4470 = vmatpush1.msra.mxu0 %v4469
  %4471 = vmatprep.subr.mxu0 0.0
  %v4472 = vand.u32 %v1306, 4294901760
  %4473 = vmatpush1.msra.mxu0 %v4472
  %4474 = vmatprep.subr.mxu0 0.0
  %v4475 = vand.u32 %v1307, 4294901760
  %4476 = vmatpush1.msra.mxu0 %v4475
  %4477 = vmatprep.subr.mxu0 0.0
  %v4478 = vand.u32 %v1308, 4294901760
  %4479 = vmatpush1.msra.mxu0 %v4478
  %v4480 = vand.u32 %v1177, 4294901760
  %v4481 = vsub.f32 %v1177, %v4480
  %v4482 = vand.u32 %v4481, 4294901760
  %4483 = vmatprep.mubr.f32.mxu0 %v4482
  %v4484 = vand.u32 %v1163, 4294901760
  %v4485 = vsub.f32 %v1163, %v4484
  %v4486 = vand.u32 %v4485, 4294901760
  %4487 = vmatmul.mubr.f32.gmra.mrb[0].mxu0 %v4486
  %v4488 = vpop.f32.mrb[0].mxu0
  %v4489 = vadd.f32 %v4381, %v4488
  %v4490 = vpop.f32.mrb[0].mxu0
  %4491 = vdwg.mxu0
  %4492 = vmatprep.subr.mxu0 0.0
  %v4493 = vand.u32 %v1277, 4294901760
  %v4494 = vsub.f32 %v1277, %v4493
  %v4495 = vand.u32 %v4494, 4294901760
  %4496 = vmatpush1.msra.mxu0 %v4495
  %4497 = vmatprep.subr.mxu0 0.0
  %v4498 = vand.u32 %v1278, 4294901760
  %v4499 = vsub.f32 %v1278, %v4498
  %v4500 = vand.u32 %v4499, 4294901760
  %4501 = vmatpush1.msra.mxu0 %v4500
  %4502 = vmatprep.subr.mxu0 0.0
  %v4503 = vand.u32 %v1279, 4294901760
  %v4504 = vsub.f32 %v1279, %v4503
  %v4505 = vand.u32 %v4504, 4294901760
  %4506 = vmatpush1.msra.mxu0 %v4505
  %4507 = vmatprep.subr.mxu0 0.0
  %v4508 = vand.u32 %v1280, 4294901760
  %v4509 = vsub.f32 %v1280, %v4508
  %v4510 = vand.u32 %v4509, 4294901760
  %4511 = vmatpush1.msra.mxu0 %v4510
  %4512 = vmatprep.subr.mxu0 0.0
  %v4513 = vand.u32 %v1281, 4294901760
  %v4514 = vsub.f32 %v1281, %v4513
  %v4515 = vand.u32 %v4514, 4294901760
  %4516 = vmatpush1.msra.mxu0 %v4515
  %4517 = vmatprep.subr.mxu0 0.0
  %v4518 = vand.u32 %v1282, 4294901760
  %v4519 = vsub.f32 %v1282, %v4518
  %v4520 = vand.u32 %v4519, 4294901760
  %4521 = vmatpush1.msra.mxu0 %v4520
  %4522 = vmatprep.subr.mxu0 0.0
  %v4523 = vand.u32 %v1283, 4294901760
  %v4524 = vsub.f32 %v1283, %v4523
  %v4525 = vand.u32 %v4524, 4294901760
  %4526 = vmatpush1.msra.mxu0 %v4525
  %4527 = vmatprep.subr.mxu0 0.0
  %v4528 = vand.u32 %v1284, 4294901760
  %v4529 = vsub.f32 %v1284, %v4528
  %v4530 = vand.u32 %v4529, 4294901760
  %4531 = vmatpush1.msra.mxu0 %v4530
  %4532 = vmatprep.subr.mxu0 0.0
  %v4533 = vand.u32 %v1285, 4294901760
  %v4534 = vsub.f32 %v1285, %v4533
  %v4535 = vand.u32 %v4534, 4294901760
  %4536 = vmatpush1.msra.mxu0 %v4535
  %4537 = vmatprep.subr.mxu0 0.0
  %v4538 = vand.u32 %v1286, 4294901760
  %v4539 = vsub.f32 %v1286, %v4538
  %v4540 = vand.u32 %v4539, 4294901760
  %4541 = vmatpush1.msra.mxu0 %v4540
  %4542 = vmatprep.subr.mxu0 0.0
  %v4543 = vand.u32 %v1287, 4294901760
  %v4544 = vsub.f32 %v1287, %v4543
  %v4545 = vand.u32 %v4544, 4294901760
  %4546 = vmatpush1.msra.mxu0 %v4545
  %4547 = vmatprep.subr.mxu0 0.0
  %v4548 = vand.u32 %v1288, 4294901760
  %v4549 = vsub.f32 %v1288, %v4548
  %v4550 = vand.u32 %v4549, 4294901760
  %4551 = vmatpush1.msra.mxu0 %v4550
  %4552 = vmatprep.subr.mxu0 0.0
  %v4553 = vand.u32 %v1289, 4294901760
  %v4554 = vsub.f32 %v1289, %v4553
  %v4555 = vand.u32 %v4554, 4294901760
  %4556 = vmatpush1.msra.mxu0 %v4555
  %4557 = vmatprep.subr.mxu0 0.0
  %v4558 = vand.u32 %v1290, 4294901760
  %v4559 = vsub.f32 %v1290, %v4558
  %v4560 = vand.u32 %v4559, 4294901760
  %4561 = vmatpush1.msra.mxu0 %v4560
  %4562 = vmatprep.subr.mxu0 0.0
  %v4563 = vand.u32 %v1291, 4294901760
  %v4564 = vsub.f32 %v1291, %v4563
  %v4565 = vand.u32 %v4564, 4294901760
  %4566 = vmatpush1.msra.mxu0 %v4565
  %4567 = vmatprep.subr.mxu0 0.0
  %v4568 = vand.u32 %v1292, 4294901760
  %v4569 = vsub.f32 %v1292, %v4568
  %v4570 = vand.u32 %v4569, 4294901760
  %4571 = vmatpush1.msra.mxu0 %v4570
  %4572 = vmatprep.subr.mxu0 0.0
  %v4573 = vand.u32 %v1293, 4294901760
  %v4574 = vsub.f32 %v1293, %v4573
  %v4575 = vand.u32 %v4574, 4294901760
  %4576 = vmatpush1.msra.mxu0 %v4575
  %4577 = vmatprep.subr.mxu0 0.0
  %v4578 = vand.u32 %v1294, 4294901760
  %v4579 = vsub.f32 %v1294, %v4578
  %v4580 = vand.u32 %v4579, 4294901760
  %4581 = vmatpush1.msra.mxu0 %v4580
  %4582 = vmatprep.subr.mxu0 0.0
  %v4583 = vand.u32 %v1295, 4294901760
  %v4584 = vsub.f32 %v1295, %v4583
  %v4585 = vand.u32 %v4584, 4294901760
  %4586 = vmatpush1.msra.mxu0 %v4585
  %4587 = vmatprep.subr.mxu0 0.0
  %v4588 = vand.u32 %v1296, 4294901760
  %v4589 = vsub.f32 %v1296, %v4588
  %v4590 = vand.u32 %v4589, 4294901760
  %4591 = vmatpush1.msra.mxu0 %v4590
  %4592 = vmatprep.subr.mxu0 0.0
  %v4593 = vand.u32 %v1297, 4294901760
  %v4594 = vsub.f32 %v1297, %v4593
  %v4595 = vand.u32 %v4594, 4294901760
  %4596 = vmatpush1.msra.mxu0 %v4595
  %4597 = vmatprep.subr.mxu0 0.0
  %v4598 = vand.u32 %v1298, 4294901760
  %v4599 = vsub.f32 %v1298, %v4598
  %v4600 = vand.u32 %v4599, 4294901760
  %4601 = vmatpush1.msra.mxu0 %v4600
  %4602 = vmatprep.subr.mxu0 0.0
  %v4603 = vand.u32 %v1299, 4294901760
  %v4604 = vsub.f32 %v1299, %v4603
  %v4605 = vand.u32 %v4604, 4294901760
  %4606 = vmatpush1.msra.mxu0 %v4605
  %4607 = vmatprep.subr.mxu0 0.0
  %v4608 = vand.u32 %v1300, 4294901760
  %v4609 = vsub.f32 %v1300, %v4608
  %v4610 = vand.u32 %v4609, 4294901760
  %4611 = vmatpush1.msra.mxu0 %v4610
  %4612 = vmatprep.subr.mxu0 0.0
  %v4613 = vand.u32 %v1301, 4294901760
  %v4614 = vsub.f32 %v1301, %v4613
  %v4615 = vand.u32 %v4614, 4294901760
  %4616 = vmatpush1.msra.mxu0 %v4615
  %4617 = vmatprep.subr.mxu0 0.0
  %v4618 = vand.u32 %v1302, 4294901760
  %v4619 = vsub.f32 %v1302, %v4618
  %v4620 = vand.u32 %v4619, 4294901760
  %4621 = vmatpush1.msra.mxu0 %v4620
  %4622 = vmatprep.subr.mxu0 0.0
  %v4623 = vand.u32 %v1303, 4294901760
  %v4624 = vsub.f32 %v1303, %v4623
  %v4625 = vand.u32 %v4624, 4294901760
  %4626 = vmatpush1.msra.mxu0 %v4625
  %4627 = vmatprep.subr.mxu0 0.0
  %v4628 = vand.u32 %v1304, 4294901760
  %v4629 = vsub.f32 %v1304, %v4628
  %v4630 = vand.u32 %v4629, 4294901760
  %4631 = vmatpush1.msra.mxu0 %v4630
  %4632 = vmatprep.subr.mxu0 0.0
  %v4633 = vand.u32 %v1305, 4294901760
  %v4634 = vsub.f32 %v1305, %v4633
  %v4635 = vand.u32 %v4634, 4294901760
  %4636 = vmatpush1.msra.mxu0 %v4635
  %4637 = vmatprep.subr.mxu0 0.0
  %v4638 = vand.u32 %v1306, 4294901760
  %v4639 = vsub.f32 %v1306, %v4638
  %v4640 = vand.u32 %v4639, 4294901760
  %4641 = vmatpush1.msra.mxu0 %v4640
  %4642 = vmatprep.subr.mxu0 0.0
  %v4643 = vand.u32 %v1307, 4294901760
  %v4644 = vsub.f32 %v1307, %v4643
  %v4645 = vand.u32 %v4644, 4294901760
  %4646 = vmatpush1.msra.mxu0 %v4645
  %4647 = vmatprep.subr.mxu0 0.0
  %v4648 = vand.u32 %v1308, 4294901760
  %v4649 = vsub.f32 %v1308, %v4648
  %v4650 = vand.u32 %v4649, 4294901760
  %4651 = vmatpush1.msra.mxu0 %v4650
  %v4652 = vand.u32 %v1177, 4294901760
  %4653 = vmatprep.mubr.f32.mxu0 %v4652
  %v4654 = vand.u32 %v1163, 4294901760
  %4655 = vmatmul.mubr.f32.gmra.mrb[0].mxu0 %v4654
  %v4656 = vpop.f32.mrb[0].mxu0
  %v4657 = vadd.f32 %v4489, %v4656
  %v4658 = vpop.f32.mrb[0].mxu0
  %4659 = vdwg.mxu0
  %4660 = vmatprep.subr.mxu0 0.0
  %v4661 = vand.u32 %v1277, 4294901760
  %4662 = vmatpush1.msra.mxu0 %v4661
  %4663 = vmatprep.subr.mxu0 0.0
  %v4664 = vand.u32 %v1278, 4294901760
  %4665 = vmatpush1.msra.mxu0 %v4664
  %4666 = vmatprep.subr.mxu0 0.0
  %v4667 = vand.u32 %v1279, 4294901760
  %4668 = vmatpush1.msra.mxu0 %v4667
  %4669 = vmatprep.subr.mxu0 0.0
  %v4670 = vand.u32 %v1280, 4294901760
  %4671 = vmatpush1.msra.mxu0 %v4670
  %4672 = vmatprep.subr.mxu0 0.0
  %v4673 = vand.u32 %v1281, 4294901760
  %4674 = vmatpush1.msra.mxu0 %v4673
  %4675 = vmatprep.subr.mxu0 0.0
  %v4676 = vand.u32 %v1282, 4294901760
  %4677 = vmatpush1.msra.mxu0 %v4676
  %4678 = vmatprep.subr.mxu0 0.0
  %v4679 = vand.u32 %v1283, 4294901760
  %4680 = vmatpush1.msra.mxu0 %v4679
  %4681 = vmatprep.subr.mxu0 0.0
  %v4682 = vand.u32 %v1284, 4294901760
  %4683 = vmatpush1.msra.mxu0 %v4682
  %4684 = vmatprep.subr.mxu0 0.0
  %v4685 = vand.u32 %v1285, 4294901760
  %4686 = vmatpush1.msra.mxu0 %v4685
  %4687 = vmatprep.subr.mxu0 0.0
  %v4688 = vand.u32 %v1286, 4294901760
  %4689 = vmatpush1.msra.mxu0 %v4688
  %4690 = vmatprep.subr.mxu0 0.0
  %v4691 = vand.u32 %v1287, 4294901760
  %4692 = vmatpush1.msra.mxu0 %v4691
  %4693 = vmatprep.subr.mxu0 0.0
  %v4694 = vand.u32 %v1288, 4294901760
  %4695 = vmatpush1.msra.mxu0 %v4694
  %4696 = vmatprep.subr.mxu0 0.0
  %v4697 = vand.u32 %v1289, 4294901760
  %4698 = vmatpush1.msra.mxu0 %v4697
  %4699 = vmatprep.subr.mxu0 0.0
  %v4700 = vand.u32 %v1290, 4294901760
  %4701 = vmatpush1.msra.mxu0 %v4700
  %4702 = vmatprep.subr.mxu0 0.0
  %v4703 = vand.u32 %v1291, 4294901760
  %4704 = vmatpush1.msra.mxu0 %v4703
  %4705 = vmatprep.subr.mxu0 0.0
  %v4706 = vand.u32 %v1292, 4294901760
  %4707 = vmatpush1.msra.mxu0 %v4706
  %4708 = vmatprep.subr.mxu0 0.0
  %v4709 = vand.u32 %v1293, 4294901760
  %4710 = vmatpush1.msra.mxu0 %v4709
  %4711 = vmatprep.subr.mxu0 0.0
  %v4712 = vand.u32 %v1294, 4294901760
  %4713 = vmatpush1.msra.mxu0 %v4712
  %4714 = vmatprep.subr.mxu0 0.0
  %v4715 = vand.u32 %v1295, 4294901760
  %4716 = vmatpush1.msra.mxu0 %v4715
  %4717 = vmatprep.subr.mxu0 0.0
  %v4718 = vand.u32 %v1296, 4294901760
  %4719 = vmatpush1.msra.mxu0 %v4718
  %4720 = vmatprep.subr.mxu0 0.0
  %v4721 = vand.u32 %v1297, 4294901760
  %4722 = vmatpush1.msra.mxu0 %v4721
  %4723 = vmatprep.subr.mxu0 0.0
  %v4724 = vand.u32 %v1298, 4294901760
  %4725 = vmatpush1.msra.mxu0 %v4724
  %4726 = vmatprep.subr.mxu0 0.0
  %v4727 = vand.u32 %v1299, 4294901760
  %4728 = vmatpush1.msra.mxu0 %v4727
  %4729 = vmatprep.subr.mxu0 0.0
  %v4730 = vand.u32 %v1300, 4294901760
  %4731 = vmatpush1.msra.mxu0 %v4730
  %4732 = vmatprep.subr.mxu0 0.0
  %v4733 = vand.u32 %v1301, 4294901760
  %4734 = vmatpush1.msra.mxu0 %v4733
  %4735 = vmatprep.subr.mxu0 0.0
  %v4736 = vand.u32 %v1302, 4294901760
  %4737 = vmatpush1.msra.mxu0 %v4736
  %4738 = vmatprep.subr.mxu0 0.0
  %v4739 = vand.u32 %v1303, 4294901760
  %4740 = vmatpush1.msra.mxu0 %v4739
  %4741 = vmatprep.subr.mxu0 0.0
  %v4742 = vand.u32 %v1304, 4294901760
  %4743 = vmatpush1.msra.mxu0 %v4742
  %4744 = vmatprep.subr.mxu0 0.0
  %v4745 = vand.u32 %v1305, 4294901760
  %4746 = vmatpush1.msra.mxu0 %v4745
  %4747 = vmatprep.subr.mxu0 0.0
  %v4748 = vand.u32 %v1306, 4294901760
  %4749 = vmatpush1.msra.mxu0 %v4748
  %4750 = vmatprep.subr.mxu0 0.0
  %v4751 = vand.u32 %v1307, 4294901760
  %4752 = vmatpush1.msra.mxu0 %v4751
  %4753 = vmatprep.subr.mxu0 0.0
  %v4754 = vand.u32 %v1308, 4294901760
  %4755 = vmatpush1.msra.mxu0 %v4754
  %v4756 = vand.u32 %v1177, 4294901760
  %4757 = vmatprep.mubr.f32.mxu0 %v4756
  %v4758 = vand.u32 %v1163, 4294901760
  %4759 = vmatmul.mubr.f32.gmra.mrb[0].mxu0 %v4758
  %v4760 = vpop.f32.mrb[0].mxu0
  %v4761 = vadd.f32 %v4657, %v4760
  %v4762 = vpop.f32.mrb[0].mxu0
  %4763 = vdwg.mxu0
  %v4764 = vmax.f32 %v4761, 0.0
  %v4765 = vld [vmem:[%s8] sm:$0x1]
  %v4767 = vlaneseq
  %v4768 = vshrl.u32 %v4767, 7
  %v4769 = vsub.s32 0, %v4768
  %v4770 = vrot.slane %v4765, %v4769
  %v4772 = vmul.f32 %v4764, %v4770
  %vm4773 = vcmask 254976
  %v4774 = vsel %vm4773, %v4772, 0.0
  %4775 = vadd.xlane.f32.xlu0 %v4774
  %v4776 = vpop.xlane.xlu0 %4775
  %v4777 = vsub.f32 0.0, %v4776
  %v4778 = vmul.f32 %v4777, 1.442695
  %v4779 = vpow.pop %v4778
  %v4780 = vadd.f32 %v4779, 1.0
  %v4781 = vrcp.pop %v4780
  %v4782 = vmul.f32 1.0, %v4781
  %vm4783 = vcmask 1024
  %4784 = vst.msk [vmem:[%s9] sm:$0x3] %vm4783, %v4782
  // Predicated region
  $region68: #{dpcnn_forward.1} parent=0 // pred_check
    _
  $region69: #{dpcnn_forward.1} parent=0 // pred_check_branch
    %4786 = sbr.rel (0) target = $region71
  $region70: #{dpcnn_forward.1} parent=0 // pred_region
    _
  $region71: #{dpcnn_forward.1} parent=0 // pred_fallthru
    _
  // Predicated region
  $region72: #{dpcnn_forward.1} parent=0 // pred_check
    _
  $region73: #{dpcnn_forward.1} parent=0 // pred_check_branch
    %4788 = sbr.rel (0) target = $region75
  $region74: #{dpcnn_forward.1} parent=0 // pred_region
    _
  $region75: #{dpcnn_forward.1} parent=0 // pred_fallthru
    _
  %4789 = vsyncmov [#allocation3]
  %s4790 = vpop.sfrf %4789
  %p4791 = scmp.eq.s32.totalorder %s4790, 0
  %p4792 = pneg %p4791
  %4794 = shalt.err (%p4792)

</llo_original>
